<compile_context>
chip_gen: v7x
topology: tpu7x:2x2x1
jax: 0.10.0
libtpu: 0.0.40
codegen_flags: <defaults>
</compile_context>

<pallas_src>
import functools

import jax
import jax.numpy as jnp
from jax.experimental import pallas as pl
from jax.experimental.pallas import tpu as pltpu

HIDDEN = 512
HEAD_HIDDEN = 1024

# Conservative VMEM working-set budget: fits v7x (64 MiB physical / TC) with
# compiler headroom; never binding on v5e/v6e (128 MiB).
_VMEM_BUDGET = 40 << 20
_TILE_B_CANDIDATES = (512, 256, 128, 64, 32, 16)   # >=16 rows: full bf16 vregs


# ----------------------------------------------------------------------------
# Small helpers
# ----------------------------------------------------------------------------
def _round_up(x, m):
    return (x + m - 1) // m * m


def _cdiv(a, b):
    return (a + b - 1) // b


def _resident_spec(shape):
    """Full-array block, constant index map, SINGLE VMEM buffer.

    With a constant index map the block is DMA'd from HBM exactly once and
    stays resident across grid steps, so double buffering only wastes VMEM.
    Falls back to the default spec on jax versions without pipeline_mode.
    """
    index_map = lambda *_: (0,) * len(shape)
    try:
        return pl.BlockSpec(shape, index_map, pipeline_mode=pl.Buffered(1))
    except Exception:  # pragma: no cover - older jax without Buffered
        return pl.BlockSpec(shape, index_map)


def _pick_tile_b(batch, candidates):
    """Largest candidate with <= 25% padded-row waste, else minimum waste."""
    best_t, best_rows = candidates[-1], None
    for t in candidates:                      # candidates are descending
        rows = _cdiv(batch, t) * t
        if (rows - batch) / rows <= 0.25:
            return t
        if best_rows is None or rows < best_rows:
            best_t, best_rows = t, rows
    return best_t


def _vmem_resident(tile_b, d_cols, out_cols, weight_bytes):
    x_tile = tile_b * d_cols * 4 * 2          # f32 input, double buffered
    out_tile = tile_b * out_cols * 4 * 2      # f32 output, double buffered
    act = tile_b * HEAD_HIDDEN * 4 * 2        # intermediate-activation headroom
    return weight_bytes + x_tile + out_tile + act


def _vmem_ktiled(tile_b, k_tile, out_cols, tail_weight_bytes):
    w1_tile = k_tile * HIDDEN * 2 * 2         # streamed fc1 slab, double buffered
    x_tile = tile_b * k_tile * 4 * 2
    out_tile = tile_b * out_cols * 4 * 2
    acc = tile_b * HIDDEN * 4
    act = tile_b * HEAD_HIDDEN * 4 * 2
    return tail_weight_bytes + w1_tile + x_tile + out_tile + acc + act


# ----------------------------------------------------------------------------
# Kernels (built per layer-structure; traced once)
# ----------------------------------------------------------------------------
def _make_resident_kernel(relu_flags):
    """Fused MLP with all weights VMEM-resident.  Dropout == identity."""
    n = len(relu_flags)

    def kernel(x_ref, *args):
        o_ref = args[2 * n]
        h = x_ref[...].astype(jnp.bfloat16)   # in-kernel f32 -> bf16 cast
        for idx, relu in enumerate(relu_flags):
            w_ref = args[2 * idx]
            b_ref = args[2 * idx + 1]
            y = jnp.dot(h, w_ref[...], preferred_element_type=jnp.float32)
            y = y + b_ref[...]
            if relu:
                y = jnp.maximum(y, 0.0)
            h = y.astype(jnp.bfloat16) if idx + 1 < n else y
        o_ref[...] = h.astype(o_ref.dtype)

    return kernel


def _make_ktiled_kernel(tail_relu_flags):
    """fc1 K-tiled (f32 accumulator, pl.when init/finalize); tail resident."""
    n = len(tail_relu_flags)

    def kernel(x_ref, w1_ref, b1_ref, *args):
        o_ref = args[2 * n]
        acc_ref = args[2 * n + 1]
        k = pl.program_id(1)

        @pl.when(k == 0)
        def _init():
            acc_ref[...] = jnp.zeros_like(acc_ref)

        xb = x_ref[...].astype(jnp.bfloat16)
        acc_ref[...] += jnp.dot(xb, w1_ref[...],
                                preferred_element_type=jnp.float32)

        @pl.when(k == pl.num_programs(1) - 1)
        def _finalize():
            h = jnp.maximum(acc_ref[...] + b1_ref[...], 0.0)
            h = h.astype(jnp.bfloat16)
            for idx, relu in enumerate(tail_relu_flags):
                w_ref = args[2 * idx]
                b_ref = args[2 * idx + 1]
                y = jnp.dot(h, w_ref[...], preferred_element_type=jnp.float32)
                y = y + b_ref[...]
                if relu:
                    y = jnp.maximum(y, 0.0)
                h = y.astype(jnp.bfloat16) if idx + 1 < n else y
            o_ref[...] = h.astype(o_ref.dtype)

    return kernel


# ----------------------------------------------------------------------------
# Parameter construction (deterministic, PyTorch-like scaled uniform init)
# ----------------------------------------------------------------------------
def _init_linear(key, fan_in, fan_out, dtype=jnp.float32):
    kw, kb = jax.random.split(key)
    bound = 1.0 / jnp.sqrt(jnp.float32(fan_in))
    # Stored as (in, out) so the kernel can do x @ W.
    w = jax.random.uniform(kw, (fan_in, fan_out), dtype, -bound, bound)
    b = jax.random.uniform(kb, (1, fan_out), dtype, -bound, bound)
    return w, b


def make_params(input_size, n_bands, n_class=0, seed=0):
    d_in = input_size * input_size * n_bands
    keys = jax.random.split(jax.random.PRNGKey(seed), 6)
    params = {
        "fc1": _init_linear(keys[0], d_in, HIDDEN),
        "fc2": _init_linear(keys[1], HIDDEN, HIDDEN),
        "fc3": _init_linear(keys[2], HIDDEN, HIDDEN),
        "fc4": _init_linear(keys[3], HIDDEN, HIDDEN),
    }
    if n_class:
        params["head1"] = _init_linear(keys[4], HIDDEN, HEAD_HIDDEN)
        params["head2"] = _init_linear(keys[5], HEAD_HIDDEN, n_class)
    return params


# ----------------------------------------------------------------------------
# Forward wrapper
# ----------------------------------------------------------------------------
@functools.partial(jax.jit,
                   static_argnames=("n_class", "force_k_tile", "out_dtype"))
def fully_connected_network(x, params, n_class=0, force_k_tile=None,
                            out_dtype=jnp.float32):
    """x: NCHW float32 tensor (B, C, H, W).  Returns (B, 512) or (B, n_class)."""
    b, c, h, w = x.shape
    d_in = c * h * w
    # == x.view(-1, c*h*w).  Kept in f32: the bf16 cast happens inside the
    # kernel, so no extra HBM copy of the activations is written here.
    x2d = x.reshape(b, d_in)

    def wb(name):
        wgt, bias = params[name]
        return wgt.astype(jnp.bfloat16), bias.astype(jnp.float32)

    w1, b1 = wb("fc1")
    w2, b2 = wb("fc2")
    w3, b3 = wb("fc3")
    w4, b4 = wb("fc4")

    has_head = bool(n_class)
    if has_head:
        w5, b5 = wb("head1")
        w6, b6 = wb("head2")
        # Lane-dense head output: pad n_class to a multiple of 128 so the
        # final store is an unmasked full-lane vst; sliced back below.
        out_cols = _round_up(n_class, 128)
        if out_cols != n_class:
            w6 = jnp.pad(w6, ((0, 0), (0, out_cols - n_class)))
            b6 = jnp.pad(b6, ((0, 0), (0, out_cols - n_class)))
    else:
        out_cols = HIDDEN

    # Resident weight bytes excluding fc1 (bf16, single-buffered).
    tail_w_bytes = 3 * HIDDEN * HIDDEN * 2
    if has_head:
        tail_w_bytes += HIDDEN * HEAD_HIDDEN * 2 + HEAD_HIDDEN * out_cols * 2

    # ---- fc1 strategy: fully resident vs. K-tiled ---------------------------
    d_in_res = _round_up(d_in, 256)        # MXU/lane aligned K for resident fc1
    if force_k_tile is not None:
        use_ktile = True
    else:
        smallest = _vmem_resident(
            _TILE_B_CANDIDATES[-1], d_in_res, out_cols,
            tail_w_bytes + d_in_res * HIDDEN * 2)
        use_ktile = smallest > _VMEM_BUDGET

    if use_ktile:
        k_tile = int(force_k_tile) if force_k_tile is not None else 512
        k_tile = max(128, _round_up(k_tile, 128))
        d_in_pad = _round_up(d_in, k_tile)
    else:
        k_tile = None
        d_in_pad = d_in_res

    if d_in_pad != d_in:
        # Unaligned flattened input: pad K (zero rows in w1 keep the math
        # exact) so every vmatmul is full width and the x DMA is lane dense.
        x2d = jnp.pad(x2d, ((0, 0), (0, d_in_pad - d_in)))
        w1 = jnp.pad(w1, ((0, d_in_pad - d_in), (0, 0)))

    # ---- batch tile: largest fitting VMEM with <= 25% pad waste -------------
    if use_ktile:
        fit = lambda t: _vmem_ktiled(t, k_tile, out_cols, tail_w_bytes)
    else:
        fit = lambda t: _vmem_resident(t, d_in_pad, out_cols,
                                       tail_w_bytes + d_in_pad * HIDDEN * 2)
    cands = [t for t in _TILE_B_CANDIDATES if fit(t) <= _VMEM_BUDGET]
    if not cands:
        cands = [_TILE_B_CANDIDATES[-1]]
    tile_b = _pick_tile_b(b, cands)
    vmem_limit = int(min(max(fit(tile_b) + (8 << 20), 32 << 20), 60 << 20))
    num_bt = _cdiv(b, tile_b)

    # Advisory cost estimate so XLA schedules neighbouring ops sensibly.
    flops = 2 * b * (d_in_pad * HIDDEN + 3 * HIDDEN * HIDDEN)
    if has_head:
        flops += 2 * b * (HIDDEN * HEAD_HIDDEN + HEAD_HIDDEN * out_cols)
    bytes_accessed = (b * d_in_pad * 4 + d_in_pad * HIDDEN * 2
                      + tail_w_bytes + b * out_cols * 4)
    cost = pl.CostEstimate(flops=int(flops), transcendentals=0,
                           bytes_accessed=int(bytes_accessed))

    out_shape = jax.ShapeDtypeStruct((b, out_cols), out_dtype)

    if not use_ktile:
        relu_flags = (True, True, True, True) + ((True, False) if has_head else ())
        wb_list = [w1, b1, w2, b2, w3, b3, w4, b4]
        if has_head:
            wb_list += [w5, b5, w6, b6]
        in_specs = ([pl.BlockSpec((tile_b, d_in_pad), lambda i: (i, 0))]
                    + [_resident_spec(a.shape) for a in wb_list])
        # Note: for a 1-step grid the "parallel" axis gives no megacore
        # benefit (small-batch latency is weight-HBM bound anyway).
        out = pl.pallas_call(
            _make_resident_kernel(relu_flags),
            out_shape=out_shape,
            grid=(num_bt,),
            in_specs=in_specs,
            out_specs=pl.BlockSpec((tile_b, out_cols), lambda i: (i, 0)),
            compiler_params=pltpu.CompilerParams(
                dimension_semantics=("parallel",),
                vmem_limit_bytes=vmem_limit),
            cost_estimate=cost,
        )(x2d, *wb_list)
    else:
        tail_flags = (True, True, True) + ((True, False) if has_head else ())
        tail_wb = [w2, b2, w3, b3, w4, b4]
        if has_head:
            tail_wb += [w5, b5, w6, b6]
        in_specs = (
            [pl.BlockSpec((tile_b, k_tile), lambda i, k: (i, k)),     # x chunk
             pl.BlockSpec((k_tile, HIDDEN), lambda i, k: (k, 0)),     # fc1 slab
             _resident_spec(b1.shape)]
            + [_resident_spec(a.shape) for a in tail_wb])
        out = pl.pallas_call(
            _make_ktiled_kernel(tail_flags),
            out_shape=out_shape,
            grid=(num_bt, d_in_pad // k_tile),
            in_specs=in_specs,
            out_specs=pl.BlockSpec((tile_b, out_cols), lambda i, k: (i, 0)),
            scratch_shapes=[pltpu.VMEM((tile_b, HIDDEN), jnp.float32)],
            compiler_params=pltpu.CompilerParams(
                dimension_semantics=("parallel", "arbitrary"),
                vmem_limit_bytes=vmem_limit),
            cost_estimate=cost,
        )(x2d, w1, b1, *tail_wb)

    if has_head and out_cols != n_class:
        out = out[:, :n_class]
    return out


# ----------------------------------------------------------------------------
# Reference (pure JAX, same bf16-in / f32-accumulate math) for correctness
# ----------------------------------------------------------------------------
def reference_forward(x, params, n_class=0):
    b, c, h, w = x.shape
    y = x.reshape(b, c * h * w).astype(jnp.bfloat16)
    out = None
    for name in ("fc1", "fc2", "fc3", "fc4"):
        wgt, bias = params[name]
        out = jnp.maximum(
            jnp.dot(y, wgt.astype(jnp.bfloat16),
                    preferred_element_type=jnp.float32) + bias, 0.0)
        y = out.astype(jnp.bfloat16)
    if not n_class:
        return out
    w5, b5 = params["head1"]
    w6, b6 = params["head2"]
    y = jnp.maximum(
        jnp.dot(y, w5.astype(jnp.bfloat16),
                preferred_element_type=jnp.float32) + b5, 0.0).astype(jnp.bfloat16)
    return jnp.dot(y, w6.astype(jnp.bfloat16),
                   preferred_element_type=jnp.float32) + b6


if __name__ == "__main__":
    # FullyConnectedNetwork-consistent small shapes:
    #   input_size=16, n_bands=4  ->  flattened dim 16*16*4 = 1024
    batch, n_bands, input_size = 2, 4, 16
    n_class = 10

    key = jax.random.PRNGKey(0)
    x = jax.random.normal(key, (batch, n_bands, input_size, input_size),
                          dtype=jnp.float32)
    params = make_params(input_size, n_bands, n_class=n_class, seed=0)

    # Fused trunk + head path (fc1 resident).
    out = jax.block_until_ready(
        fully_connected_network(x, params, n_class=n_class))
    ref = reference_forward(x, params, n_class=n_class)
    assert out.shape == (batch, n_class), out.shape
    assert jnp.allclose(out, ref, atol=2e-2, rtol=2e-2), "head mismatch vs reference"

    # Trunk-only path (n_class=0).
    feat = jax.block_until_ready(fully_connected_network(x, params, n_class=0))
    ref_feat = reference_forward(x, params, n_class=0)
    assert feat.shape == (batch, HIDDEN), feat.shape
    assert jnp.allclose(feat, ref_feat, atol=2e-2, rtol=2e-2), "trunk mismatch vs reference"

    # K-tiled fc1 fallback (large-D_in path), forced small here to verify it.
    out_kt = jax.block_until_ready(
        fully_connected_network(x, params, n_class=n_class, force_k_tile=256))
    assert out_kt.shape == (batch, n_class), out_kt.shape
    assert jnp.allclose(out_kt, ref, atol=2e-2, rtol=2e-2), "k-tiled mismatch vs reference"

    print("KERNEL_OK")
</pallas_src>

<mosaic_0001>
module attributes {stable_mosaic.version = 11 : i64} {
  func.func @kernel(%arg0: i32, %arg1: memref<16x1024xf32, #tpu.memory_space<vmem>>, %arg2: memref<1024x512xbf16, #tpu.memory_space<vmem>>, %arg3: memref<1x512xf32, #tpu.memory_space<vmem>>, %arg4: memref<512x512xbf16, #tpu.memory_space<vmem>>, %arg5: memref<1x512xf32, #tpu.memory_space<vmem>>, %arg6: memref<512x512xbf16, #tpu.memory_space<vmem>>, %arg7: memref<1x512xf32, #tpu.memory_space<vmem>>, %arg8: memref<512x512xbf16, #tpu.memory_space<vmem>>, %arg9: memref<1x512xf32, #tpu.memory_space<vmem>>, %arg10: memref<512x1024xbf16, #tpu.memory_space<vmem>>, %arg11: memref<1x1024xf32, #tpu.memory_space<vmem>>, %arg12: memref<1024x128xbf16, #tpu.memory_space<vmem>>, %arg13: memref<1x128xf32, #tpu.memory_space<vmem>>, %arg14: memref<16x128xf32, #tpu.memory_space<vmem>>) attributes {dimension_semantics = [#tpu.dimension_semantics<parallel>], iteration_bounds = array<i64: 1>, scalar_prefetch = 0 : i64, scratch_operands = 0 : i64, tpu.core_type = #tpu.core_type<tc>, window_params = [{transform_indices = @transform_0, window_bounds = array<i64: 16, 1024>}, {pipeline_mode = #tpu.pipeline_mode<synchronous>, transform_indices = @transform_1, window_bounds = array<i64: 1024, 512>}, {pipeline_mode = #tpu.pipeline_mode<synchronous>, transform_indices = @transform_2, window_bounds = array<i64: 1, 512>}, {pipeline_mode = #tpu.pipeline_mode<synchronous>, transform_indices = @transform_3, window_bounds = array<i64: 512, 512>}, {pipeline_mode = #tpu.pipeline_mode<synchronous>, transform_indices = @transform_4, window_bounds = array<i64: 1, 512>}, {pipeline_mode = #tpu.pipeline_mode<synchronous>, transform_indices = @transform_5, window_bounds = array<i64: 512, 512>}, {pipeline_mode = #tpu.pipeline_mode<synchronous>, transform_indices = @transform_6, window_bounds = array<i64: 1, 512>}, {pipeline_mode = #tpu.pipeline_mode<synchronous>, transform_indices = @transform_7, window_bounds = array<i64: 512, 512>}, {pipeline_mode = #tpu.pipeline_mode<synchronous>, transform_indices = @transform_8, window_bounds = array<i64: 1, 512>}, {pipeline_mode = #tpu.pipeline_mode<synchronous>, transform_indices = @transform_9, window_bounds = array<i64: 512, 1024>}, {pipeline_mode = #tpu.pipeline_mode<synchronous>, transform_indices = @transform_10, window_bounds = array<i64: 1, 1024>}, {pipeline_mode = #tpu.pipeline_mode<synchronous>, transform_indices = @transform_11, window_bounds = array<i64: 1024, 128>}, {pipeline_mode = #tpu.pipeline_mode<synchronous>, transform_indices = @transform_12, window_bounds = array<i64: 1, 128>}, {transform_indices = @transform_13, window_bounds = array<i64: 16, 128>}]} {
    %c0 = arith.constant 0 : index
    %c0_0 = arith.constant 0 : index
    %0 = vector.load %arg1[%c0, %c0_0] : memref<16x1024xf32, #tpu.memory_space<vmem>>, vector<16x1024xf32>
    %1 = arith.truncf %0 : vector<16x1024xf32> to vector<16x1024xbf16>
    %c0_1 = arith.constant 0 : index
    %c0_2 = arith.constant 0 : index
    %2 = vector.load %arg2[%c0_1, %c0_2] : memref<1024x512xbf16, #tpu.memory_space<vmem>>, vector<1024x512xbf16>
    %cst = arith.constant dense<0.000000e+00> : vector<16x512xf32>
    %3 = tpu.matmul %1, %2, %cst {dimension_numbers = #tpu.dot_dimension_numbers<[1], [0], [0], [1], [0, 0, 1, 1], [], []>} : vector<16x1024xbf16>, vector<1024x512xbf16>, vector<16x512xf32> -> vector<16x512xf32>
    %c0_3 = arith.constant 0 : index
    %c0_4 = arith.constant 0 : index
    %4 = vector.load %arg3[%c0_3, %c0_4] : memref<1x512xf32, #tpu.memory_space<vmem>>, vector<1x512xf32>
    %5 = vector.broadcast %4 : vector<1x512xf32> to vector<16x512xf32>
    %6 = arith.addf %3, %5 : vector<16x512xf32>
    %cst_5 = arith.constant 0.000000e+00 : f32
    %7 = vector.broadcast %cst_5 : f32 to vector<16x512xf32>
    %8 = arith.maximumf %6, %7 : vector<16x512xf32>
    %9 = arith.truncf %8 : vector<16x512xf32> to vector<16x512xbf16>
    %c0_6 = arith.constant 0 : index
    %c0_7 = arith.constant 0 : index
    %10 = vector.load %arg4[%c0_6, %c0_7] : memref<512x512xbf16, #tpu.memory_space<vmem>>, vector<512x512xbf16>
    %cst_8 = arith.constant dense<0.000000e+00> : vector<16x512xf32>
    %11 = tpu.matmul %9, %10, %cst_8 {dimension_numbers = #tpu.dot_dimension_numbers<[1], [0], [0], [1], [0, 0, 1, 1], [], []>} : vector<16x512xbf16>, vector<512x512xbf16>, vector<16x512xf32> -> vector<16x512xf32>
    %c0_9 = arith.constant 0 : index
    %c0_10 = arith.constant 0 : index
    %12 = vector.load %arg5[%c0_9, %c0_10] : memref<1x512xf32, #tpu.memory_space<vmem>>, vector<1x512xf32>
    %13 = vector.broadcast %12 : vector<1x512xf32> to vector<16x512xf32>
    %14 = arith.addf %11, %13 : vector<16x512xf32>
    %cst_11 = arith.constant 0.000000e+00 : f32
    %15 = vector.broadcast %cst_11 : f32 to vector<16x512xf32>
    %16 = arith.maximumf %14, %15 : vector<16x512xf32>
    %17 = arith.truncf %16 : vector<16x512xf32> to vector<16x512xbf16>
    %c0_12 = arith.constant 0 : index
    %c0_13 = arith.constant 0 : index
    %18 = vector.load %arg6[%c0_12, %c0_13] : memref<512x512xbf16, #tpu.memory_space<vmem>>, vector<512x512xbf16>
    %cst_14 = arith.constant dense<0.000000e+00> : vector<16x512xf32>
    %19 = tpu.matmul %17, %18, %cst_14 {dimension_numbers = #tpu.dot_dimension_numbers<[1], [0], [0], [1], [0, 0, 1, 1], [], []>} : vector<16x512xbf16>, vector<512x512xbf16>, vector<16x512xf32> -> vector<16x512xf32>
    %c0_15 = arith.constant 0 : index
    %c0_16 = arith.constant 0 : index
    %20 = vector.load %arg7[%c0_15, %c0_16] : memref<1x512xf32, #tpu.memory_space<vmem>>, vector<1x512xf32>
    %21 = vector.broadcast %20 : vector<1x512xf32> to vector<16x512xf32>
    %22 = arith.addf %19, %21 : vector<16x512xf32>
    %cst_17 = arith.constant 0.000000e+00 : f32
    %23 = vector.broadcast %cst_17 : f32 to vector<16x512xf32>
    %24 = arith.maximumf %22, %23 : vector<16x512xf32>
    %25 = arith.truncf %24 : vector<16x512xf32> to vector<16x512xbf16>
    %c0_18 = arith.constant 0 : index
    %c0_19 = arith.constant 0 : index
    %26 = vector.load %arg8[%c0_18, %c0_19] : memref<512x512xbf16, #tpu.memory_space<vmem>>, vector<512x512xbf16>
    %cst_20 = arith.constant dense<0.000000e+00> : vector<16x512xf32>
    %27 = tpu.matmul %25, %26, %cst_20 {dimension_numbers = #tpu.dot_dimension_numbers<[1], [0], [0], [1], [0, 0, 1, 1], [], []>} : vector<16x512xbf16>, vector<512x512xbf16>, vector<16x512xf32> -> vector<16x512xf32>
    %c0_21 = arith.constant 0 : index
    %c0_22 = arith.constant 0 : index
    %28 = vector.load %arg9[%c0_21, %c0_22] : memref<1x512xf32, #tpu.memory_space<vmem>>, vector<1x512xf32>
    %29 = vector.broadcast %28 : vector<1x512xf32> to vector<16x512xf32>
    %30 = arith.addf %27, %29 : vector<16x512xf32>
    %cst_23 = arith.constant 0.000000e+00 : f32
    %31 = vector.broadcast %cst_23 : f32 to vector<16x512xf32>
    %32 = arith.maximumf %30, %31 : vector<16x512xf32>
    %33 = arith.truncf %32 : vector<16x512xf32> to vector<16x512xbf16>
    %c0_24 = arith.constant 0 : index
    %c0_25 = arith.constant 0 : index
    %34 = vector.load %arg10[%c0_24, %c0_25] : memref<512x1024xbf16, #tpu.memory_space<vmem>>, vector<512x1024xbf16>
    %cst_26 = arith.constant dense<0.000000e+00> : vector<16x1024xf32>
    %35 = tpu.matmul %33, %34, %cst_26 {dimension_numbers = #tpu.dot_dimension_numbers<[1], [0], [0], [1], [0, 0, 1, 1], [], []>} : vector<16x512xbf16>, vector<512x1024xbf16>, vector<16x1024xf32> -> vector<16x1024xf32>
    %c0_27 = arith.constant 0 : index
    %c0_28 = arith.constant 0 : index
    %36 = vector.load %arg11[%c0_27, %c0_28] : memref<1x1024xf32, #tpu.memory_space<vmem>>, vector<1x1024xf32>
    %37 = vector.broadcast %36 : vector<1x1024xf32> to vector<16x1024xf32>
    %38 = arith.addf %35, %37 : vector<16x1024xf32>
    %cst_29 = arith.constant 0.000000e+00 : f32
    %39 = vector.broadcast %cst_29 : f32 to vector<16x1024xf32>
    %40 = arith.maximumf %38, %39 : vector<16x1024xf32>
    %41 = arith.truncf %40 : vector<16x1024xf32> to vector<16x1024xbf16>
    %c0_30 = arith.constant 0 : index
    %c0_31 = arith.constant 0 : index
    %42 = vector.load %arg12[%c0_30, %c0_31] : memref<1024x128xbf16, #tpu.memory_space<vmem>>, vector<1024x128xbf16>
    %cst_32 = arith.constant dense<0.000000e+00> : vector<16x128xf32>
    %43 = tpu.matmul %41, %42, %cst_32 {dimension_numbers = #tpu.dot_dimension_numbers<[1], [0], [0], [1], [0, 0, 1, 1], [], []>} : vector<16x1024xbf16>, vector<1024x128xbf16>, vector<16x128xf32> -> vector<16x128xf32>
    %c0_33 = arith.constant 0 : index
    %c0_34 = arith.constant 0 : index
    %44 = vector.load %arg13[%c0_33, %c0_34] : memref<1x128xf32, #tpu.memory_space<vmem>>, vector<1x128xf32>
    %45 = vector.broadcast %44 : vector<1x128xf32> to vector<16x128xf32>
    %46 = arith.addf %43, %45 : vector<16x128xf32>
    %c0_35 = arith.constant 0 : index
    %c0_36 = arith.constant 0 : index
    %47 = vector.load %arg14[%c0_35, %c0_36] : memref<16x128xf32, #tpu.memory_space<vmem>>, vector<16x128xf32>
    tpu.vector_store %arg14[%c0_35, %c0_36], %46 {strides = array<i32>} : memref<16x128xf32, #tpu.memory_space<vmem>>, vector<16x128xf32>,
    return
  }
  func.func @transform_0(%arg0: i32) -> (i32, i32) {
    %c0_i32 = arith.constant 0 : i32
    %c0_i32_0 = arith.constant 0 : i32
    return %arg0, %c0_i32 : i32, i32
  }
  func.func @transform_1(%arg0: i32) -> (i32, i32) {
    %c0_i32 = arith.constant 0 : i32
    %c0_i32_0 = arith.constant 0 : i32
    %c0_i32_1 = arith.constant 0 : i32
    return %c0_i32, %c0_i32_0 : i32, i32
  }
  func.func @transform_2(%arg0: i32) -> (i32, i32) {
    %c0_i32 = arith.constant 0 : i32
    %c0_i32_0 = arith.constant 0 : i32
    %c0_i32_1 = arith.constant 0 : i32
    return %c0_i32, %c0_i32_0 : i32, i32
  }
  func.func @transform_3(%arg0: i32) -> (i32, i32) {
    %c0_i32 = arith.constant 0 : i32
    %c0_i32_0 = arith.constant 0 : i32
    %c0_i32_1 = arith.constant 0 : i32
    return %c0_i32, %c0_i32_0 : i32, i32
  }
  func.func @transform_4(%arg0: i32) -> (i32, i32) {
    %c0_i32 = arith.constant 0 : i32
    %c0_i32_0 = arith.constant 0 : i32
    %c0_i32_1 = arith.constant 0 : i32
    return %c0_i32, %c0_i32_0 : i32, i32
  }
  func.func @transform_5(%arg0: i32) -> (i32, i32) {
    %c0_i32 = arith.constant 0 : i32
    %c0_i32_0 = arith.constant 0 : i32
    %c0_i32_1 = arith.constant 0 : i32
    return %c0_i32, %c0_i32_0 : i32, i32
  }
  func.func @transform_6(%arg0: i32) -> (i32, i32) {
    %c0_i32 = arith.constant 0 : i32
    %c0_i32_0 = arith.constant 0 : i32
    %c0_i32_1 = arith.constant 0 : i32
    return %c0_i32, %c0_i32_0 : i32, i32
  }
  func.func @transform_7(%arg0: i32) -> (i32, i32) {
    %c0_i32 = arith.constant 0 : i32
    %c0_i32_0 = arith.constant 0 : i32
    %c0_i32_1 = arith.constant 0 : i32
    return %c0_i32, %c0_i32_0 : i32, i32
  }
  func.func @transform_8(%arg0: i32) -> (i32, i32) {
    %c0_i32 = arith.constant 0 : i32
    %c0_i32_0 = arith.constant 0 : i32
    %c0_i32_1 = arith.constant 0 : i32
    return %c0_i32, %c0_i32_0 : i32, i32
  }
  func.func @transform_9(%arg0: i32) -> (i32, i32) {
    %c0_i32 = arith.constant 0 : i32
    %c0_i32_0 = arith.constant 0 : i32
    %c0_i32_1 = arith.constant 0 : i32
    return %c0_i32, %c0_i32_0 : i32, i32
  }
  func.func @transform_10(%arg0: i32) -> (i32, i32) {
    %c0_i32 = arith.constant 0 : i32
    %c0_i32_0 = arith.constant 0 : i32
    %c0_i32_1 = arith.constant 0 : i32
    return %c0_i32, %c0_i32_0 : i32, i32
  }
  func.func @transform_11(%arg0: i32) -> (i32, i32) {
    %c0_i32 = arith.constant 0 : i32
    %c0_i32_0 = arith.constant 0 : i32
    %c0_i32_1 = arith.constant 0 : i32
    return %c0_i32, %c0_i32_0 : i32, i32
  }
  func.func @transform_12(%arg0: i32) -> (i32, i32) {
    %c0_i32 = arith.constant 0 : i32
    %c0_i32_0 = arith.constant 0 : i32
    %c0_i32_1 = arith.constant 0 : i32
    return %c0_i32, %c0_i32_0 : i32, i32
  }
  func.func @transform_13(%arg0: i32) -> (i32, i32) {
    %c0_i32 = arith.constant 0 : i32
    %c0_i32_0 = arith.constant 0 : i32
    return %arg0, %c0_i32 : i32, i32
  }
}

</mosaic_0001>

<llo_original>
// kernel: fully_connected_network.1
$region0: #{fully_connected_network.1}
  #allocation0 [shape = 'u32[]', space=smem, size = 0x4, offset = 0x4, fixed_abs, tag = 'smem constant byte address 0x4 - core index']
  #allocation1 [shape = 'u32[144,128]{1,0:T(1,128)}', space=vmem, size = 0x12000, scoped, tag = 'internal scratch']
  %s0 = inlined_call_operand.vmem [shape: f32[2,1024], index: 0, kind: input, shape index: {}]
  %s1 = inlined_call_operand.vmem [shape: bf16[1024,512], index: 1, kind: input, shape index: {}]
  %s2 = inlined_call_operand.vmem [shape: f32[1,512], index: 2, kind: input, shape index: {}]
  %s3 = inlined_call_operand.vmem [shape: bf16[512,512], index: 3, kind: input, shape index: {}]
  %s4 = inlined_call_operand.vmem [shape: f32[1,512], index: 4, kind: input, shape index: {}]
  %s5 = inlined_call_operand.vmem [shape: bf16[512,512], index: 5, kind: input, shape index: {}]
  %s6 = inlined_call_operand.vmem [shape: f32[1,512], index: 6, kind: input, shape index: {}]
  %s7 = inlined_call_operand.vmem [shape: bf16[512,512], index: 7, kind: input, shape index: {}]
  %s8 = inlined_call_operand.vmem [shape: f32[1,512], index: 8, kind: input, shape index: {}]
  %s9 = inlined_call_operand.vmem [shape: bf16[512,1024], index: 9, kind: input, shape index: {}]
  %s10 = inlined_call_operand.vmem [shape: f32[1,1024], index: 10, kind: input, shape index: {}]
  %s11 = inlined_call_operand.vmem [shape: bf16[1024,128], index: 11, kind: input, shape index: {}]
  %s12 = inlined_call_operand.vmem [shape: f32[1,128], index: 12, kind: input, shape index: {}]
  %s13 = inlined_call_operand.hbm [shape: f32[2,128], index: 13, kind: output, shape index: {}]
  %s14 = sld [smem:[#allocation0]]
  $region62: #{fully_connected_network.1} parent=0
    _
  %s16 = ssub.s32 1, %s14
  %s17 = scalar_select 0, %s16, %s14
  $region1: #{fully_connected_network.1} parent=0
    #allocation2 [shape = 'u8[8192]{0}', space=vmem, size = 0x2000, scoped, tag = 'output window, operand 0, single buffered']
    #allocation3 [shape = 's32[1]{0}', space=sflag, size = 0x4, scoped, tag = 'scoped memory for fully_connected_network.1']
    %18 = vsyncpa [#allocation3], 0
    // Predicated region
    $region2: #{fully_connected_network.1} parent=1 // pred_check
      _
    $region3: #{fully_connected_network.1} parent=1 // pred_check_branch
      %20 = sbr.rel (0) target = $region5
    $region4: #{fully_connected_network.1} parent=1 // pred_region
      _
    $region5: #{fully_connected_network.1} parent=1 // pred_fallthru
      _
    // Predicated region
    $region6: #{fully_connected_network.1} parent=1 // pred_check
      _
    $region7: #{fully_connected_network.1} parent=1 // pred_check_branch
      %22 = sbr.rel (0) target = $region9
    $region8: #{fully_connected_network.1} parent=1 // pred_region
      _
    $region9: #{fully_connected_network.1} parent=1 // pred_fallthru
      _
    // Predicated region
    $region10: #{fully_connected_network.1} parent=1 // pred_check
      _
    $region11: #{fully_connected_network.1} parent=1 // pred_check_branch
      %24 = sbr.rel (0) target = $region13
    $region12: #{fully_connected_network.1} parent=1 // pred_region
      _
    $region13: #{fully_connected_network.1} parent=1 // pred_fallthru
      _
    // Predicated region
    $region14: #{fully_connected_network.1} parent=1 // pred_check
      _
    $region15: #{fully_connected_network.1} parent=1 // pred_check_branch
      %26 = sbr.rel (0) target = $region17
    $region16: #{fully_connected_network.1} parent=1 // pred_region
      _
    $region17: #{fully_connected_network.1} parent=1 // pred_fallthru
      _
    // Predicated region
    $region18: #{fully_connected_network.1} parent=1 // pred_check
      _
    $region19: #{fully_connected_network.1} parent=1 // pred_check_branch
      %28 = sbr.rel (0) target = $region21
    $region20: #{fully_connected_network.1} parent=1 // pred_region
      _
    $region21: #{fully_connected_network.1} parent=1 // pred_fallthru
      _
    // Predicated region
    $region22: #{fully_connected_network.1} parent=1 // pred_check
      _
    $region23: #{fully_connected_network.1} parent=1 // pred_check_branch
      %30 = sbr.rel (0) target = $region25
    $region24: #{fully_connected_network.1} parent=1 // pred_region
      _
    $region25: #{fully_connected_network.1} parent=1 // pred_fallthru
      _
    // Predicated region
    $region26: #{fully_connected_network.1} parent=1 // pred_check
      _
    $region27: #{fully_connected_network.1} parent=1 // pred_check_branch
      %32 = sbr.rel (0) target = $region29
    $region28: #{fully_connected_network.1} parent=1 // pred_region
      _
    $region29: #{fully_connected_network.1} parent=1 // pred_fallthru
      _
    // Predicated region
    $region30: #{fully_connected_network.1} parent=1 // pred_check
      _
    $region31: #{fully_connected_network.1} parent=1 // pred_check_branch
      %34 = sbr.rel (0) target = $region33
    $region32: #{fully_connected_network.1} parent=1 // pred_region
      _
    $region33: #{fully_connected_network.1} parent=1 // pred_fallthru
      _
    // Predicated region
    $region34: #{fully_connected_network.1} parent=1 // pred_check
      _
    $region35: #{fully_connected_network.1} parent=1 // pred_check_branch
      %36 = sbr.rel (0) target = $region37
    $region36: #{fully_connected_network.1} parent=1 // pred_region
      _
    $region37: #{fully_connected_network.1} parent=1 // pred_fallthru
      _
    // Predicated region
    $region38: #{fully_connected_network.1} parent=1 // pred_check
      _
    $region39: #{fully_connected_network.1} parent=1 // pred_check_branch
      %38 = sbr.rel (0) target = $region41
    $region40: #{fully_connected_network.1} parent=1 // pred_region
      _
    $region41: #{fully_connected_network.1} parent=1 // pred_fallthru
      _
    // Predicated region
    $region42: #{fully_connected_network.1} parent=1 // pred_check
      _
    $region43: #{fully_connected_network.1} parent=1 // pred_check_branch
      %40 = sbr.rel (0) target = $region45
    $region44: #{fully_connected_network.1} parent=1 // pred_region
      _
    $region45: #{fully_connected_network.1} parent=1 // pred_fallthru
      _
    // Predicated region
    $region46: #{fully_connected_network.1} parent=1 // pred_check
      _
    $region47: #{fully_connected_network.1} parent=1 // pred_check_branch
      %42 = sbr.rel (0) target = $region49
    $region48: #{fully_connected_network.1} parent=1 // pred_region
      _
    $region49: #{fully_connected_network.1} parent=1 // pred_fallthru
      _
    // Predicated region
    $region50: #{fully_connected_network.1} parent=1 // pred_check
      _
    $region51: #{fully_connected_network.1} parent=1 // pred_check_branch
      %44 = sbr.rel (0) target = $region53
    $region52: #{fully_connected_network.1} parent=1 // pred_region
      _
    $region53: #{fully_connected_network.1} parent=1 // pred_fallthru
      _
    %v46 = vld [vmem:[%s0] sm:$0xff]
    %v47 = vld [vmem:[%s0 + $0x8] sm:$0xff]
    %v48 = vld [vmem:[%s0 + $0x10] sm:$0xff]
    %v49 = vld [vmem:[%s0 + $0x18] sm:$0xff]
    %v50 = vld [vmem:[%s0 + $0x20] sm:$0xff]
    %v51 = vld [vmem:[%s0 + $0x28] sm:$0xff]
    %v52 = vld [vmem:[%s0 + $0x30] sm:$0xff]
    %v53 = vld [vmem:[%s0 + $0x38] sm:$0xff]
    %v54 = vld [vmem:[%s0 + $0x40] sm:$0xff]
    %v55 = vld [vmem:[%s0 + $0x48] sm:$0xff]
    %v56 = vld [vmem:[%s0 + $0x50] sm:$0xff]
    %v57 = vld [vmem:[%s0 + $0x58] sm:$0xff]
    %v58 = vld [vmem:[%s0 + $0x60] sm:$0xff]
    %v59 = vld [vmem:[%s0 + $0x68] sm:$0xff]
    %v60 = vld [vmem:[%s0 + $0x70] sm:$0xff]
    %v61 = vld [vmem:[%s0 + $0x78] sm:$0xff]
    %v78 = vcombine.low %v46, %v48
    %v79 = vcombine.high %v46, %v48
    %v80 = vcombine.low %v50, %v52
    %v81 = vcombine.high %v50, %v52
    %v83 = vunpack.c.l.s4 1983009808
    %v84 = vunpack.c.0.s8 %v83
    %v85 = vlaneseq
    %v86 = vshrl.u32 %v85, 7
    %v87 = vsub.s32 %v84, %v86
    %v88 = vrot.slane %v78, %v87
    %v90 = vunpack.c.l.s4 1983009808
    %v91 = vunpack.c.0.s8 %v90
    %v92 = vlaneseq
    %v93 = vshrl.u32 %v92, 7
    %v94 = vsub.s32 %v91, %v93
    %v95 = vrot.slane %v79, %v94
    %v97 = vunpack.c.l.s4 1983009808
    %v98 = vunpack.c.0.s8 %v97
    %v99 = vlaneseq
    %v100 = vshrl.u32 %v99, 7
    %v101 = vsub.s32 %v98, %v100
    %v102 = vrot.slane %v80, %v101
    %v104 = vunpack.c.l.s4 1983009808
    %v105 = vunpack.c.0.s8 %v104
    %v106 = vlaneseq
    %v107 = vshrl.u32 %v106, 7
    %v108 = vsub.s32 %v105, %v107
    %v109 = vrot.slane %v81, %v108
    %v110 = vcombine.low %v88, %v102
    %v111 = vcombine.high %v88, %v102
    %v112 = vcombine.low %v95, %v109
    %v113 = vcombine.high %v95, %v109
    %v114 = vcombine.low %v47, %v49
    %v115 = vcombine.high %v47, %v49
    %v116 = vcombine.low %v51, %v53
    %v117 = vcombine.high %v51, %v53
    %v119 = vunpack.c.l.s4 1983009808
    %v120 = vunpack.c.0.s8 %v119
    %v121 = vlaneseq
    %v122 = vshrl.u32 %v121, 7
    %v123 = vsub.s32 %v120, %v122
    %v124 = vrot.slane %v114, %v123
    %v126 = vunpack.c.l.s4 1983009808
    %v127 = vunpack.c.0.s8 %v126
    %v128 = vlaneseq
    %v129 = vshrl.u32 %v128, 7
    %v130 = vsub.s32 %v127, %v129
    %v131 = vrot.slane %v115, %v130
    %v133 = vunpack.c.l.s4 1983009808
    %v134 = vunpack.c.0.s8 %v133
    %v135 = vlaneseq
    %v136 = vshrl.u32 %v135, 7
    %v137 = vsub.s32 %v134, %v136
    %v138 = vrot.slane %v116, %v137
    %v140 = vunpack.c.l.s4 1983009808
    %v141 = vunpack.c.0.s8 %v140
    %v142 = vlaneseq
    %v143 = vshrl.u32 %v142, 7
    %v144 = vsub.s32 %v141, %v143
    %v145 = vrot.slane %v117, %v144
    %v146 = vcombine.low %v124, %v138
    %v147 = vcombine.high %v124, %v138
    %v148 = vcombine.low %v131, %v145
    %v149 = vcombine.high %v131, %v145
    %v150 = vcombine.low %v54, %v56
    %v151 = vcombine.high %v54, %v56
    %v152 = vcombine.low %v58, %v60
    %v153 = vcombine.high %v58, %v60
    %v155 = vunpack.c.l.s4 1983009808
    %v156 = vunpack.c.0.s8 %v155
    %v157 = vlaneseq
    %v158 = vshrl.u32 %v157, 7
    %v159 = vsub.s32 %v156, %v158
    %v160 = vrot.slane %v150, %v159
    %v162 = vunpack.c.l.s4 1983009808
    %v163 = vunpack.c.0.s8 %v162
    %v164 = vlaneseq
    %v165 = vshrl.u32 %v164, 7
    %v166 = vsub.s32 %v163, %v165
    %v167 = vrot.slane %v151, %v166
    %v169 = vunpack.c.l.s4 1983009808
    %v170 = vunpack.c.0.s8 %v169
    %v171 = vlaneseq
    %v172 = vshrl.u32 %v171, 7
    %v173 = vsub.s32 %v170, %v172
    %v174 = vrot.slane %v152, %v173
    %v176 = vunpack.c.l.s4 1983009808
    %v177 = vunpack.c.0.s8 %v176
    %v178 = vlaneseq
    %v179 = vshrl.u32 %v178, 7
    %v180 = vsub.s32 %v177, %v179
    %v181 = vrot.slane %v153, %v180
    %v182 = vcombine.low %v160, %v174
    %v183 = vcombine.high %v160, %v174
    %v184 = vcombine.low %v167, %v181
    %v185 = vcombine.high %v167, %v181
    %v186 = vcombine.low %v55, %v57
    %v187 = vcombine.high %v55, %v57
    %v188 = vcombine.low %v59, %v61
    %v189 = vcombine.high %v59, %v61
    %v191 = vunpack.c.l.s4 1983009808
    %v192 = vunpack.c.0.s8 %v191
    %v193 = vlaneseq
    %v194 = vshrl.u32 %v193, 7
    %v195 = vsub.s32 %v192, %v194
    %v196 = vrot.slane %v186, %v195
    %v198 = vunpack.c.l.s4 1983009808
    %v199 = vunpack.c.0.s8 %v198
    %v200 = vlaneseq
    %v201 = vshrl.u32 %v200, 7
    %v202 = vsub.s32 %v199, %v201
    %v203 = vrot.slane %v187, %v202
    %v205 = vunpack.c.l.s4 1983009808
    %v206 = vunpack.c.0.s8 %v205
    %v207 = vlaneseq
    %v208 = vshrl.u32 %v207, 7
    %v209 = vsub.s32 %v206, %v208
    %v210 = vrot.slane %v188, %v209
    %v212 = vunpack.c.l.s4 1983009808
    %v213 = vunpack.c.0.s8 %v212
    %v214 = vlaneseq
    %v215 = vshrl.u32 %v214, 7
    %v216 = vsub.s32 %v213, %v215
    %v217 = vrot.slane %v189, %v216
    %v218 = vcombine.low %v196, %v210
    %v219 = vcombine.high %v196, %v210
    %v220 = vcombine.low %v203, %v217
    %v221 = vcombine.high %v203, %v217
    %v238 = vpack.c.bf16 %v182, %v110
    %v239 = vpack.c.bf16 %v183, %v111
    %v240 = vpack.c.bf16 %v184, %v112
    %v241 = vpack.c.bf16 %v185, %v113
    %v242 = vpack.c.bf16 %v218, %v146
    %v243 = vpack.c.bf16 %v219, %v147
    %v244 = vpack.c.bf16 %v220, %v148
    %v245 = vpack.c.bf16 %v221, %v149
    %v246 = vld [vmem:[%s1] sm:$0xff]
    %v247 = vld [vmem:[%s1 + $0x8] sm:$0xff]
    %v248 = vld [vmem:[%s1 + $0x10] sm:$0xff]
    %v249 = vld [vmem:[%s1 + $0x18] sm:$0xff]
    %v250 = vld [vmem:[%s1 + $0x20] sm:$0xff]
    %v251 = vld [vmem:[%s1 + $0x28] sm:$0xff]
    %v252 = vld [vmem:[%s1 + $0x30] sm:$0xff]
    %v253 = vld [vmem:[%s1 + $0x38] sm:$0xff]
    %v254 = vld [vmem:[%s1 + $0x40] sm:$0xff]
    %v255 = vld [vmem:[%s1 + $0x48] sm:$0xff]
    %v256 = vld [vmem:[%s1 + $0x50] sm:$0xff]
    %v257 = vld [vmem:[%s1 + $0x58] sm:$0xff]
    %v258 = vld [vmem:[%s1 + $0x60] sm:$0xff]
    %v259 = vld [vmem:[%s1 + $0x68] sm:$0xff]
    %v260 = vld [vmem:[%s1 + $0x70] sm:$0xff]
    %v261 = vld [vmem:[%s1 + $0x78] sm:$0xff]
    %v262 = vld [vmem:[%s1 + $0x80] sm:$0xff]
    %v263 = vld [vmem:[%s1 + $0x88] sm:$0xff]
    %v264 = vld [vmem:[%s1 + $0x90] sm:$0xff]
    %v265 = vld [vmem:[%s1 + $0x98] sm:$0xff]
    %v266 = vld [vmem:[%s1 + $0xa0] sm:$0xff]
    %v267 = vld [vmem:[%s1 + $0xa8] sm:$0xff]
    %v268 = vld [vmem:[%s1 + $0xb0] sm:$0xff]
    %v269 = vld [vmem:[%s1 + $0xb8] sm:$0xff]
    %v270 = vld [vmem:[%s1 + $0xc0] sm:$0xff]
    %v271 = vld [vmem:[%s1 + $0xc8] sm:$0xff]
    %v272 = vld [vmem:[%s1 + $0xd0] sm:$0xff]
    %v273 = vld [vmem:[%s1 + $0xd8] sm:$0xff]
    %v274 = vld [vmem:[%s1 + $0xe0] sm:$0xff]
    %v275 = vld [vmem:[%s1 + $0xe8] sm:$0xff]
    %v276 = vld [vmem:[%s1 + $0xf0] sm:$0xff]
    %v277 = vld [vmem:[%s1 + $0xf8] sm:$0xff]
    %v278 = vld [vmem:[%s1 + $0x100] sm:$0xff]
    %v279 = vld [vmem:[%s1 + $0x108] sm:$0xff]
    %v280 = vld [vmem:[%s1 + $0x110] sm:$0xff]
    %v281 = vld [vmem:[%s1 + $0x118] sm:$0xff]
    %v282 = vld [vmem:[%s1 + $0x120] sm:$0xff]
    %v283 = vld [vmem:[%s1 + $0x128] sm:$0xff]
    %v284 = vld [vmem:[%s1 + $0x130] sm:$0xff]
    %v285 = vld [vmem:[%s1 + $0x138] sm:$0xff]
    %v286 = vld [vmem:[%s1 + $0x140] sm:$0xff]
    %v287 = vld [vmem:[%s1 + $0x148] sm:$0xff]
    %v288 = vld [vmem:[%s1 + $0x150] sm:$0xff]
    %v289 = vld [vmem:[%s1 + $0x158] sm:$0xff]
    %v290 = vld [vmem:[%s1 + $0x160] sm:$0xff]
    %v291 = vld [vmem:[%s1 + $0x168] sm:$0xff]
    %v292 = vld [vmem:[%s1 + $0x170] sm:$0xff]
    %v293 = vld [vmem:[%s1 + $0x178] sm:$0xff]
    %v294 = vld [vmem:[%s1 + $0x180] sm:$0xff]
    %v295 = vld [vmem:[%s1 + $0x188] sm:$0xff]
    %v296 = vld [vmem:[%s1 + $0x190] sm:$0xff]
    %v297 = vld [vmem:[%s1 + $0x198] sm:$0xff]
    %v298 = vld [vmem:[%s1 + $0x1a0] sm:$0xff]
    %v299 = vld [vmem:[%s1 + $0x1a8] sm:$0xff]
    %v300 = vld [vmem:[%s1 + $0x1b0] sm:$0xff]
    %v301 = vld [vmem:[%s1 + $0x1b8] sm:$0xff]
    %v302 = vld [vmem:[%s1 + $0x1c0] sm:$0xff]
    %v303 = vld [vmem:[%s1 + $0x1c8] sm:$0xff]
    %v304 = vld [vmem:[%s1 + $0x1d0] sm:$0xff]
    %v305 = vld [vmem:[%s1 + $0x1d8] sm:$0xff]
    %v306 = vld [vmem:[%s1 + $0x1e0] sm:$0xff]
    %v307 = vld [vmem:[%s1 + $0x1e8] sm:$0xff]
    %v308 = vld [vmem:[%s1 + $0x1f0] sm:$0xff]
    %v309 = vld [vmem:[%s1 + $0x1f8] sm:$0xff]
    %v310 = vld [vmem:[%s1 + $0x200] sm:$0xff]
    %v311 = vld [vmem:[%s1 + $0x208] sm:$0xff]
    %v312 = vld [vmem:[%s1 + $0x210] sm:$0xff]
    %v313 = vld [vmem:[%s1 + $0x218] sm:$0xff]
    %v314 = vld [vmem:[%s1 + $0x220] sm:$0xff]
    %v315 = vld [vmem:[%s1 + $0x228] sm:$0xff]
    %v316 = vld [vmem:[%s1 + $0x230] sm:$0xff]
    %v317 = vld [vmem:[%s1 + $0x238] sm:$0xff]
    %v318 = vld [vmem:[%s1 + $0x240] sm:$0xff]
    %v319 = vld [vmem:[%s1 + $0x248] sm:$0xff]
    %v320 = vld [vmem:[%s1 + $0x250] sm:$0xff]
    %v321 = vld [vmem:[%s1 + $0x258] sm:$0xff]
    %v322 = vld [vmem:[%s1 + $0x260] sm:$0xff]
    %v323 = vld [vmem:[%s1 + $0x268] sm:$0xff]
    %v324 = vld [vmem:[%s1 + $0x270] sm:$0xff]
    %v325 = vld [vmem:[%s1 + $0x278] sm:$0xff]
    %v326 = vld [vmem:[%s1 + $0x280] sm:$0xff]
    %v327 = vld [vmem:[%s1 + $0x288] sm:$0xff]
    %v328 = vld [vmem:[%s1 + $0x290] sm:$0xff]
    %v329 = vld [vmem:[%s1 + $0x298] sm:$0xff]
    %v330 = vld [vmem:[%s1 + $0x2a0] sm:$0xff]
    %v331 = vld [vmem:[%s1 + $0x2a8] sm:$0xff]
    %v332 = vld [vmem:[%s1 + $0x2b0] sm:$0xff]
    %v333 = vld [vmem:[%s1 + $0x2b8] sm:$0xff]
    %v334 = vld [vmem:[%s1 + $0x2c0] sm:$0xff]
    %v335 = vld [vmem:[%s1 + $0x2c8] sm:$0xff]
    %v336 = vld [vmem:[%s1 + $0x2d0] sm:$0xff]
    %v337 = vld [vmem:[%s1 + $0x2d8] sm:$0xff]
    %v338 = vld [vmem:[%s1 + $0x2e0] sm:$0xff]
    %v339 = vld [vmem:[%s1 + $0x2e8] sm:$0xff]
    %v340 = vld [vmem:[%s1 + $0x2f0] sm:$0xff]
    %v341 = vld [vmem:[%s1 + $0x2f8] sm:$0xff]
    %v342 = vld [vmem:[%s1 + $0x300] sm:$0xff]
    %v343 = vld [vmem:[%s1 + $0x308] sm:$0xff]
    %v344 = vld [vmem:[%s1 + $0x310] sm:$0xff]
    %v345 = vld [vmem:[%s1 + $0x318] sm:$0xff]
    %v346 = vld [vmem:[%s1 + $0x320] sm:$0xff]
    %v347 = vld [vmem:[%s1 + $0x328] sm:$0xff]
    %v348 = vld [vmem:[%s1 + $0x330] sm:$0xff]
    %v349 = vld [vmem:[%s1 + $0x338] sm:$0xff]
    %v350 = vld [vmem:[%s1 + $0x340] sm:$0xff]
    %v351 = vld [vmem:[%s1 + $0x348] sm:$0xff]
    %v352 = vld [vmem:[%s1 + $0x350] sm:$0xff]
    %v353 = vld [vmem:[%s1 + $0x358] sm:$0xff]
    %v354 = vld [vmem:[%s1 + $0x360] sm:$0xff]
    %v355 = vld [vmem:[%s1 + $0x368] sm:$0xff]
    %v356 = vld [vmem:[%s1 + $0x370] sm:$0xff]
    %v357 = vld [vmem:[%s1 + $0x378] sm:$0xff]
    %v358 = vld [vmem:[%s1 + $0x380] sm:$0xff]
    %v359 = vld [vmem:[%s1 + $0x388] sm:$0xff]
    %v360 = vld [vmem:[%s1 + $0x390] sm:$0xff]
    %v361 = vld [vmem:[%s1 + $0x398] sm:$0xff]
    %v362 = vld [vmem:[%s1 + $0x3a0] sm:$0xff]
    %v363 = vld [vmem:[%s1 + $0x3a8] sm:$0xff]
    %v364 = vld [vmem:[%s1 + $0x3b0] sm:$0xff]
    %v365 = vld [vmem:[%s1 + $0x3b8] sm:$0xff]
    %v366 = vld [vmem:[%s1 + $0x3c0] sm:$0xff]
    %v367 = vld [vmem:[%s1 + $0x3c8] sm:$0xff]
    %v368 = vld [vmem:[%s1 + $0x3d0] sm:$0xff]
    %v369 = vld [vmem:[%s1 + $0x3d8] sm:$0xff]
    %v370 = vld [vmem:[%s1 + $0x3e0] sm:$0xff]
    %v371 = vld [vmem:[%s1 + $0x3e8] sm:$0xff]
    %v372 = vld [vmem:[%s1 + $0x3f0] sm:$0xff]
    %v373 = vld [vmem:[%s1 + $0x3f8] sm:$0xff]
    %v374 = vld [vmem:[%s1 + $0x400] sm:$0xff]
    %v375 = vld [vmem:[%s1 + $0x408] sm:$0xff]
    %v376 = vld [vmem:[%s1 + $0x410] sm:$0xff]
    %v377 = vld [vmem:[%s1 + $0x418] sm:$0xff]
    %v378 = vld [vmem:[%s1 + $0x420] sm:$0xff]
    %v379 = vld [vmem:[%s1 + $0x428] sm:$0xff]
    %v380 = vld [vmem:[%s1 + $0x430] sm:$0xff]
    %v381 = vld [vmem:[%s1 + $0x438] sm:$0xff]
    %v382 = vld [vmem:[%s1 + $0x440] sm:$0xff]
    %v383 = vld [vmem:[%s1 + $0x448] sm:$0xff]
    %v384 = vld [vmem:[%s1 + $0x450] sm:$0xff]
    %v385 = vld [vmem:[%s1 + $0x458] sm:$0xff]
    %v386 = vld [vmem:[%s1 + $0x460] sm:$0xff]
    %v387 = vld [vmem:[%s1 + $0x468] sm:$0xff]
    %v388 = vld [vmem:[%s1 + $0x470] sm:$0xff]
    %v389 = vld [vmem:[%s1 + $0x478] sm:$0xff]
    %v390 = vld [vmem:[%s1 + $0x480] sm:$0xff]
    %v391 = vld [vmem:[%s1 + $0x488] sm:$0xff]
    %v392 = vld [vmem:[%s1 + $0x490] sm:$0xff]
    %v393 = vld [vmem:[%s1 + $0x498] sm:$0xff]
    %v394 = vld [vmem:[%s1 + $0x4a0] sm:$0xff]
    %v395 = vld [vmem:[%s1 + $0x4a8] sm:$0xff]
    %v396 = vld [vmem:[%s1 + $0x4b0] sm:$0xff]
    %v397 = vld [vmem:[%s1 + $0x4b8] sm:$0xff]
    %v398 = vld [vmem:[%s1 + $0x4c0] sm:$0xff]
    %v399 = vld [vmem:[%s1 + $0x4c8] sm:$0xff]
    %v400 = vld [vmem:[%s1 + $0x4d0] sm:$0xff]
    %v401 = vld [vmem:[%s1 + $0x4d8] sm:$0xff]
    %v402 = vld [vmem:[%s1 + $0x4e0] sm:$0xff]
    %v403 = vld [vmem:[%s1 + $0x4e8] sm:$0xff]
    %v404 = vld [vmem:[%s1 + $0x4f0] sm:$0xff]
    %v405 = vld [vmem:[%s1 + $0x4f8] sm:$0xff]
    %v406 = vld [vmem:[%s1 + $0x500] sm:$0xff]
    %v407 = vld [vmem:[%s1 + $0x508] sm:$0xff]
    %v408 = vld [vmem:[%s1 + $0x510] sm:$0xff]
    %v409 = vld [vmem:[%s1 + $0x518] sm:$0xff]
    %v410 = vld [vmem:[%s1 + $0x520] sm:$0xff]
    %v411 = vld [vmem:[%s1 + $0x528] sm:$0xff]
    %v412 = vld [vmem:[%s1 + $0x530] sm:$0xff]
    %v413 = vld [vmem:[%s1 + $0x538] sm:$0xff]
    %v414 = vld [vmem:[%s1 + $0x540] sm:$0xff]
    %v415 = vld [vmem:[%s1 + $0x548] sm:$0xff]
    %v416 = vld [vmem:[%s1 + $0x550] sm:$0xff]
    %v417 = vld [vmem:[%s1 + $0x558] sm:$0xff]
    %v418 = vld [vmem:[%s1 + $0x560] sm:$0xff]
    %v419 = vld [vmem:[%s1 + $0x568] sm:$0xff]
    %v420 = vld [vmem:[%s1 + $0x570] sm:$0xff]
    %v421 = vld [vmem:[%s1 + $0x578] sm:$0xff]
    %v422 = vld [vmem:[%s1 + $0x580] sm:$0xff]
    %v423 = vld [vmem:[%s1 + $0x588] sm:$0xff]
    %v424 = vld [vmem:[%s1 + $0x590] sm:$0xff]
    %v425 = vld [vmem:[%s1 + $0x598] sm:$0xff]
    %v426 = vld [vmem:[%s1 + $0x5a0] sm:$0xff]
    %v427 = vld [vmem:[%s1 + $0x5a8] sm:$0xff]
    %v428 = vld [vmem:[%s1 + $0x5b0] sm:$0xff]
    %v429 = vld [vmem:[%s1 + $0x5b8] sm:$0xff]
    %v430 = vld [vmem:[%s1 + $0x5c0] sm:$0xff]
    %v431 = vld [vmem:[%s1 + $0x5c8] sm:$0xff]
    %v432 = vld [vmem:[%s1 + $0x5d0] sm:$0xff]
    %v433 = vld [vmem:[%s1 + $0x5d8] sm:$0xff]
    %v434 = vld [vmem:[%s1 + $0x5e0] sm:$0xff]
    %v435 = vld [vmem:[%s1 + $0x5e8] sm:$0xff]
    %v436 = vld [vmem:[%s1 + $0x5f0] sm:$0xff]
    %v437 = vld [vmem:[%s1 + $0x5f8] sm:$0xff]
    %v438 = vld [vmem:[%s1 + $0x600] sm:$0xff]
    %v439 = vld [vmem:[%s1 + $0x608] sm:$0xff]
    %v440 = vld [vmem:[%s1 + $0x610] sm:$0xff]
    %v441 = vld [vmem:[%s1 + $0x618] sm:$0xff]
    %v442 = vld [vmem:[%s1 + $0x620] sm:$0xff]
    %v443 = vld [vmem:[%s1 + $0x628] sm:$0xff]
    %v444 = vld [vmem:[%s1 + $0x630] sm:$0xff]
    %v445 = vld [vmem:[%s1 + $0x638] sm:$0xff]
    %v446 = vld [vmem:[%s1 + $0x640] sm:$0xff]
    %v447 = vld [vmem:[%s1 + $0x648] sm:$0xff]
    %v448 = vld [vmem:[%s1 + $0x650] sm:$0xff]
    %v449 = vld [vmem:[%s1 + $0x658] sm:$0xff]
    %v450 = vld [vmem:[%s1 + $0x660] sm:$0xff]
    %v451 = vld [vmem:[%s1 + $0x668] sm:$0xff]
    %v452 = vld [vmem:[%s1 + $0x670] sm:$0xff]
    %v453 = vld [vmem:[%s1 + $0x678] sm:$0xff]
    %v454 = vld [vmem:[%s1 + $0x680] sm:$0xff]
    %v455 = vld [vmem:[%s1 + $0x688] sm:$0xff]
    %v456 = vld [vmem:[%s1 + $0x690] sm:$0xff]
    %v457 = vld [vmem:[%s1 + $0x698] sm:$0xff]
    %v458 = vld [vmem:[%s1 + $0x6a0] sm:$0xff]
    %v459 = vld [vmem:[%s1 + $0x6a8] sm:$0xff]
    %v460 = vld [vmem:[%s1 + $0x6b0] sm:$0xff]
    %v461 = vld [vmem:[%s1 + $0x6b8] sm:$0xff]
    %v462 = vld [vmem:[%s1 + $0x6c0] sm:$0xff]
    %v463 = vld [vmem:[%s1 + $0x6c8] sm:$0xff]
    %v464 = vld [vmem:[%s1 + $0x6d0] sm:$0xff]
    %v465 = vld [vmem:[%s1 + $0x6d8] sm:$0xff]
    %v466 = vld [vmem:[%s1 + $0x6e0] sm:$0xff]
    %v467 = vld [vmem:[%s1 + $0x6e8] sm:$0xff]
    %v468 = vld [vmem:[%s1 + $0x6f0] sm:$0xff]
    %v469 = vld [vmem:[%s1 + $0x6f8] sm:$0xff]
    %v470 = vld [vmem:[%s1 + $0x700] sm:$0xff]
    %v471 = vld [vmem:[%s1 + $0x708] sm:$0xff]
    %v472 = vld [vmem:[%s1 + $0x710] sm:$0xff]
    %v473 = vld [vmem:[%s1 + $0x718] sm:$0xff]
    %v474 = vld [vmem:[%s1 + $0x720] sm:$0xff]
    %v475 = vld [vmem:[%s1 + $0x728] sm:$0xff]
    %v476 = vld [vmem:[%s1 + $0x730] sm:$0xff]
    %v477 = vld [vmem:[%s1 + $0x738] sm:$0xff]
    %v478 = vld [vmem:[%s1 + $0x740] sm:$0xff]
    %v479 = vld [vmem:[%s1 + $0x748] sm:$0xff]
    %v480 = vld [vmem:[%s1 + $0x750] sm:$0xff]
    %v481 = vld [vmem:[%s1 + $0x758] sm:$0xff]
    %v482 = vld [vmem:[%s1 + $0x760] sm:$0xff]
    %v483 = vld [vmem:[%s1 + $0x768] sm:$0xff]
    %v484 = vld [vmem:[%s1 + $0x770] sm:$0xff]
    %v485 = vld [vmem:[%s1 + $0x778] sm:$0xff]
    %v486 = vld [vmem:[%s1 + $0x780] sm:$0xff]
    %v487 = vld [vmem:[%s1 + $0x788] sm:$0xff]
    %v488 = vld [vmem:[%s1 + $0x790] sm:$0xff]
    %v489 = vld [vmem:[%s1 + $0x798] sm:$0xff]
    %v490 = vld [vmem:[%s1 + $0x7a0] sm:$0xff]
    %v491 = vld [vmem:[%s1 + $0x7a8] sm:$0xff]
    %v492 = vld [vmem:[%s1 + $0x7b0] sm:$0xff]
    %v493 = vld [vmem:[%s1 + $0x7b8] sm:$0xff]
    %v494 = vld [vmem:[%s1 + $0x7c0] sm:$0xff]
    %v495 = vld [vmem:[%s1 + $0x7c8] sm:$0xff]
    %v496 = vld [vmem:[%s1 + $0x7d0] sm:$0xff]
    %v497 = vld [vmem:[%s1 + $0x7d8] sm:$0xff]
    %v498 = vld [vmem:[%s1 + $0x7e0] sm:$0xff]
    %v499 = vld [vmem:[%s1 + $0x7e8] sm:$0xff]
    %v500 = vld [vmem:[%s1 + $0x7f0] sm:$0xff]
    %v501 = vld [vmem:[%s1 + $0x7f8] sm:$0xff]
    %v502 = vld [vmem:[%s2] sm:$0xf]
    %v504 = vlaneseq
    %v505 = vshrl.u32 %v504, 7
    %v506 = vsub.s32 0, %v505
    %v507 = vrot.slane %v502, %v506
    %v508 = vlaneseq
    %v509 = vshrl.u32 %v508, 7
    %v510 = vsub.s32 1, %v509
    %v511 = vrot.slane %v502, %v510
    %v512 = vlaneseq
    %v513 = vshrl.u32 %v512, 7
    %v514 = vsub.s32 2, %v513
    %v515 = vrot.slane %v502, %v514
    %v516 = vlaneseq
    %v517 = vshrl.u32 %v516, 7
    %v518 = vsub.s32 3, %v517
    %v519 = vrot.slane %v502, %v518
    %v780 = vunpack.c.l.b16 %v246
    %v781 = vunpack.c.h.b16 %v246
    %v782 = vunpack.c.l.b16 %v247
    %v783 = vunpack.c.h.b16 %v247
    %v784 = vunpack.c.l.b16 %v248
    %v785 = vunpack.c.h.b16 %v248
    %v786 = vunpack.c.l.b16 %v249
    %v787 = vunpack.c.h.b16 %v249
    %v788 = vunpack.c.l.b16 %v250
    %v789 = vunpack.c.h.b16 %v250
    %v790 = vunpack.c.l.b16 %v251
    %v791 = vunpack.c.h.b16 %v251
    %v792 = vunpack.c.l.b16 %v252
    %v793 = vunpack.c.h.b16 %v252
    %v794 = vunpack.c.l.b16 %v253
    %v795 = vunpack.c.h.b16 %v253
    %v796 = vunpack.c.l.b16 %v254
    %v797 = vunpack.c.h.b16 %v254
    %v798 = vunpack.c.l.b16 %v255
    %v799 = vunpack.c.h.b16 %v255
    %v800 = vunpack.c.l.b16 %v256
    %v801 = vunpack.c.h.b16 %v256
    %v802 = vunpack.c.l.b16 %v257
    %v803 = vunpack.c.h.b16 %v257
    %v804 = vunpack.c.l.b16 %v258
    %v805 = vunpack.c.h.b16 %v258
    %v806 = vunpack.c.l.b16 %v259
    %v807 = vunpack.c.h.b16 %v259
    %v808 = vunpack.c.l.b16 %v260
    %v809 = vunpack.c.h.b16 %v260
    %v810 = vunpack.c.l.b16 %v261
    %v811 = vunpack.c.h.b16 %v261
    %v812 = vunpack.c.l.b16 %v262
    %v813 = vunpack.c.h.b16 %v262
    %v814 = vunpack.c.l.b16 %v263
    %v815 = vunpack.c.h.b16 %v263
    %v816 = vunpack.c.l.b16 %v264
    %v817 = vunpack.c.h.b16 %v264
    %v818 = vunpack.c.l.b16 %v265
    %v819 = vunpack.c.h.b16 %v265
    %v820 = vunpack.c.l.b16 %v266
    %v821 = vunpack.c.h.b16 %v266
    %v822 = vunpack.c.l.b16 %v267
    %v823 = vunpack.c.h.b16 %v267
    %v824 = vunpack.c.l.b16 %v268
    %v825 = vunpack.c.h.b16 %v268
    %v826 = vunpack.c.l.b16 %v269
    %v827 = vunpack.c.h.b16 %v269
    %v828 = vunpack.c.l.b16 %v270
    %v829 = vunpack.c.h.b16 %v270
    %v830 = vunpack.c.l.b16 %v271
    %v831 = vunpack.c.h.b16 %v271
    %v832 = vunpack.c.l.b16 %v272
    %v833 = vunpack.c.h.b16 %v272
    %v834 = vunpack.c.l.b16 %v273
    %v835 = vunpack.c.h.b16 %v273
    %v836 = vunpack.c.l.b16 %v274
    %v837 = vunpack.c.h.b16 %v274
    %v838 = vunpack.c.l.b16 %v275
    %v839 = vunpack.c.h.b16 %v275
    %v840 = vunpack.c.l.b16 %v276
    %v841 = vunpack.c.h.b16 %v276
    %v842 = vunpack.c.l.b16 %v277
    %v843 = vunpack.c.h.b16 %v277
    %v844 = vunpack.c.l.b16 %v278
    %v845 = vunpack.c.h.b16 %v278
    %v846 = vunpack.c.l.b16 %v279
    %v847 = vunpack.c.h.b16 %v279
    %v848 = vunpack.c.l.b16 %v280
    %v849 = vunpack.c.h.b16 %v280
    %v850 = vunpack.c.l.b16 %v281
    %v851 = vunpack.c.h.b16 %v281
    %v852 = vunpack.c.l.b16 %v282
    %v853 = vunpack.c.h.b16 %v282
    %v854 = vunpack.c.l.b16 %v283
    %v855 = vunpack.c.h.b16 %v283
    %v856 = vunpack.c.l.b16 %v284
    %v857 = vunpack.c.h.b16 %v284
    %v858 = vunpack.c.l.b16 %v285
    %v859 = vunpack.c.h.b16 %v285
    %v860 = vunpack.c.l.b16 %v286
    %v861 = vunpack.c.h.b16 %v286
    %v862 = vunpack.c.l.b16 %v287
    %v863 = vunpack.c.h.b16 %v287
    %v864 = vunpack.c.l.b16 %v288
    %v865 = vunpack.c.h.b16 %v288
    %v866 = vunpack.c.l.b16 %v289
    %v867 = vunpack.c.h.b16 %v289
    %v868 = vunpack.c.l.b16 %v290
    %v869 = vunpack.c.h.b16 %v290
    %v870 = vunpack.c.l.b16 %v291
    %v871 = vunpack.c.h.b16 %v291
    %v872 = vunpack.c.l.b16 %v292
    %v873 = vunpack.c.h.b16 %v292
    %v874 = vunpack.c.l.b16 %v293
    %v875 = vunpack.c.h.b16 %v293
    %v876 = vunpack.c.l.b16 %v294
    %v877 = vunpack.c.h.b16 %v294
    %v878 = vunpack.c.l.b16 %v295
    %v879 = vunpack.c.h.b16 %v295
    %v880 = vunpack.c.l.b16 %v296
    %v881 = vunpack.c.h.b16 %v296
    %v882 = vunpack.c.l.b16 %v297
    %v883 = vunpack.c.h.b16 %v297
    %v884 = vunpack.c.l.b16 %v298
    %v885 = vunpack.c.h.b16 %v298
    %v886 = vunpack.c.l.b16 %v299
    %v887 = vunpack.c.h.b16 %v299
    %v888 = vunpack.c.l.b16 %v300
    %v889 = vunpack.c.h.b16 %v300
    %v890 = vunpack.c.l.b16 %v301
    %v891 = vunpack.c.h.b16 %v301
    %v892 = vunpack.c.l.b16 %v302
    %v893 = vunpack.c.h.b16 %v302
    %v894 = vunpack.c.l.b16 %v303
    %v895 = vunpack.c.h.b16 %v303
    %v896 = vunpack.c.l.b16 %v304
    %v897 = vunpack.c.h.b16 %v304
    %v898 = vunpack.c.l.b16 %v305
    %v899 = vunpack.c.h.b16 %v305
    %v900 = vunpack.c.l.b16 %v306
    %v901 = vunpack.c.h.b16 %v306
    %v902 = vunpack.c.l.b16 %v307
    %v903 = vunpack.c.h.b16 %v307
    %v904 = vunpack.c.l.b16 %v308
    %v905 = vunpack.c.h.b16 %v308
    %v906 = vunpack.c.l.b16 %v309
    %v907 = vunpack.c.h.b16 %v309
    %v908 = vunpack.c.l.b16 %v310
    %v909 = vunpack.c.h.b16 %v310
    %v910 = vunpack.c.l.b16 %v311
    %v911 = vunpack.c.h.b16 %v311
    %v912 = vunpack.c.l.b16 %v312
    %v913 = vunpack.c.h.b16 %v312
    %v914 = vunpack.c.l.b16 %v313
    %v915 = vunpack.c.h.b16 %v313
    %v916 = vunpack.c.l.b16 %v314
    %v917 = vunpack.c.h.b16 %v314
    %v918 = vunpack.c.l.b16 %v315
    %v919 = vunpack.c.h.b16 %v315
    %v920 = vunpack.c.l.b16 %v316
    %v921 = vunpack.c.h.b16 %v316
    %v922 = vunpack.c.l.b16 %v317
    %v923 = vunpack.c.h.b16 %v317
    %v924 = vunpack.c.l.b16 %v318
    %v925 = vunpack.c.h.b16 %v318
    %v926 = vunpack.c.l.b16 %v319
    %v927 = vunpack.c.h.b16 %v319
    %v928 = vunpack.c.l.b16 %v320
    %v929 = vunpack.c.h.b16 %v320
    %v930 = vunpack.c.l.b16 %v321
    %v931 = vunpack.c.h.b16 %v321
    %v932 = vunpack.c.l.b16 %v322
    %v933 = vunpack.c.h.b16 %v322
    %v934 = vunpack.c.l.b16 %v323
    %v935 = vunpack.c.h.b16 %v323
    %v936 = vunpack.c.l.b16 %v324
    %v937 = vunpack.c.h.b16 %v324
    %v938 = vunpack.c.l.b16 %v325
    %v939 = vunpack.c.h.b16 %v325
    %v940 = vunpack.c.l.b16 %v326
    %v941 = vunpack.c.h.b16 %v326
    %v942 = vunpack.c.l.b16 %v327
    %v943 = vunpack.c.h.b16 %v327
    %v944 = vunpack.c.l.b16 %v328
    %v945 = vunpack.c.h.b16 %v328
    %v946 = vunpack.c.l.b16 %v329
    %v947 = vunpack.c.h.b16 %v329
    %v948 = vunpack.c.l.b16 %v330
    %v949 = vunpack.c.h.b16 %v330
    %v950 = vunpack.c.l.b16 %v331
    %v951 = vunpack.c.h.b16 %v331
    %v952 = vunpack.c.l.b16 %v332
    %v953 = vunpack.c.h.b16 %v332
    %v954 = vunpack.c.l.b16 %v333
    %v955 = vunpack.c.h.b16 %v333
    %v956 = vunpack.c.l.b16 %v334
    %v957 = vunpack.c.h.b16 %v334
    %v958 = vunpack.c.l.b16 %v335
    %v959 = vunpack.c.h.b16 %v335
    %v960 = vunpack.c.l.b16 %v336
    %v961 = vunpack.c.h.b16 %v336
    %v962 = vunpack.c.l.b16 %v337
    %v963 = vunpack.c.h.b16 %v337
    %v964 = vunpack.c.l.b16 %v338
    %v965 = vunpack.c.h.b16 %v338
    %v966 = vunpack.c.l.b16 %v339
    %v967 = vunpack.c.h.b16 %v339
    %v968 = vunpack.c.l.b16 %v340
    %v969 = vunpack.c.h.b16 %v340
    %v970 = vunpack.c.l.b16 %v341
    %v971 = vunpack.c.h.b16 %v341
    %v972 = vunpack.c.l.b16 %v342
    %v973 = vunpack.c.h.b16 %v342
    %v974 = vunpack.c.l.b16 %v343
    %v975 = vunpack.c.h.b16 %v343
    %v976 = vunpack.c.l.b16 %v344
    %v977 = vunpack.c.h.b16 %v344
    %v978 = vunpack.c.l.b16 %v345
    %v979 = vunpack.c.h.b16 %v345
    %v980 = vunpack.c.l.b16 %v346
    %v981 = vunpack.c.h.b16 %v346
    %v982 = vunpack.c.l.b16 %v347
    %v983 = vunpack.c.h.b16 %v347
    %v984 = vunpack.c.l.b16 %v348
    %v985 = vunpack.c.h.b16 %v348
    %v986 = vunpack.c.l.b16 %v349
    %v987 = vunpack.c.h.b16 %v349
    %v988 = vunpack.c.l.b16 %v350
    %v989 = vunpack.c.h.b16 %v350
    %v990 = vunpack.c.l.b16 %v351
    %v991 = vunpack.c.h.b16 %v351
    %v992 = vunpack.c.l.b16 %v352
    %v993 = vunpack.c.h.b16 %v352
    %v994 = vunpack.c.l.b16 %v353
    %v995 = vunpack.c.h.b16 %v353
    %v996 = vunpack.c.l.b16 %v354
    %v997 = vunpack.c.h.b16 %v354
    %v998 = vunpack.c.l.b16 %v355
    %v999 = vunpack.c.h.b16 %v355
    %v1000 = vunpack.c.l.b16 %v356
    %v1001 = vunpack.c.h.b16 %v356
    %v1002 = vunpack.c.l.b16 %v357
    %v1003 = vunpack.c.h.b16 %v357
    %v1004 = vunpack.c.l.b16 %v358
    %v1005 = vunpack.c.h.b16 %v358
    %v1006 = vunpack.c.l.b16 %v359
    %v1007 = vunpack.c.h.b16 %v359
    %v1008 = vunpack.c.l.b16 %v360
    %v1009 = vunpack.c.h.b16 %v360
    %v1010 = vunpack.c.l.b16 %v361
    %v1011 = vunpack.c.h.b16 %v361
    %v1012 = vunpack.c.l.b16 %v362
    %v1013 = vunpack.c.h.b16 %v362
    %v1014 = vunpack.c.l.b16 %v363
    %v1015 = vunpack.c.h.b16 %v363
    %v1016 = vunpack.c.l.b16 %v364
    %v1017 = vunpack.c.h.b16 %v364
    %v1018 = vunpack.c.l.b16 %v365
    %v1019 = vunpack.c.h.b16 %v365
    %v1020 = vunpack.c.l.b16 %v366
    %v1021 = vunpack.c.h.b16 %v366
    %v1022 = vunpack.c.l.b16 %v367
    %v1023 = vunpack.c.h.b16 %v367
    %v1024 = vunpack.c.l.b16 %v368
    %v1025 = vunpack.c.h.b16 %v368
    %v1026 = vunpack.c.l.b16 %v369
    %v1027 = vunpack.c.h.b16 %v369
    %v1028 = vunpack.c.l.b16 %v370
    %v1029 = vunpack.c.h.b16 %v370
    %v1030 = vunpack.c.l.b16 %v371
    %v1031 = vunpack.c.h.b16 %v371
    %v1032 = vunpack.c.l.b16 %v372
    %v1033 = vunpack.c.h.b16 %v372
    %v1034 = vunpack.c.l.b16 %v373
    %v1035 = vunpack.c.h.b16 %v373
    %v1036 = vunpack.c.l.b16 %v374
    %v1037 = vunpack.c.h.b16 %v374
    %v1038 = vunpack.c.l.b16 %v375
    %v1039 = vunpack.c.h.b16 %v375
    %v1040 = vunpack.c.l.b16 %v376
    %v1041 = vunpack.c.h.b16 %v376
    %v1042 = vunpack.c.l.b16 %v377
    %v1043 = vunpack.c.h.b16 %v377
    %v1044 = vunpack.c.l.b16 %v378
    %v1045 = vunpack.c.h.b16 %v378
    %v1046 = vunpack.c.l.b16 %v379
    %v1047 = vunpack.c.h.b16 %v379
    %v1048 = vunpack.c.l.b16 %v380
    %v1049 = vunpack.c.h.b16 %v380
    %v1050 = vunpack.c.l.b16 %v381
    %v1051 = vunpack.c.h.b16 %v381
    %v1052 = vunpack.c.l.b16 %v382
    %v1053 = vunpack.c.h.b16 %v382
    %v1054 = vunpack.c.l.b16 %v383
    %v1055 = vunpack.c.h.b16 %v383
    %v1056 = vunpack.c.l.b16 %v384
    %v1057 = vunpack.c.h.b16 %v384
    %v1058 = vunpack.c.l.b16 %v385
    %v1059 = vunpack.c.h.b16 %v385
    %v1060 = vunpack.c.l.b16 %v386
    %v1061 = vunpack.c.h.b16 %v386
    %v1062 = vunpack.c.l.b16 %v387
    %v1063 = vunpack.c.h.b16 %v387
    %v1064 = vunpack.c.l.b16 %v388
    %v1065 = vunpack.c.h.b16 %v388
    %v1066 = vunpack.c.l.b16 %v389
    %v1067 = vunpack.c.h.b16 %v389
    %v1068 = vunpack.c.l.b16 %v390
    %v1069 = vunpack.c.h.b16 %v390
    %v1070 = vunpack.c.l.b16 %v391
    %v1071 = vunpack.c.h.b16 %v391
    %v1072 = vunpack.c.l.b16 %v392
    %v1073 = vunpack.c.h.b16 %v392
    %v1074 = vunpack.c.l.b16 %v393
    %v1075 = vunpack.c.h.b16 %v393
    %v1076 = vunpack.c.l.b16 %v394
    %v1077 = vunpack.c.h.b16 %v394
    %v1078 = vunpack.c.l.b16 %v395
    %v1079 = vunpack.c.h.b16 %v395
    %v1080 = vunpack.c.l.b16 %v396
    %v1081 = vunpack.c.h.b16 %v396
    %v1082 = vunpack.c.l.b16 %v397
    %v1083 = vunpack.c.h.b16 %v397
    %v1084 = vunpack.c.l.b16 %v398
    %v1085 = vunpack.c.h.b16 %v398
    %v1086 = vunpack.c.l.b16 %v399
    %v1087 = vunpack.c.h.b16 %v399
    %v1088 = vunpack.c.l.b16 %v400
    %v1089 = vunpack.c.h.b16 %v400
    %v1090 = vunpack.c.l.b16 %v401
    %v1091 = vunpack.c.h.b16 %v401
    %v1092 = vunpack.c.l.b16 %v402
    %v1093 = vunpack.c.h.b16 %v402
    %v1094 = vunpack.c.l.b16 %v403
    %v1095 = vunpack.c.h.b16 %v403
    %v1096 = vunpack.c.l.b16 %v404
    %v1097 = vunpack.c.h.b16 %v404
    %v1098 = vunpack.c.l.b16 %v405
    %v1099 = vunpack.c.h.b16 %v405
    %v1100 = vunpack.c.l.b16 %v406
    %v1101 = vunpack.c.h.b16 %v406
    %v1102 = vunpack.c.l.b16 %v407
    %v1103 = vunpack.c.h.b16 %v407
    %v1104 = vunpack.c.l.b16 %v408
    %v1105 = vunpack.c.h.b16 %v408
    %v1106 = vunpack.c.l.b16 %v409
    %v1107 = vunpack.c.h.b16 %v409
    %v1108 = vunpack.c.l.b16 %v410
    %v1109 = vunpack.c.h.b16 %v410
    %v1110 = vunpack.c.l.b16 %v411
    %v1111 = vunpack.c.h.b16 %v411
    %v1112 = vunpack.c.l.b16 %v412
    %v1113 = vunpack.c.h.b16 %v412
    %v1114 = vunpack.c.l.b16 %v413
    %v1115 = vunpack.c.h.b16 %v413
    %v1116 = vunpack.c.l.b16 %v414
    %v1117 = vunpack.c.h.b16 %v414
    %v1118 = vunpack.c.l.b16 %v415
    %v1119 = vunpack.c.h.b16 %v415
    %v1120 = vunpack.c.l.b16 %v416
    %v1121 = vunpack.c.h.b16 %v416
    %v1122 = vunpack.c.l.b16 %v417
    %v1123 = vunpack.c.h.b16 %v417
    %v1124 = vunpack.c.l.b16 %v418
    %v1125 = vunpack.c.h.b16 %v418
    %v1126 = vunpack.c.l.b16 %v419
    %v1127 = vunpack.c.h.b16 %v419
    %v1128 = vunpack.c.l.b16 %v420
    %v1129 = vunpack.c.h.b16 %v420
    %v1130 = vunpack.c.l.b16 %v421
    %v1131 = vunpack.c.h.b16 %v421
    %v1132 = vunpack.c.l.b16 %v422
    %v1133 = vunpack.c.h.b16 %v422
    %v1134 = vunpack.c.l.b16 %v423
    %v1135 = vunpack.c.h.b16 %v423
    %v1136 = vunpack.c.l.b16 %v424
    %v1137 = vunpack.c.h.b16 %v424
    %v1138 = vunpack.c.l.b16 %v425
    %v1139 = vunpack.c.h.b16 %v425
    %v1140 = vunpack.c.l.b16 %v426
    %v1141 = vunpack.c.h.b16 %v426
    %v1142 = vunpack.c.l.b16 %v427
    %v1143 = vunpack.c.h.b16 %v427
    %v1144 = vunpack.c.l.b16 %v428
    %v1145 = vunpack.c.h.b16 %v428
    %v1146 = vunpack.c.l.b16 %v429
    %v1147 = vunpack.c.h.b16 %v429
    %v1148 = vunpack.c.l.b16 %v430
    %v1149 = vunpack.c.h.b16 %v430
    %v1150 = vunpack.c.l.b16 %v431
    %v1151 = vunpack.c.h.b16 %v431
    %v1152 = vunpack.c.l.b16 %v432
    %v1153 = vunpack.c.h.b16 %v432
    %v1154 = vunpack.c.l.b16 %v433
    %v1155 = vunpack.c.h.b16 %v433
    %v1156 = vunpack.c.l.b16 %v434
    %v1157 = vunpack.c.h.b16 %v434
    %v1158 = vunpack.c.l.b16 %v435
    %v1159 = vunpack.c.h.b16 %v435
    %v1160 = vunpack.c.l.b16 %v436
    %v1161 = vunpack.c.h.b16 %v436
    %v1162 = vunpack.c.l.b16 %v437
    %v1163 = vunpack.c.h.b16 %v437
    %v1164 = vunpack.c.l.b16 %v438
    %v1165 = vunpack.c.h.b16 %v438
    %v1166 = vunpack.c.l.b16 %v439
    %v1167 = vunpack.c.h.b16 %v439
    %v1168 = vunpack.c.l.b16 %v440
    %v1169 = vunpack.c.h.b16 %v440
    %v1170 = vunpack.c.l.b16 %v441
    %v1171 = vunpack.c.h.b16 %v441
    %v1172 = vunpack.c.l.b16 %v442
    %v1173 = vunpack.c.h.b16 %v442
    %v1174 = vunpack.c.l.b16 %v443
    %v1175 = vunpack.c.h.b16 %v443
    %v1176 = vunpack.c.l.b16 %v444
    %v1177 = vunpack.c.h.b16 %v444
    %v1178 = vunpack.c.l.b16 %v445
    %v1179 = vunpack.c.h.b16 %v445
    %v1180 = vunpack.c.l.b16 %v446
    %v1181 = vunpack.c.h.b16 %v446
    %v1182 = vunpack.c.l.b16 %v447
    %v1183 = vunpack.c.h.b16 %v447
    %v1184 = vunpack.c.l.b16 %v448
    %v1185 = vunpack.c.h.b16 %v448
    %v1186 = vunpack.c.l.b16 %v449
    %v1187 = vunpack.c.h.b16 %v449
    %v1188 = vunpack.c.l.b16 %v450
    %v1189 = vunpack.c.h.b16 %v450
    %v1190 = vunpack.c.l.b16 %v451
    %v1191 = vunpack.c.h.b16 %v451
    %v1192 = vunpack.c.l.b16 %v452
    %v1193 = vunpack.c.h.b16 %v452
    %v1194 = vunpack.c.l.b16 %v453
    %v1195 = vunpack.c.h.b16 %v453
    %v1196 = vunpack.c.l.b16 %v454
    %v1197 = vunpack.c.h.b16 %v454
    %v1198 = vunpack.c.l.b16 %v455
    %v1199 = vunpack.c.h.b16 %v455
    %v1200 = vunpack.c.l.b16 %v456
    %v1201 = vunpack.c.h.b16 %v456
    %v1202 = vunpack.c.l.b16 %v457
    %v1203 = vunpack.c.h.b16 %v457
    %v1204 = vunpack.c.l.b16 %v458
    %v1205 = vunpack.c.h.b16 %v458
    %v1206 = vunpack.c.l.b16 %v459
    %v1207 = vunpack.c.h.b16 %v459
    %v1208 = vunpack.c.l.b16 %v460
    %v1209 = vunpack.c.h.b16 %v460
    %v1210 = vunpack.c.l.b16 %v461
    %v1211 = vunpack.c.h.b16 %v461
    %v1212 = vunpack.c.l.b16 %v462
    %v1213 = vunpack.c.h.b16 %v462
    %v1214 = vunpack.c.l.b16 %v463
    %v1215 = vunpack.c.h.b16 %v463
    %v1216 = vunpack.c.l.b16 %v464
    %v1217 = vunpack.c.h.b16 %v464
    %v1218 = vunpack.c.l.b16 %v465
    %v1219 = vunpack.c.h.b16 %v465
    %v1220 = vunpack.c.l.b16 %v466
    %v1221 = vunpack.c.h.b16 %v466
    %v1222 = vunpack.c.l.b16 %v467
    %v1223 = vunpack.c.h.b16 %v467
    %v1224 = vunpack.c.l.b16 %v468
    %v1225 = vunpack.c.h.b16 %v468
    %v1226 = vunpack.c.l.b16 %v469
    %v1227 = vunpack.c.h.b16 %v469
    %v1228 = vunpack.c.l.b16 %v470
    %v1229 = vunpack.c.h.b16 %v470
    %v1230 = vunpack.c.l.b16 %v471
    %v1231 = vunpack.c.h.b16 %v471
    %v1232 = vunpack.c.l.b16 %v472
    %v1233 = vunpack.c.h.b16 %v472
    %v1234 = vunpack.c.l.b16 %v473
    %v1235 = vunpack.c.h.b16 %v473
    %v1236 = vunpack.c.l.b16 %v474
    %v1237 = vunpack.c.h.b16 %v474
    %v1238 = vunpack.c.l.b16 %v475
    %v1239 = vunpack.c.h.b16 %v475
    %v1240 = vunpack.c.l.b16 %v476
    %v1241 = vunpack.c.h.b16 %v476
    %v1242 = vunpack.c.l.b16 %v477
    %v1243 = vunpack.c.h.b16 %v477
    %v1244 = vunpack.c.l.b16 %v478
    %v1245 = vunpack.c.h.b16 %v478
    %v1246 = vunpack.c.l.b16 %v479
    %v1247 = vunpack.c.h.b16 %v479
    %v1248 = vunpack.c.l.b16 %v480
    %v1249 = vunpack.c.h.b16 %v480
    %v1250 = vunpack.c.l.b16 %v481
    %v1251 = vunpack.c.h.b16 %v481
    %v1252 = vunpack.c.l.b16 %v482
    %v1253 = vunpack.c.h.b16 %v482
    %v1254 = vunpack.c.l.b16 %v483
    %v1255 = vunpack.c.h.b16 %v483
    %v1256 = vunpack.c.l.b16 %v484
    %v1257 = vunpack.c.h.b16 %v484
    %v1258 = vunpack.c.l.b16 %v485
    %v1259 = vunpack.c.h.b16 %v485
    %v1260 = vunpack.c.l.b16 %v486
    %v1261 = vunpack.c.h.b16 %v486
    %v1262 = vunpack.c.l.b16 %v487
    %v1263 = vunpack.c.h.b16 %v487
    %v1264 = vunpack.c.l.b16 %v488
    %v1265 = vunpack.c.h.b16 %v488
    %v1266 = vunpack.c.l.b16 %v489
    %v1267 = vunpack.c.h.b16 %v489
    %v1268 = vunpack.c.l.b16 %v490
    %v1269 = vunpack.c.h.b16 %v490
    %v1270 = vunpack.c.l.b16 %v491
    %v1271 = vunpack.c.h.b16 %v491
    %v1272 = vunpack.c.l.b16 %v492
    %v1273 = vunpack.c.h.b16 %v492
    %v1274 = vunpack.c.l.b16 %v493
    %v1275 = vunpack.c.h.b16 %v493
    %v1276 = vunpack.c.l.b16 %v494
    %v1277 = vunpack.c.h.b16 %v494
    %v1278 = vunpack.c.l.b16 %v495
    %v1279 = vunpack.c.h.b16 %v495
    %v1280 = vunpack.c.l.b16 %v496
    %v1281 = vunpack.c.h.b16 %v496
    %v1282 = vunpack.c.l.b16 %v497
    %v1283 = vunpack.c.h.b16 %v497
    %v1284 = vunpack.c.l.b16 %v498
    %v1285 = vunpack.c.h.b16 %v498
    %v1286 = vunpack.c.l.b16 %v499
    %v1287 = vunpack.c.h.b16 %v499
    %v1288 = vunpack.c.l.b16 %v500
    %v1289 = vunpack.c.h.b16 %v500
    %v1290 = vunpack.c.l.b16 %v501
    %v1291 = vunpack.c.h.b16 %v501
    %v1292 = vpack.c.b16 %v784, %v780
    %v1293 = vpack.c.b16 %v785, %v781
    %v1294 = vpack.c.b16 %v786, %v782
    %v1295 = vpack.c.b16 %v787, %v783
    %v1296 = vpack.c.b16 %v792, %v788
    %v1297 = vpack.c.b16 %v793, %v789
    %v1298 = vpack.c.b16 %v794, %v790
    %v1299 = vpack.c.b16 %v795, %v791
    %v1300 = vpack.c.b16 %v800, %v796
    %v1301 = vpack.c.b16 %v801, %v797
    %v1302 = vpack.c.b16 %v802, %v798
    %v1303 = vpack.c.b16 %v803, %v799
    %v1304 = vpack.c.b16 %v808, %v804
    %v1305 = vpack.c.b16 %v809, %v805
    %v1306 = vpack.c.b16 %v810, %v806
    %v1307 = vpack.c.b16 %v811, %v807
    %v1308 = vpack.c.b16 %v816, %v812
    %v1309 = vpack.c.b16 %v817, %v813
    %v1310 = vpack.c.b16 %v818, %v814
    %v1311 = vpack.c.b16 %v819, %v815
    %v1312 = vpack.c.b16 %v824, %v820
    %v1313 = vpack.c.b16 %v825, %v821
    %v1314 = vpack.c.b16 %v826, %v822
    %v1315 = vpack.c.b16 %v827, %v823
    %v1316 = vpack.c.b16 %v832, %v828
    %v1317 = vpack.c.b16 %v833, %v829
    %v1318 = vpack.c.b16 %v834, %v830
    %v1319 = vpack.c.b16 %v835, %v831
    %v1320 = vpack.c.b16 %v840, %v836
    %v1321 = vpack.c.b16 %v841, %v837
    %v1322 = vpack.c.b16 %v842, %v838
    %v1323 = vpack.c.b16 %v843, %v839
    %v1324 = vpack.c.b16 %v848, %v844
    %v1325 = vpack.c.b16 %v849, %v845
    %v1326 = vpack.c.b16 %v850, %v846
    %v1327 = vpack.c.b16 %v851, %v847
    %v1328 = vpack.c.b16 %v856, %v852
    %v1329 = vpack.c.b16 %v857, %v853
    %v1330 = vpack.c.b16 %v858, %v854
    %v1331 = vpack.c.b16 %v859, %v855
    %v1332 = vpack.c.b16 %v864, %v860
    %v1333 = vpack.c.b16 %v865, %v861
    %v1334 = vpack.c.b16 %v866, %v862
    %v1335 = vpack.c.b16 %v867, %v863
    %v1336 = vpack.c.b16 %v872, %v868
    %v1337 = vpack.c.b16 %v873, %v869
    %v1338 = vpack.c.b16 %v874, %v870
    %v1339 = vpack.c.b16 %v875, %v871
    %v1340 = vpack.c.b16 %v880, %v876
    %v1341 = vpack.c.b16 %v881, %v877
    %v1342 = vpack.c.b16 %v882, %v878
    %v1343 = vpack.c.b16 %v883, %v879
    %v1344 = vpack.c.b16 %v888, %v884
    %v1345 = vpack.c.b16 %v889, %v885
    %v1346 = vpack.c.b16 %v890, %v886
    %v1347 = vpack.c.b16 %v891, %v887
    %v1348 = vpack.c.b16 %v896, %v892
    %v1349 = vpack.c.b16 %v897, %v893
    %v1350 = vpack.c.b16 %v898, %v894
    %v1351 = vpack.c.b16 %v899, %v895
    %v1352 = vpack.c.b16 %v904, %v900
    %v1353 = vpack.c.b16 %v905, %v901
    %v1354 = vpack.c.b16 %v906, %v902
    %v1355 = vpack.c.b16 %v907, %v903
    %v1356 = vpack.c.b16 %v912, %v908
    %v1357 = vpack.c.b16 %v913, %v909
    %v1358 = vpack.c.b16 %v914, %v910
    %v1359 = vpack.c.b16 %v915, %v911
    %v1360 = vpack.c.b16 %v920, %v916
    %v1361 = vpack.c.b16 %v921, %v917
    %v1362 = vpack.c.b16 %v922, %v918
    %v1363 = vpack.c.b16 %v923, %v919
    %v1364 = vpack.c.b16 %v928, %v924
    %v1365 = vpack.c.b16 %v929, %v925
    %v1366 = vpack.c.b16 %v930, %v926
    %v1367 = vpack.c.b16 %v931, %v927
    %v1368 = vpack.c.b16 %v936, %v932
    %v1369 = vpack.c.b16 %v937, %v933
    %v1370 = vpack.c.b16 %v938, %v934
    %v1371 = vpack.c.b16 %v939, %v935
    %v1372 = vpack.c.b16 %v944, %v940
    %v1373 = vpack.c.b16 %v945, %v941
    %v1374 = vpack.c.b16 %v946, %v942
    %v1375 = vpack.c.b16 %v947, %v943
    %v1376 = vpack.c.b16 %v952, %v948
    %v1377 = vpack.c.b16 %v953, %v949
    %v1378 = vpack.c.b16 %v954, %v950
    %v1379 = vpack.c.b16 %v955, %v951
    %v1380 = vpack.c.b16 %v960, %v956
    %v1381 = vpack.c.b16 %v961, %v957
    %v1382 = vpack.c.b16 %v962, %v958
    %v1383 = vpack.c.b16 %v963, %v959
    %v1384 = vpack.c.b16 %v968, %v964
    %v1385 = vpack.c.b16 %v969, %v965
    %v1386 = vpack.c.b16 %v970, %v966
    %v1387 = vpack.c.b16 %v971, %v967
    %v1388 = vpack.c.b16 %v976, %v972
    %v1389 = vpack.c.b16 %v977, %v973
    %v1390 = vpack.c.b16 %v978, %v974
    %v1391 = vpack.c.b16 %v979, %v975
    %v1392 = vpack.c.b16 %v984, %v980
    %v1393 = vpack.c.b16 %v985, %v981
    %v1394 = vpack.c.b16 %v986, %v982
    %v1395 = vpack.c.b16 %v987, %v983
    %v1396 = vpack.c.b16 %v992, %v988
    %v1397 = vpack.c.b16 %v993, %v989
    %v1398 = vpack.c.b16 %v994, %v990
    %v1399 = vpack.c.b16 %v995, %v991
    %v1400 = vpack.c.b16 %v1000, %v996
    %v1401 = vpack.c.b16 %v1001, %v997
    %v1402 = vpack.c.b16 %v1002, %v998
    %v1403 = vpack.c.b16 %v1003, %v999
    %v1404 = vpack.c.b16 %v1008, %v1004
    %v1405 = vpack.c.b16 %v1009, %v1005
    %v1406 = vpack.c.b16 %v1010, %v1006
    %v1407 = vpack.c.b16 %v1011, %v1007
    %v1408 = vpack.c.b16 %v1016, %v1012
    %v1409 = vpack.c.b16 %v1017, %v1013
    %v1410 = vpack.c.b16 %v1018, %v1014
    %v1411 = vpack.c.b16 %v1019, %v1015
    %v1412 = vpack.c.b16 %v1024, %v1020
    %v1413 = vpack.c.b16 %v1025, %v1021
    %v1414 = vpack.c.b16 %v1026, %v1022
    %v1415 = vpack.c.b16 %v1027, %v1023
    %v1416 = vpack.c.b16 %v1032, %v1028
    %v1417 = vpack.c.b16 %v1033, %v1029
    %v1418 = vpack.c.b16 %v1034, %v1030
    %v1419 = vpack.c.b16 %v1035, %v1031
    %v1420 = vpack.c.b16 %v1040, %v1036
    %v1421 = vpack.c.b16 %v1041, %v1037
    %v1422 = vpack.c.b16 %v1042, %v1038
    %v1423 = vpack.c.b16 %v1043, %v1039
    %v1424 = vpack.c.b16 %v1048, %v1044
    %v1425 = vpack.c.b16 %v1049, %v1045
    %v1426 = vpack.c.b16 %v1050, %v1046
    %v1427 = vpack.c.b16 %v1051, %v1047
    %v1428 = vpack.c.b16 %v1056, %v1052
    %v1429 = vpack.c.b16 %v1057, %v1053
    %v1430 = vpack.c.b16 %v1058, %v1054
    %v1431 = vpack.c.b16 %v1059, %v1055
    %v1432 = vpack.c.b16 %v1064, %v1060
    %v1433 = vpack.c.b16 %v1065, %v1061
    %v1434 = vpack.c.b16 %v1066, %v1062
    %v1435 = vpack.c.b16 %v1067, %v1063
    %v1436 = vpack.c.b16 %v1072, %v1068
    %v1437 = vpack.c.b16 %v1073, %v1069
    %v1438 = vpack.c.b16 %v1074, %v1070
    %v1439 = vpack.c.b16 %v1075, %v1071
    %v1440 = vpack.c.b16 %v1080, %v1076
    %v1441 = vpack.c.b16 %v1081, %v1077
    %v1442 = vpack.c.b16 %v1082, %v1078
    %v1443 = vpack.c.b16 %v1083, %v1079
    %v1444 = vpack.c.b16 %v1088, %v1084
    %v1445 = vpack.c.b16 %v1089, %v1085
    %v1446 = vpack.c.b16 %v1090, %v1086
    %v1447 = vpack.c.b16 %v1091, %v1087
    %v1448 = vpack.c.b16 %v1096, %v1092
    %v1449 = vpack.c.b16 %v1097, %v1093
    %v1450 = vpack.c.b16 %v1098, %v1094
    %v1451 = vpack.c.b16 %v1099, %v1095
    %v1452 = vpack.c.b16 %v1104, %v1100
    %v1453 = vpack.c.b16 %v1105, %v1101
    %v1454 = vpack.c.b16 %v1106, %v1102
    %v1455 = vpack.c.b16 %v1107, %v1103
    %v1456 = vpack.c.b16 %v1112, %v1108
    %v1457 = vpack.c.b16 %v1113, %v1109
    %v1458 = vpack.c.b16 %v1114, %v1110
    %v1459 = vpack.c.b16 %v1115, %v1111
    %v1460 = vpack.c.b16 %v1120, %v1116
    %v1461 = vpack.c.b16 %v1121, %v1117
    %v1462 = vpack.c.b16 %v1122, %v1118
    %v1463 = vpack.c.b16 %v1123, %v1119
    %v1464 = vpack.c.b16 %v1128, %v1124
    %v1465 = vpack.c.b16 %v1129, %v1125
    %v1466 = vpack.c.b16 %v1130, %v1126
    %v1467 = vpack.c.b16 %v1131, %v1127
    %v1468 = vpack.c.b16 %v1136, %v1132
    %v1469 = vpack.c.b16 %v1137, %v1133
    %v1470 = vpack.c.b16 %v1138, %v1134
    %v1471 = vpack.c.b16 %v1139, %v1135
    %v1472 = vpack.c.b16 %v1144, %v1140
    %v1473 = vpack.c.b16 %v1145, %v1141
    %v1474 = vpack.c.b16 %v1146, %v1142
    %v1475 = vpack.c.b16 %v1147, %v1143
    %v1476 = vpack.c.b16 %v1152, %v1148
    %v1477 = vpack.c.b16 %v1153, %v1149
    %v1478 = vpack.c.b16 %v1154, %v1150
    %v1479 = vpack.c.b16 %v1155, %v1151
    %v1480 = vpack.c.b16 %v1160, %v1156
    %v1481 = vpack.c.b16 %v1161, %v1157
    %v1482 = vpack.c.b16 %v1162, %v1158
    %v1483 = vpack.c.b16 %v1163, %v1159
    %v1484 = vpack.c.b16 %v1168, %v1164
    %v1485 = vpack.c.b16 %v1169, %v1165
    %v1486 = vpack.c.b16 %v1170, %v1166
    %v1487 = vpack.c.b16 %v1171, %v1167
    %v1488 = vpack.c.b16 %v1176, %v1172
    %v1489 = vpack.c.b16 %v1177, %v1173
    %v1490 = vpack.c.b16 %v1178, %v1174
    %v1491 = vpack.c.b16 %v1179, %v1175
    %v1492 = vpack.c.b16 %v1184, %v1180
    %v1493 = vpack.c.b16 %v1185, %v1181
    %v1494 = vpack.c.b16 %v1186, %v1182
    %v1495 = vpack.c.b16 %v1187, %v1183
    %v1496 = vpack.c.b16 %v1192, %v1188
    %v1497 = vpack.c.b16 %v1193, %v1189
    %v1498 = vpack.c.b16 %v1194, %v1190
    %v1499 = vpack.c.b16 %v1195, %v1191
    %v1500 = vpack.c.b16 %v1200, %v1196
    %v1501 = vpack.c.b16 %v1201, %v1197
    %v1502 = vpack.c.b16 %v1202, %v1198
    %v1503 = vpack.c.b16 %v1203, %v1199
    %v1504 = vpack.c.b16 %v1208, %v1204
    %v1505 = vpack.c.b16 %v1209, %v1205
    %v1506 = vpack.c.b16 %v1210, %v1206
    %v1507 = vpack.c.b16 %v1211, %v1207
    %v1508 = vpack.c.b16 %v1216, %v1212
    %v1509 = vpack.c.b16 %v1217, %v1213
    %v1510 = vpack.c.b16 %v1218, %v1214
    %v1511 = vpack.c.b16 %v1219, %v1215
    %v1512 = vpack.c.b16 %v1224, %v1220
    %v1513 = vpack.c.b16 %v1225, %v1221
    %v1514 = vpack.c.b16 %v1226, %v1222
    %v1515 = vpack.c.b16 %v1227, %v1223
    %v1516 = vpack.c.b16 %v1232, %v1228
    %v1517 = vpack.c.b16 %v1233, %v1229
    %v1518 = vpack.c.b16 %v1234, %v1230
    %v1519 = vpack.c.b16 %v1235, %v1231
    %v1520 = vpack.c.b16 %v1240, %v1236
    %v1521 = vpack.c.b16 %v1241, %v1237
    %v1522 = vpack.c.b16 %v1242, %v1238
    %v1523 = vpack.c.b16 %v1243, %v1239
    %v1524 = vpack.c.b16 %v1248, %v1244
    %v1525 = vpack.c.b16 %v1249, %v1245
    %v1526 = vpack.c.b16 %v1250, %v1246
    %v1527 = vpack.c.b16 %v1251, %v1247
    %v1528 = vpack.c.b16 %v1256, %v1252
    %v1529 = vpack.c.b16 %v1257, %v1253
    %v1530 = vpack.c.b16 %v1258, %v1254
    %v1531 = vpack.c.b16 %v1259, %v1255
    %v1532 = vpack.c.b16 %v1264, %v1260
    %v1533 = vpack.c.b16 %v1265, %v1261
    %v1534 = vpack.c.b16 %v1266, %v1262
    %v1535 = vpack.c.b16 %v1267, %v1263
    %v1536 = vpack.c.b16 %v1272, %v1268
    %v1537 = vpack.c.b16 %v1273, %v1269
    %v1538 = vpack.c.b16 %v1274, %v1270
    %v1539 = vpack.c.b16 %v1275, %v1271
    %v1540 = vpack.c.b16 %v1280, %v1276
    %v1541 = vpack.c.b16 %v1281, %v1277
    %v1542 = vpack.c.b16 %v1282, %v1278
    %v1543 = vpack.c.b16 %v1283, %v1279
    %v1544 = vpack.c.b16 %v1288, %v1284
    %v1545 = vpack.c.b16 %v1289, %v1285
    %v1546 = vpack.c.b16 %v1290, %v1286
    %v1547 = vpack.c.b16 %v1291, %v1287
    %1804 = vmatprep.subr.bf16.mxu0 %v1293
    %1805 = vmatpush1.bf16.msra.mxu0 %v1292
    %1806 = vmatprep.subr.bf16.mxu0 %v1297
    %1807 = vmatpush1.bf16.msra.mxu0 %v1296
    %1808 = vmatprep.subr.bf16.mxu0 %v1301
    %1809 = vmatpush1.bf16.msra.mxu0 %v1300
    %1810 = vmatprep.subr.bf16.mxu0 %v1305
    %1811 = vmatpush1.bf16.msra.mxu0 %v1304
    %1812 = vmatprep.subr.bf16.mxu0 %v1309
    %1813 = vmatpush1.bf16.msra.mxu0 %v1308
    %1814 = vmatprep.subr.bf16.mxu0 %v1313
    %1815 = vmatpush1.bf16.msra.mxu0 %v1312
    %1816 = vmatprep.subr.bf16.mxu0 %v1317
    %1817 = vmatpush1.bf16.msra.mxu0 %v1316
    %1818 = vmatprep.subr.bf16.mxu0 %v1321
    %1819 = vmatpush1.bf16.msra.mxu0 %v1320
    %1820 = vmatprep.subr.bf16.mxu0 %v1325
    %1821 = vmatpush1.bf16.msra.mxu0 %v1324
    %1822 = vmatprep.subr.bf16.mxu0 %v1329
    %1823 = vmatpush1.bf16.msra.mxu0 %v1328
    %1824 = vmatprep.subr.bf16.mxu0 %v1333
    %1825 = vmatpush1.bf16.msra.mxu0 %v1332
    %1826 = vmatprep.subr.bf16.mxu0 %v1337
    %1827 = vmatpush1.bf16.msra.mxu0 %v1336
    %1828 = vmatprep.subr.bf16.mxu0 %v1341
    %1829 = vmatpush1.bf16.msra.mxu0 %v1340
    %1830 = vmatprep.subr.bf16.mxu0 %v1345
    %1831 = vmatpush1.bf16.msra.mxu0 %v1344
    %1832 = vmatprep.subr.bf16.mxu0 %v1349
    %1833 = vmatpush1.bf16.msra.mxu0 %v1348
    %1834 = vmatprep.subr.bf16.mxu0 %v1353
    %1835 = vmatpush1.bf16.msra.mxu0 %v1352
    %1836 = vmatprep.mubr.bf16.mxu0 %v239
    %1837 = vmatmul.mubr.bf16.gmra.mrb[0].mxu0 %v238
    %v1838 = vpop.f32.mrb[0].mxu0
    %v1839 = vadd.f32 %v507, %v1838
    %v1840 = vpop.f32.mrb[0].mxu0
    %v1841 = vadd.f32 %v511, %v1840
    %v1842 = vpop.f32.mrb[0].mxu0
    %v1843 = vadd.f32 %v507, %v1842
    %v1844 = vpop.f32.mrb[0].mxu0
    %v1845 = vadd.f32 %v511, %v1844
    %1846 = vdwg.mxu0
    %1847 = vmatprep.subr.bf16.mxu0 %v1357
    %1848 = vmatpush1.bf16.msra.mxu0 %v1356
    %1849 = vmatprep.subr.bf16.mxu0 %v1361
    %1850 = vmatpush1.bf16.msra.mxu0 %v1360
    %1851 = vmatprep.subr.bf16.mxu0 %v1365
    %1852 = vmatpush1.bf16.msra.mxu0 %v1364
    %1853 = vmatprep.subr.bf16.mxu0 %v1369
    %1854 = vmatpush1.bf16.msra.mxu0 %v1368
    %1855 = vmatprep.subr.bf16.mxu0 %v1373
    %1856 = vmatpush1.bf16.msra.mxu0 %v1372
    %1857 = vmatprep.subr.bf16.mxu0 %v1377
    %1858 = vmatpush1.bf16.msra.mxu0 %v1376
    %1859 = vmatprep.subr.bf16.mxu0 %v1381
    %1860 = vmatpush1.bf16.msra.mxu0 %v1380
    %1861 = vmatprep.subr.bf16.mxu0 %v1385
    %1862 = vmatpush1.bf16.msra.mxu0 %v1384
    %1863 = vmatprep.subr.bf16.mxu0 %v1389
    %1864 = vmatpush1.bf16.msra.mxu0 %v1388
    %1865 = vmatprep.subr.bf16.mxu0 %v1393
    %1866 = vmatpush1.bf16.msra.mxu0 %v1392
    %1867 = vmatprep.subr.bf16.mxu0 %v1397
    %1868 = vmatpush1.bf16.msra.mxu0 %v1396
    %1869 = vmatprep.subr.bf16.mxu0 %v1401
    %1870 = vmatpush1.bf16.msra.mxu0 %v1400
    %1871 = vmatprep.subr.bf16.mxu0 %v1405
    %1872 = vmatpush1.bf16.msra.mxu0 %v1404
    %1873 = vmatprep.subr.bf16.mxu0 %v1409
    %1874 = vmatpush1.bf16.msra.mxu0 %v1408
    %1875 = vmatprep.subr.bf16.mxu0 %v1413
    %1876 = vmatpush1.bf16.msra.mxu0 %v1412
    %1877 = vmatprep.subr.bf16.mxu0 %v1417
    %1878 = vmatpush1.bf16.msra.mxu0 %v1416
    %1879 = vmatprep.mubr.bf16.mxu0 %v241
    %1880 = vmatmul.mubr.bf16.gmra.mrb[0].mxu0 %v240
    %v1881 = vpop.f32.mrb[0].mxu0
    %v1882 = vadd.f32 %v1839, %v1881
    %v1883 = vpop.f32.mrb[0].mxu0
    %v1884 = vadd.f32 %v1841, %v1883
    %v1885 = vpop.f32.mrb[0].mxu0
    %v1886 = vadd.f32 %v1843, %v1885
    %v1887 = vpop.f32.mrb[0].mxu0
    %v1888 = vadd.f32 %v1845, %v1887
    %1889 = vdwg.mxu0
    %1890 = vmatprep.subr.bf16.mxu0 %v1421
    %1891 = vmatpush1.bf16.msra.mxu0 %v1420
    %1892 = vmatprep.subr.bf16.mxu0 %v1425
    %1893 = vmatpush1.bf16.msra.mxu0 %v1424
    %1894 = vmatprep.subr.bf16.mxu0 %v1429
    %1895 = vmatpush1.bf16.msra.mxu0 %v1428
    %1896 = vmatprep.subr.bf16.mxu0 %v1433
    %1897 = vmatpush1.bf16.msra.mxu0 %v1432
    %1898 = vmatprep.subr.bf16.mxu0 %v1437
    %1899 = vmatpush1.bf16.msra.mxu0 %v1436
    %1900 = vmatprep.subr.bf16.mxu0 %v1441
    %1901 = vmatpush1.bf16.msra.mxu0 %v1440
    %1902 = vmatprep.subr.bf16.mxu0 %v1445
    %1903 = vmatpush1.bf16.msra.mxu0 %v1444
    %1904 = vmatprep.subr.bf16.mxu0 %v1449
    %1905 = vmatpush1.bf16.msra.mxu0 %v1448
    %1906 = vmatprep.subr.bf16.mxu0 %v1453
    %1907 = vmatpush1.bf16.msra.mxu0 %v1452
    %1908 = vmatprep.subr.bf16.mxu0 %v1457
    %1909 = vmatpush1.bf16.msra.mxu0 %v1456
    %1910 = vmatprep.subr.bf16.mxu0 %v1461
    %1911 = vmatpush1.bf16.msra.mxu0 %v1460
    %1912 = vmatprep.subr.bf16.mxu0 %v1465
    %1913 = vmatpush1.bf16.msra.mxu0 %v1464
    %1914 = vmatprep.subr.bf16.mxu0 %v1469
    %1915 = vmatpush1.bf16.msra.mxu0 %v1468
    %1916 = vmatprep.subr.bf16.mxu0 %v1473
    %1917 = vmatpush1.bf16.msra.mxu0 %v1472
    %1918 = vmatprep.subr.bf16.mxu0 %v1477
    %1919 = vmatpush1.bf16.msra.mxu0 %v1476
    %1920 = vmatprep.subr.bf16.mxu0 %v1481
    %1921 = vmatpush1.bf16.msra.mxu0 %v1480
    %1922 = vmatprep.mubr.bf16.mxu0 %v243
    %1923 = vmatmul.mubr.bf16.gmra.mrb[0].mxu0 %v242
    %v1924 = vpop.f32.mrb[0].mxu0
    %v1925 = vadd.f32 %v1882, %v1924
    %v1926 = vpop.f32.mrb[0].mxu0
    %v1927 = vadd.f32 %v1884, %v1926
    %v1928 = vpop.f32.mrb[0].mxu0
    %v1929 = vadd.f32 %v1886, %v1928
    %v1930 = vpop.f32.mrb[0].mxu0
    %v1931 = vadd.f32 %v1888, %v1930
    %1932 = vdwg.mxu0
    %1933 = vmatprep.subr.bf16.mxu0 %v1485
    %1934 = vmatpush1.bf16.msra.mxu0 %v1484
    %1935 = vmatprep.subr.bf16.mxu0 %v1489
    %1936 = vmatpush1.bf16.msra.mxu0 %v1488
    %1937 = vmatprep.subr.bf16.mxu0 %v1493
    %1938 = vmatpush1.bf16.msra.mxu0 %v1492
    %1939 = vmatprep.subr.bf16.mxu0 %v1497
    %1940 = vmatpush1.bf16.msra.mxu0 %v1496
    %1941 = vmatprep.subr.bf16.mxu0 %v1501
    %1942 = vmatpush1.bf16.msra.mxu0 %v1500
    %1943 = vmatprep.subr.bf16.mxu0 %v1505
    %1944 = vmatpush1.bf16.msra.mxu0 %v1504
    %1945 = vmatprep.subr.bf16.mxu0 %v1509
    %1946 = vmatpush1.bf16.msra.mxu0 %v1508
    %1947 = vmatprep.subr.bf16.mxu0 %v1513
    %1948 = vmatpush1.bf16.msra.mxu0 %v1512
    %1949 = vmatprep.subr.bf16.mxu0 %v1517
    %1950 = vmatpush1.bf16.msra.mxu0 %v1516
    %1951 = vmatprep.subr.bf16.mxu0 %v1521
    %1952 = vmatpush1.bf16.msra.mxu0 %v1520
    %1953 = vmatprep.subr.bf16.mxu0 %v1525
    %1954 = vmatpush1.bf16.msra.mxu0 %v1524
    %1955 = vmatprep.subr.bf16.mxu0 %v1529
    %1956 = vmatpush1.bf16.msra.mxu0 %v1528
    %1957 = vmatprep.subr.bf16.mxu0 %v1533
    %1958 = vmatpush1.bf16.msra.mxu0 %v1532
    %1959 = vmatprep.subr.bf16.mxu0 %v1537
    %1960 = vmatpush1.bf16.msra.mxu0 %v1536
    %1961 = vmatprep.subr.bf16.mxu0 %v1541
    %1962 = vmatpush1.bf16.msra.mxu0 %v1540
    %1963 = vmatprep.subr.bf16.mxu0 %v1545
    %1964 = vmatpush1.bf16.msra.mxu0 %v1544
    %1965 = vmatprep.mubr.bf16.mxu0 %v245
    %1966 = vmatmul.mubr.bf16.gmra.mrb[0].mxu0 %v244
    %v1967 = vpop.f32.mrb[0].mxu0
    %v1968 = vadd.f32 %v1925, %v1967
    %v1969 = vpop.f32.mrb[0].mxu0
    %v1970 = vadd.f32 %v1927, %v1969
    %v1971 = vpop.f32.mrb[0].mxu0
    %v1972 = vadd.f32 %v1929, %v1971
    %v1973 = vpop.f32.mrb[0].mxu0
    %v1974 = vadd.f32 %v1931, %v1973
    %1975 = vdwg.mxu0
    %1976 = vmatprep.subr.bf16.mxu0 %v1295
    %1977 = vmatpush1.bf16.msra.mxu0 %v1294
    %1978 = vmatprep.subr.bf16.mxu0 %v1299
    %1979 = vmatpush1.bf16.msra.mxu0 %v1298
    %1980 = vmatprep.subr.bf16.mxu0 %v1303
    %1981 = vmatpush1.bf16.msra.mxu0 %v1302
    %1982 = vmatprep.subr.bf16.mxu0 %v1307
    %1983 = vmatpush1.bf16.msra.mxu0 %v1306
    %1984 = vmatprep.subr.bf16.mxu0 %v1311
    %1985 = vmatpush1.bf16.msra.mxu0 %v1310
    %1986 = vmatprep.subr.bf16.mxu0 %v1315
    %1987 = vmatpush1.bf16.msra.mxu0 %v1314
    %1988 = vmatprep.subr.bf16.mxu0 %v1319
    %1989 = vmatpush1.bf16.msra.mxu0 %v1318
    %1990 = vmatprep.subr.bf16.mxu0 %v1323
    %1991 = vmatpush1.bf16.msra.mxu0 %v1322
    %1992 = vmatprep.subr.bf16.mxu0 %v1327
    %1993 = vmatpush1.bf16.msra.mxu0 %v1326
    %1994 = vmatprep.subr.bf16.mxu0 %v1331
    %1995 = vmatpush1.bf16.msra.mxu0 %v1330
    %1996 = vmatprep.subr.bf16.mxu0 %v1335
    %1997 = vmatpush1.bf16.msra.mxu0 %v1334
    %1998 = vmatprep.subr.bf16.mxu0 %v1339
    %1999 = vmatpush1.bf16.msra.mxu0 %v1338
    %2000 = vmatprep.subr.bf16.mxu0 %v1343
    %2001 = vmatpush1.bf16.msra.mxu0 %v1342
    %2002 = vmatprep.subr.bf16.mxu0 %v1347
    %2003 = vmatpush1.bf16.msra.mxu0 %v1346
    %2004 = vmatprep.subr.bf16.mxu0 %v1351
    %2005 = vmatpush1.bf16.msra.mxu0 %v1350
    %2006 = vmatprep.subr.bf16.mxu0 %v1355
    %2007 = vmatpush1.bf16.msra.mxu0 %v1354
    %2008 = vmatprep.mubr.bf16.mxu0 %v239
    %2009 = vmatmul.mubr.bf16.gmra.mrb[0].mxu0 %v238
    %v2010 = vpop.f32.mrb[0].mxu0
    %v2011 = vadd.f32 %v515, %v2010
    %v2012 = vpop.f32.mrb[0].mxu0
    %v2013 = vadd.f32 %v519, %v2012
    %v2014 = vpop.f32.mrb[0].mxu0
    %v2015 = vadd.f32 %v515, %v2014
    %v2016 = vpop.f32.mrb[0].mxu0
    %v2017 = vadd.f32 %v519, %v2016
    %2018 = vdwg.mxu0
    %2019 = vmatprep.subr.bf16.mxu0 %v1359
    %2020 = vmatpush1.bf16.msra.mxu0 %v1358
    %2021 = vmatprep.subr.bf16.mxu0 %v1363
    %2022 = vmatpush1.bf16.msra.mxu0 %v1362
    %2023 = vmatprep.subr.bf16.mxu0 %v1367
    %2024 = vmatpush1.bf16.msra.mxu0 %v1366
    %2025 = vmatprep.subr.bf16.mxu0 %v1371
    %2026 = vmatpush1.bf16.msra.mxu0 %v1370
    %2027 = vmatprep.subr.bf16.mxu0 %v1375
    %2028 = vmatpush1.bf16.msra.mxu0 %v1374
    %2029 = vmatprep.subr.bf16.mxu0 %v1379
    %2030 = vmatpush1.bf16.msra.mxu0 %v1378
    %2031 = vmatprep.subr.bf16.mxu0 %v1383
    %2032 = vmatpush1.bf16.msra.mxu0 %v1382
    %2033 = vmatprep.subr.bf16.mxu0 %v1387
    %2034 = vmatpush1.bf16.msra.mxu0 %v1386
    %2035 = vmatprep.subr.bf16.mxu0 %v1391
    %2036 = vmatpush1.bf16.msra.mxu0 %v1390
    %2037 = vmatprep.subr.bf16.mxu0 %v1395
    %2038 = vmatpush1.bf16.msra.mxu0 %v1394
    %2039 = vmatprep.subr.bf16.mxu0 %v1399
    %2040 = vmatpush1.bf16.msra.mxu0 %v1398
    %2041 = vmatprep.subr.bf16.mxu0 %v1403
    %2042 = vmatpush1.bf16.msra.mxu0 %v1402
    %2043 = vmatprep.subr.bf16.mxu0 %v1407
    %2044 = vmatpush1.bf16.msra.mxu0 %v1406
    %2045 = vmatprep.subr.bf16.mxu0 %v1411
    %2046 = vmatpush1.bf16.msra.mxu0 %v1410
    %2047 = vmatprep.subr.bf16.mxu0 %v1415
    %2048 = vmatpush1.bf16.msra.mxu0 %v1414
    %2049 = vmatprep.subr.bf16.mxu0 %v1419
    %2050 = vmatpush1.bf16.msra.mxu0 %v1418
    %2051 = vmatprep.mubr.bf16.mxu0 %v241
    %2052 = vmatmul.mubr.bf16.gmra.mrb[0].mxu0 %v240
    %v2053 = vpop.f32.mrb[0].mxu0
    %v2054 = vadd.f32 %v2011, %v2053
    %v2055 = vpop.f32.mrb[0].mxu0
    %v2056 = vadd.f32 %v2013, %v2055
    %v2057 = vpop.f32.mrb[0].mxu0
    %v2058 = vadd.f32 %v2015, %v2057
    %v2059 = vpop.f32.mrb[0].mxu0
    %v2060 = vadd.f32 %v2017, %v2059
    %2061 = vdwg.mxu0
    %2062 = vmatprep.subr.bf16.mxu0 %v1423
    %2063 = vmatpush1.bf16.msra.mxu0 %v1422
    %2064 = vmatprep.subr.bf16.mxu0 %v1427
    %2065 = vmatpush1.bf16.msra.mxu0 %v1426
    %2066 = vmatprep.subr.bf16.mxu0 %v1431
    %2067 = vmatpush1.bf16.msra.mxu0 %v1430
    %2068 = vmatprep.subr.bf16.mxu0 %v1435
    %2069 = vmatpush1.bf16.msra.mxu0 %v1434
    %2070 = vmatprep.subr.bf16.mxu0 %v1439
    %2071 = vmatpush1.bf16.msra.mxu0 %v1438
    %2072 = vmatprep.subr.bf16.mxu0 %v1443
    %2073 = vmatpush1.bf16.msra.mxu0 %v1442
    %2074 = vmatprep.subr.bf16.mxu0 %v1447
    %2075 = vmatpush1.bf16.msra.mxu0 %v1446
    %2076 = vmatprep.subr.bf16.mxu0 %v1451
    %2077 = vmatpush1.bf16.msra.mxu0 %v1450
    %2078 = vmatprep.subr.bf16.mxu0 %v1455
    %2079 = vmatpush1.bf16.msra.mxu0 %v1454
    %2080 = vmatprep.subr.bf16.mxu0 %v1459
    %2081 = vmatpush1.bf16.msra.mxu0 %v1458
    %2082 = vmatprep.subr.bf16.mxu0 %v1463
    %2083 = vmatpush1.bf16.msra.mxu0 %v1462
    %2084 = vmatprep.subr.bf16.mxu0 %v1467
    %2085 = vmatpush1.bf16.msra.mxu0 %v1466
    %2086 = vmatprep.subr.bf16.mxu0 %v1471
    %2087 = vmatpush1.bf16.msra.mxu0 %v1470
    %2088 = vmatprep.subr.bf16.mxu0 %v1475
    %2089 = vmatpush1.bf16.msra.mxu0 %v1474
    %2090 = vmatprep.subr.bf16.mxu0 %v1479
    %2091 = vmatpush1.bf16.msra.mxu0 %v1478
    %2092 = vmatprep.subr.bf16.mxu0 %v1483
    %2093 = vmatpush1.bf16.msra.mxu0 %v1482
    %2094 = vmatprep.mubr.bf16.mxu0 %v243
    %2095 = vmatmul.mubr.bf16.gmra.mrb[0].mxu0 %v242
    %v2096 = vpop.f32.mrb[0].mxu0
    %v2097 = vadd.f32 %v2054, %v2096
    %v2098 = vpop.f32.mrb[0].mxu0
    %v2099 = vadd.f32 %v2056, %v2098
    %v2100 = vpop.f32.mrb[0].mxu0
    %v2101 = vadd.f32 %v2058, %v2100
    %v2102 = vpop.f32.mrb[0].mxu0
    %v2103 = vadd.f32 %v2060, %v2102
    %2104 = vdwg.mxu0
    %2105 = vmatprep.subr.bf16.mxu0 %v1487
    %2106 = vmatpush1.bf16.msra.mxu0 %v1486
    %2107 = vmatprep.subr.bf16.mxu0 %v1491
    %2108 = vmatpush1.bf16.msra.mxu0 %v1490
    %2109 = vmatprep.subr.bf16.mxu0 %v1495
    %2110 = vmatpush1.bf16.msra.mxu0 %v1494
    %2111 = vmatprep.subr.bf16.mxu0 %v1499
    %2112 = vmatpush1.bf16.msra.mxu0 %v1498
    %2113 = vmatprep.subr.bf16.mxu0 %v1503
    %2114 = vmatpush1.bf16.msra.mxu0 %v1502
    %2115 = vmatprep.subr.bf16.mxu0 %v1507
    %2116 = vmatpush1.bf16.msra.mxu0 %v1506
    %2117 = vmatprep.subr.bf16.mxu0 %v1511
    %2118 = vmatpush1.bf16.msra.mxu0 %v1510
    %2119 = vmatprep.subr.bf16.mxu0 %v1515
    %2120 = vmatpush1.bf16.msra.mxu0 %v1514
    %2121 = vmatprep.subr.bf16.mxu0 %v1519
    %2122 = vmatpush1.bf16.msra.mxu0 %v1518
    %2123 = vmatprep.subr.bf16.mxu0 %v1523
    %2124 = vmatpush1.bf16.msra.mxu0 %v1522
    %2125 = vmatprep.subr.bf16.mxu0 %v1527
    %2126 = vmatpush1.bf16.msra.mxu0 %v1526
    %2127 = vmatprep.subr.bf16.mxu0 %v1531
    %2128 = vmatpush1.bf16.msra.mxu0 %v1530
    %2129 = vmatprep.subr.bf16.mxu0 %v1535
    %2130 = vmatpush1.bf16.msra.mxu0 %v1534
    %2131 = vmatprep.subr.bf16.mxu0 %v1539
    %2132 = vmatpush1.bf16.msra.mxu0 %v1538
    %2133 = vmatprep.subr.bf16.mxu0 %v1543
    %2134 = vmatpush1.bf16.msra.mxu0 %v1542
    %2135 = vmatprep.subr.bf16.mxu0 %v1547
    %2136 = vmatpush1.bf16.msra.mxu0 %v1546
    %2137 = vmatprep.mubr.bf16.mxu0 %v245
    %2138 = vmatmul.mubr.bf16.gmra.mrb[0].mxu0 %v244
    %v2139 = vpop.f32.mrb[0].mxu0
    %v2140 = vadd.f32 %v2097, %v2139
    %v2141 = vpop.f32.mrb[0].mxu0
    %v2142 = vadd.f32 %v2099, %v2141
    %v2143 = vpop.f32.mrb[0].mxu0
    %v2144 = vadd.f32 %v2101, %v2143
    %v2145 = vpop.f32.mrb[0].mxu0
    %v2146 = vadd.f32 %v2103, %v2145
    %2147 = vdwg.mxu0
    %v2148 = vmax.f32 %v1968, 0.0
    %v2149 = vmax.f32 %v1970, 0.0
    %v2150 = vmax.f32 %v2140, 0.0
    %v2151 = vmax.f32 %v2142, 0.0
    %v2152 = vmax.f32 %v1972, 0.0
    %v2153 = vmax.f32 %v1974, 0.0
    %v2154 = vmax.f32 %v2144, 0.0
    %v2155 = vmax.f32 %v2146, 0.0
    %v2156 = vpack.c.bf16 %v2152, %v2148
    %v2157 = vpack.c.bf16 %v2153, %v2149
    %v2158 = vpack.c.bf16 %v2154, %v2150
    %v2159 = vpack.c.bf16 %v2155, %v2151
    %v2160 = vld [vmem:[%s3] sm:$0xff]
    %v2161 = vld [vmem:[%s3 + $0x8] sm:$0xff]
    %v2162 = vld [vmem:[%s3 + $0x10] sm:$0xff]
    %v2163 = vld [vmem:[%s3 + $0x18] sm:$0xff]
    %v2164 = vld [vmem:[%s3 + $0x20] sm:$0xff]
    %v2165 = vld [vmem:[%s3 + $0x28] sm:$0xff]
    %v2166 = vld [vmem:[%s3 + $0x30] sm:$0xff]
    %v2167 = vld [vmem:[%s3 + $0x38] sm:$0xff]
    %v2168 = vld [vmem:[%s3 + $0x40] sm:$0xff]
    %v2169 = vld [vmem:[%s3 + $0x48] sm:$0xff]
    %v2170 = vld [vmem:[%s3 + $0x50] sm:$0xff]
    %v2171 = vld [vmem:[%s3 + $0x58] sm:$0xff]
    %v2172 = vld [vmem:[%s3 + $0x60] sm:$0xff]
    %v2173 = vld [vmem:[%s3 + $0x68] sm:$0xff]
    %v2174 = vld [vmem:[%s3 + $0x70] sm:$0xff]
    %v2175 = vld [vmem:[%s3 + $0x78] sm:$0xff]
    %v2176 = vld [vmem:[%s3 + $0x80] sm:$0xff]
    %v2177 = vld [vmem:[%s3 + $0x88] sm:$0xff]
    %v2178 = vld [vmem:[%s3 + $0x90] sm:$0xff]
    %v2179 = vld [vmem:[%s3 + $0x98] sm:$0xff]
    %v2180 = vld [vmem:[%s3 + $0xa0] sm:$0xff]
    %v2181 = vld [vmem:[%s3 + $0xa8] sm:$0xff]
    %v2182 = vld [vmem:[%s3 + $0xb0] sm:$0xff]
    %v2183 = vld [vmem:[%s3 + $0xb8] sm:$0xff]
    %v2184 = vld [vmem:[%s3 + $0xc0] sm:$0xff]
    %v2185 = vld [vmem:[%s3 + $0xc8] sm:$0xff]
    %v2186 = vld [vmem:[%s3 + $0xd0] sm:$0xff]
    %v2187 = vld [vmem:[%s3 + $0xd8] sm:$0xff]
    %v2188 = vld [vmem:[%s3 + $0xe0] sm:$0xff]
    %v2189 = vld [vmem:[%s3 + $0xe8] sm:$0xff]
    %v2190 = vld [vmem:[%s3 + $0xf0] sm:$0xff]
    %v2191 = vld [vmem:[%s3 + $0xf8] sm:$0xff]
    %v2192 = vld [vmem:[%s3 + $0x100] sm:$0xff]
    %v2193 = vld [vmem:[%s3 + $0x108] sm:$0xff]
    %v2194 = vld [vmem:[%s3 + $0x110] sm:$0xff]
    %v2195 = vld [vmem:[%s3 + $0x118] sm:$0xff]
    %v2196 = vld [vmem:[%s3 + $0x120] sm:$0xff]
    %v2197 = vld [vmem:[%s3 + $0x128] sm:$0xff]
    %v2198 = vld [vmem:[%s3 + $0x130] sm:$0xff]
    %v2199 = vld [vmem:[%s3 + $0x138] sm:$0xff]
    %v2200 = vld [vmem:[%s3 + $0x140] sm:$0xff]
    %v2201 = vld [vmem:[%s3 + $0x148] sm:$0xff]
    %v2202 = vld [vmem:[%s3 + $0x150] sm:$0xff]
    %v2203 = vld [vmem:[%s3 + $0x158] sm:$0xff]
    %v2204 = vld [vmem:[%s3 + $0x160] sm:$0xff]
    %v2205 = vld [vmem:[%s3 + $0x168] sm:$0xff]
    %v2206 = vld [vmem:[%s3 + $0x170] sm:$0xff]
    %v2207 = vld [vmem:[%s3 + $0x178] sm:$0xff]
    %v2208 = vld [vmem:[%s3 + $0x180] sm:$0xff]
    %v2209 = vld [vmem:[%s3 + $0x188] sm:$0xff]
    %v2210 = vld [vmem:[%s3 + $0x190] sm:$0xff]
    %v2211 = vld [vmem:[%s3 + $0x198] sm:$0xff]
    %v2212 = vld [vmem:[%s3 + $0x1a0] sm:$0xff]
    %v2213 = vld [vmem:[%s3 + $0x1a8] sm:$0xff]
    %v2214 = vld [vmem:[%s3 + $0x1b0] sm:$0xff]
    %v2215 = vld [vmem:[%s3 + $0x1b8] sm:$0xff]
    %v2216 = vld [vmem:[%s3 + $0x1c0] sm:$0xff]
    %v2217 = vld [vmem:[%s3 + $0x1c8] sm:$0xff]
    %v2218 = vld [vmem:[%s3 + $0x1d0] sm:$0xff]
    %v2219 = vld [vmem:[%s3 + $0x1d8] sm:$0xff]
    %v2220 = vld [vmem:[%s3 + $0x1e0] sm:$0xff]
    %v2221 = vld [vmem:[%s3 + $0x1e8] sm:$0xff]
    %v2222 = vld [vmem:[%s3 + $0x1f0] sm:$0xff]
    %v2223 = vld [vmem:[%s3 + $0x1f8] sm:$0xff]
    %v2224 = vld [vmem:[%s3 + $0x200] sm:$0xff]
    %v2225 = vld [vmem:[%s3 + $0x208] sm:$0xff]
    %v2226 = vld [vmem:[%s3 + $0x210] sm:$0xff]
    %v2227 = vld [vmem:[%s3 + $0x218] sm:$0xff]
    %v2228 = vld [vmem:[%s3 + $0x220] sm:$0xff]
    %v2229 = vld [vmem:[%s3 + $0x228] sm:$0xff]
    %v2230 = vld [vmem:[%s3 + $0x230] sm:$0xff]
    %v2231 = vld [vmem:[%s3 + $0x238] sm:$0xff]
    %v2232 = vld [vmem:[%s3 + $0x240] sm:$0xff]
    %v2233 = vld [vmem:[%s3 + $0x248] sm:$0xff]
    %v2234 = vld [vmem:[%s3 + $0x250] sm:$0xff]
    %v2235 = vld [vmem:[%s3 + $0x258] sm:$0xff]
    %v2236 = vld [vmem:[%s3 + $0x260] sm:$0xff]
    %v2237 = vld [vmem:[%s3 + $0x268] sm:$0xff]
    %v2238 = vld [vmem:[%s3 + $0x270] sm:$0xff]
    %v2239 = vld [vmem:[%s3 + $0x278] sm:$0xff]
    %v2240 = vld [vmem:[%s3 + $0x280] sm:$0xff]
    %v2241 = vld [vmem:[%s3 + $0x288] sm:$0xff]
    %v2242 = vld [vmem:[%s3 + $0x290] sm:$0xff]
    %v2243 = vld [vmem:[%s3 + $0x298] sm:$0xff]
    %v2244 = vld [vmem:[%s3 + $0x2a0] sm:$0xff]
    %v2245 = vld [vmem:[%s3 + $0x2a8] sm:$0xff]
    %v2246 = vld [vmem:[%s3 + $0x2b0] sm:$0xff]
    %v2247 = vld [vmem:[%s3 + $0x2b8] sm:$0xff]
    %v2248 = vld [vmem:[%s3 + $0x2c0] sm:$0xff]
    %v2249 = vld [vmem:[%s3 + $0x2c8] sm:$0xff]
    %v2250 = vld [vmem:[%s3 + $0x2d0] sm:$0xff]
    %v2251 = vld [vmem:[%s3 + $0x2d8] sm:$0xff]
    %v2252 = vld [vmem:[%s3 + $0x2e0] sm:$0xff]
    %v2253 = vld [vmem:[%s3 + $0x2e8] sm:$0xff]
    %v2254 = vld [vmem:[%s3 + $0x2f0] sm:$0xff]
    %v2255 = vld [vmem:[%s3 + $0x2f8] sm:$0xff]
    %v2256 = vld [vmem:[%s3 + $0x300] sm:$0xff]
    %v2257 = vld [vmem:[%s3 + $0x308] sm:$0xff]
    %v2258 = vld [vmem:[%s3 + $0x310] sm:$0xff]
    %v2259 = vld [vmem:[%s3 + $0x318] sm:$0xff]
    %v2260 = vld [vmem:[%s3 + $0x320] sm:$0xff]
    %v2261 = vld [vmem:[%s3 + $0x328] sm:$0xff]
    %v2262 = vld [vmem:[%s3 + $0x330] sm:$0xff]
    %v2263 = vld [vmem:[%s3 + $0x338] sm:$0xff]
    %v2264 = vld [vmem:[%s3 + $0x340] sm:$0xff]
    %v2265 = vld [vmem:[%s3 + $0x348] sm:$0xff]
    %v2266 = vld [vmem:[%s3 + $0x350] sm:$0xff]
    %v2267 = vld [vmem:[%s3 + $0x358] sm:$0xff]
    %v2268 = vld [vmem:[%s3 + $0x360] sm:$0xff]
    %v2269 = vld [vmem:[%s3 + $0x368] sm:$0xff]
    %v2270 = vld [vmem:[%s3 + $0x370] sm:$0xff]
    %v2271 = vld [vmem:[%s3 + $0x378] sm:$0xff]
    %v2272 = vld [vmem:[%s3 + $0x380] sm:$0xff]
    %v2273 = vld [vmem:[%s3 + $0x388] sm:$0xff]
    %v2274 = vld [vmem:[%s3 + $0x390] sm:$0xff]
    %v2275 = vld [vmem:[%s3 + $0x398] sm:$0xff]
    %v2276 = vld [vmem:[%s3 + $0x3a0] sm:$0xff]
    %v2277 = vld [vmem:[%s3 + $0x3a8] sm:$0xff]
    %v2278 = vld [vmem:[%s3 + $0x3b0] sm:$0xff]
    %v2279 = vld [vmem:[%s3 + $0x3b8] sm:$0xff]
    %v2280 = vld [vmem:[%s3 + $0x3c0] sm:$0xff]
    %v2281 = vld [vmem:[%s3 + $0x3c8] sm:$0xff]
    %v2282 = vld [vmem:[%s3 + $0x3d0] sm:$0xff]
    %v2283 = vld [vmem:[%s3 + $0x3d8] sm:$0xff]
    %v2284 = vld [vmem:[%s3 + $0x3e0] sm:$0xff]
    %v2285 = vld [vmem:[%s3 + $0x3e8] sm:$0xff]
    %v2286 = vld [vmem:[%s3 + $0x3f0] sm:$0xff]
    %v2287 = vld [vmem:[%s3 + $0x3f8] sm:$0xff]
    %v2288 = vld [vmem:[%s4] sm:$0xf]
    %v2290 = vlaneseq
    %v2291 = vshrl.u32 %v2290, 7
    %v2292 = vsub.s32 0, %v2291
    %v2293 = vrot.slane %v2288, %v2292
    %v2294 = vlaneseq
    %v2295 = vshrl.u32 %v2294, 7
    %v2296 = vsub.s32 1, %v2295
    %v2297 = vrot.slane %v2288, %v2296
    %v2298 = vlaneseq
    %v2299 = vshrl.u32 %v2298, 7
    %v2300 = vsub.s32 2, %v2299
    %v2301 = vrot.slane %v2288, %v2300
    %v2302 = vlaneseq
    %v2303 = vshrl.u32 %v2302, 7
    %v2304 = vsub.s32 3, %v2303
    %v2305 = vrot.slane %v2288, %v2304
    %v2438 = vunpack.c.l.b16 %v2160
    %v2439 = vunpack.c.h.b16 %v2160
    %v2440 = vunpack.c.l.b16 %v2161
    %v2441 = vunpack.c.h.b16 %v2161
    %v2442 = vunpack.c.l.b16 %v2162
    %v2443 = vunpack.c.h.b16 %v2162
    %v2444 = vunpack.c.l.b16 %v2163
    %v2445 = vunpack.c.h.b16 %v2163
    %v2446 = vunpack.c.l.b16 %v2164
    %v2447 = vunpack.c.h.b16 %v2164
    %v2448 = vunpack.c.l.b16 %v2165
    %v2449 = vunpack.c.h.b16 %v2165
    %v2450 = vunpack.c.l.b16 %v2166
    %v2451 = vunpack.c.h.b16 %v2166
    %v2452 = vunpack.c.l.b16 %v2167
    %v2453 = vunpack.c.h.b16 %v2167
    %v2454 = vunpack.c.l.b16 %v2168
    %v2455 = vunpack.c.h.b16 %v2168
    %v2456 = vunpack.c.l.b16 %v2169
    %v2457 = vunpack.c.h.b16 %v2169
    %v2458 = vunpack.c.l.b16 %v2170
    %v2459 = vunpack.c.h.b16 %v2170
    %v2460 = vunpack.c.l.b16 %v2171
    %v2461 = vunpack.c.h.b16 %v2171
    %v2462 = vunpack.c.l.b16 %v2172
    %v2463 = vunpack.c.h.b16 %v2172
    %v2464 = vunpack.c.l.b16 %v2173
    %v2465 = vunpack.c.h.b16 %v2173
    %v2466 = vunpack.c.l.b16 %v2174
    %v2467 = vunpack.c.h.b16 %v2174
    %v2468 = vunpack.c.l.b16 %v2175
    %v2469 = vunpack.c.h.b16 %v2175
    %v2470 = vunpack.c.l.b16 %v2176
    %v2471 = vunpack.c.h.b16 %v2176
    %v2472 = vunpack.c.l.b16 %v2177
    %v2473 = vunpack.c.h.b16 %v2177
    %v2474 = vunpack.c.l.b16 %v2178
    %v2475 = vunpack.c.h.b16 %v2178
    %v2476 = vunpack.c.l.b16 %v2179
    %v2477 = vunpack.c.h.b16 %v2179
    %v2478 = vunpack.c.l.b16 %v2180
    %v2479 = vunpack.c.h.b16 %v2180
    %v2480 = vunpack.c.l.b16 %v2181
    %v2481 = vunpack.c.h.b16 %v2181
    %v2482 = vunpack.c.l.b16 %v2182
    %v2483 = vunpack.c.h.b16 %v2182
    %v2484 = vunpack.c.l.b16 %v2183
    %v2485 = vunpack.c.h.b16 %v2183
    %v2486 = vunpack.c.l.b16 %v2184
    %v2487 = vunpack.c.h.b16 %v2184
    %v2488 = vunpack.c.l.b16 %v2185
    %v2489 = vunpack.c.h.b16 %v2185
    %v2490 = vunpack.c.l.b16 %v2186
    %v2491 = vunpack.c.h.b16 %v2186
    %v2492 = vunpack.c.l.b16 %v2187
    %v2493 = vunpack.c.h.b16 %v2187
    %v2494 = vunpack.c.l.b16 %v2188
    %v2495 = vunpack.c.h.b16 %v2188
    %v2496 = vunpack.c.l.b16 %v2189
    %v2497 = vunpack.c.h.b16 %v2189
    %v2498 = vunpack.c.l.b16 %v2190
    %v2499 = vunpack.c.h.b16 %v2190
    %v2500 = vunpack.c.l.b16 %v2191
    %v2501 = vunpack.c.h.b16 %v2191
    %v2502 = vunpack.c.l.b16 %v2192
    %v2503 = vunpack.c.h.b16 %v2192
    %v2504 = vunpack.c.l.b16 %v2193
    %v2505 = vunpack.c.h.b16 %v2193
    %v2506 = vunpack.c.l.b16 %v2194
    %v2507 = vunpack.c.h.b16 %v2194
    %v2508 = vunpack.c.l.b16 %v2195
    %v2509 = vunpack.c.h.b16 %v2195
    %v2510 = vunpack.c.l.b16 %v2196
    %v2511 = vunpack.c.h.b16 %v2196
    %v2512 = vunpack.c.l.b16 %v2197
    %v2513 = vunpack.c.h.b16 %v2197
    %v2514 = vunpack.c.l.b16 %v2198
    %v2515 = vunpack.c.h.b16 %v2198
    %v2516 = vunpack.c.l.b16 %v2199
    %v2517 = vunpack.c.h.b16 %v2199
    %v2518 = vunpack.c.l.b16 %v2200
    %v2519 = vunpack.c.h.b16 %v2200
    %v2520 = vunpack.c.l.b16 %v2201
    %v2521 = vunpack.c.h.b16 %v2201
    %v2522 = vunpack.c.l.b16 %v2202
    %v2523 = vunpack.c.h.b16 %v2202
    %v2524 = vunpack.c.l.b16 %v2203
    %v2525 = vunpack.c.h.b16 %v2203
    %v2526 = vunpack.c.l.b16 %v2204
    %v2527 = vunpack.c.h.b16 %v2204
    %v2528 = vunpack.c.l.b16 %v2205
    %v2529 = vunpack.c.h.b16 %v2205
    %v2530 = vunpack.c.l.b16 %v2206
    %v2531 = vunpack.c.h.b16 %v2206
    %v2532 = vunpack.c.l.b16 %v2207
    %v2533 = vunpack.c.h.b16 %v2207
    %v2534 = vunpack.c.l.b16 %v2208
    %v2535 = vunpack.c.h.b16 %v2208
    %v2536 = vunpack.c.l.b16 %v2209
    %v2537 = vunpack.c.h.b16 %v2209
    %v2538 = vunpack.c.l.b16 %v2210
    %v2539 = vunpack.c.h.b16 %v2210
    %v2540 = vunpack.c.l.b16 %v2211
    %v2541 = vunpack.c.h.b16 %v2211
    %v2542 = vunpack.c.l.b16 %v2212
    %v2543 = vunpack.c.h.b16 %v2212
    %v2544 = vunpack.c.l.b16 %v2213
    %v2545 = vunpack.c.h.b16 %v2213
    %v2546 = vunpack.c.l.b16 %v2214
    %v2547 = vunpack.c.h.b16 %v2214
    %v2548 = vunpack.c.l.b16 %v2215
    %v2549 = vunpack.c.h.b16 %v2215
    %v2550 = vunpack.c.l.b16 %v2216
    %v2551 = vunpack.c.h.b16 %v2216
    %v2552 = vunpack.c.l.b16 %v2217
    %v2553 = vunpack.c.h.b16 %v2217
    %v2554 = vunpack.c.l.b16 %v2218
    %v2555 = vunpack.c.h.b16 %v2218
    %v2556 = vunpack.c.l.b16 %v2219
    %v2557 = vunpack.c.h.b16 %v2219
    %v2558 = vunpack.c.l.b16 %v2220
    %v2559 = vunpack.c.h.b16 %v2220
    %v2560 = vunpack.c.l.b16 %v2221
    %v2561 = vunpack.c.h.b16 %v2221
    %v2562 = vunpack.c.l.b16 %v2222
    %v2563 = vunpack.c.h.b16 %v2222
    %v2564 = vunpack.c.l.b16 %v2223
    %v2565 = vunpack.c.h.b16 %v2223
    %v2566 = vunpack.c.l.b16 %v2224
    %v2567 = vunpack.c.h.b16 %v2224
    %v2568 = vunpack.c.l.b16 %v2225
    %v2569 = vunpack.c.h.b16 %v2225
    %v2570 = vunpack.c.l.b16 %v2226
    %v2571 = vunpack.c.h.b16 %v2226
    %v2572 = vunpack.c.l.b16 %v2227
    %v2573 = vunpack.c.h.b16 %v2227
    %v2574 = vunpack.c.l.b16 %v2228
    %v2575 = vunpack.c.h.b16 %v2228
    %v2576 = vunpack.c.l.b16 %v2229
    %v2577 = vunpack.c.h.b16 %v2229
    %v2578 = vunpack.c.l.b16 %v2230
    %v2579 = vunpack.c.h.b16 %v2230
    %v2580 = vunpack.c.l.b16 %v2231
    %v2581 = vunpack.c.h.b16 %v2231
    %v2582 = vunpack.c.l.b16 %v2232
    %v2583 = vunpack.c.h.b16 %v2232
    %v2584 = vunpack.c.l.b16 %v2233
    %v2585 = vunpack.c.h.b16 %v2233
    %v2586 = vunpack.c.l.b16 %v2234
    %v2587 = vunpack.c.h.b16 %v2234
    %v2588 = vunpack.c.l.b16 %v2235
    %v2589 = vunpack.c.h.b16 %v2235
    %v2590 = vunpack.c.l.b16 %v2236
    %v2591 = vunpack.c.h.b16 %v2236
    %v2592 = vunpack.c.l.b16 %v2237
    %v2593 = vunpack.c.h.b16 %v2237
    %v2594 = vunpack.c.l.b16 %v2238
    %v2595 = vunpack.c.h.b16 %v2238
    %v2596 = vunpack.c.l.b16 %v2239
    %v2597 = vunpack.c.h.b16 %v2239
    %v2598 = vunpack.c.l.b16 %v2240
    %v2599 = vunpack.c.h.b16 %v2240
    %v2600 = vunpack.c.l.b16 %v2241
    %v2601 = vunpack.c.h.b16 %v2241
    %v2602 = vunpack.c.l.b16 %v2242
    %v2603 = vunpack.c.h.b16 %v2242
    %v2604 = vunpack.c.l.b16 %v2243
    %v2605 = vunpack.c.h.b16 %v2243
    %v2606 = vunpack.c.l.b16 %v2244
    %v2607 = vunpack.c.h.b16 %v2244
    %v2608 = vunpack.c.l.b16 %v2245
    %v2609 = vunpack.c.h.b16 %v2245
    %v2610 = vunpack.c.l.b16 %v2246
    %v2611 = vunpack.c.h.b16 %v2246
    %v2612 = vunpack.c.l.b16 %v2247
    %v2613 = vunpack.c.h.b16 %v2247
    %v2614 = vunpack.c.l.b16 %v2248
    %v2615 = vunpack.c.h.b16 %v2248
    %v2616 = vunpack.c.l.b16 %v2249
    %v2617 = vunpack.c.h.b16 %v2249
    %v2618 = vunpack.c.l.b16 %v2250
    %v2619 = vunpack.c.h.b16 %v2250
    %v2620 = vunpack.c.l.b16 %v2251
    %v2621 = vunpack.c.h.b16 %v2251
    %v2622 = vunpack.c.l.b16 %v2252
    %v2623 = vunpack.c.h.b16 %v2252
    %v2624 = vunpack.c.l.b16 %v2253
    %v2625 = vunpack.c.h.b16 %v2253
    %v2626 = vunpack.c.l.b16 %v2254
    %v2627 = vunpack.c.h.b16 %v2254
    %v2628 = vunpack.c.l.b16 %v2255
    %v2629 = vunpack.c.h.b16 %v2255
    %v2630 = vunpack.c.l.b16 %v2256
    %v2631 = vunpack.c.h.b16 %v2256
    %v2632 = vunpack.c.l.b16 %v2257
    %v2633 = vunpack.c.h.b16 %v2257
    %v2634 = vunpack.c.l.b16 %v2258
    %v2635 = vunpack.c.h.b16 %v2258
    %v2636 = vunpack.c.l.b16 %v2259
    %v2637 = vunpack.c.h.b16 %v2259
    %v2638 = vunpack.c.l.b16 %v2260
    %v2639 = vunpack.c.h.b16 %v2260
    %v2640 = vunpack.c.l.b16 %v2261
    %v2641 = vunpack.c.h.b16 %v2261
    %v2642 = vunpack.c.l.b16 %v2262
    %v2643 = vunpack.c.h.b16 %v2262
    %v2644 = vunpack.c.l.b16 %v2263
    %v2645 = vunpack.c.h.b16 %v2263
    %v2646 = vunpack.c.l.b16 %v2264
    %v2647 = vunpack.c.h.b16 %v2264
    %v2648 = vunpack.c.l.b16 %v2265
    %v2649 = vunpack.c.h.b16 %v2265
    %v2650 = vunpack.c.l.b16 %v2266
    %v2651 = vunpack.c.h.b16 %v2266
    %v2652 = vunpack.c.l.b16 %v2267
    %v2653 = vunpack.c.h.b16 %v2267
    %v2654 = vunpack.c.l.b16 %v2268
    %v2655 = vunpack.c.h.b16 %v2268
    %v2656 = vunpack.c.l.b16 %v2269
    %v2657 = vunpack.c.h.b16 %v2269
    %v2658 = vunpack.c.l.b16 %v2270
    %v2659 = vunpack.c.h.b16 %v2270
    %v2660 = vunpack.c.l.b16 %v2271
    %v2661 = vunpack.c.h.b16 %v2271
    %v2662 = vunpack.c.l.b16 %v2272
    %v2663 = vunpack.c.h.b16 %v2272
    %v2664 = vunpack.c.l.b16 %v2273
    %v2665 = vunpack.c.h.b16 %v2273
    %v2666 = vunpack.c.l.b16 %v2274
    %v2667 = vunpack.c.h.b16 %v2274
    %v2668 = vunpack.c.l.b16 %v2275
    %v2669 = vunpack.c.h.b16 %v2275
    %v2670 = vunpack.c.l.b16 %v2276
    %v2671 = vunpack.c.h.b16 %v2276
    %v2672 = vunpack.c.l.b16 %v2277
    %v2673 = vunpack.c.h.b16 %v2277
    %v2674 = vunpack.c.l.b16 %v2278
    %v2675 = vunpack.c.h.b16 %v2278
    %v2676 = vunpack.c.l.b16 %v2279
    %v2677 = vunpack.c.h.b16 %v2279
    %v2678 = vunpack.c.l.b16 %v2280
    %v2679 = vunpack.c.h.b16 %v2280
    %v2680 = vunpack.c.l.b16 %v2281
    %v2681 = vunpack.c.h.b16 %v2281
    %v2682 = vunpack.c.l.b16 %v2282
    %v2683 = vunpack.c.h.b16 %v2282
    %v2684 = vunpack.c.l.b16 %v2283
    %v2685 = vunpack.c.h.b16 %v2283
    %v2686 = vunpack.c.l.b16 %v2284
    %v2687 = vunpack.c.h.b16 %v2284
    %v2688 = vunpack.c.l.b16 %v2285
    %v2689 = vunpack.c.h.b16 %v2285
    %v2690 = vunpack.c.l.b16 %v2286
    %v2691 = vunpack.c.h.b16 %v2286
    %v2692 = vunpack.c.l.b16 %v2287
    %v2693 = vunpack.c.h.b16 %v2287
    %v2694 = vpack.c.b16 %v2442, %v2438
    %v2695 = vpack.c.b16 %v2443, %v2439
    %v2696 = vpack.c.b16 %v2444, %v2440
    %v2697 = vpack.c.b16 %v2445, %v2441
    %v2698 = vpack.c.b16 %v2450, %v2446
    %v2699 = vpack.c.b16 %v2451, %v2447
    %v2700 = vpack.c.b16 %v2452, %v2448
    %v2701 = vpack.c.b16 %v2453, %v2449
    %v2702 = vpack.c.b16 %v2458, %v2454
    %v2703 = vpack.c.b16 %v2459, %v2455
    %v2704 = vpack.c.b16 %v2460, %v2456
    %v2705 = vpack.c.b16 %v2461, %v2457
    %v2706 = vpack.c.b16 %v2466, %v2462
    %v2707 = vpack.c.b16 %v2467, %v2463
    %v2708 = vpack.c.b16 %v2468, %v2464
    %v2709 = vpack.c.b16 %v2469, %v2465
    %v2710 = vpack.c.b16 %v2474, %v2470
    %v2711 = vpack.c.b16 %v2475, %v2471
    %v2712 = vpack.c.b16 %v2476, %v2472
    %v2713 = vpack.c.b16 %v2477, %v2473
    %v2714 = vpack.c.b16 %v2482, %v2478
    %v2715 = vpack.c.b16 %v2483, %v2479
    %v2716 = vpack.c.b16 %v2484, %v2480
    %v2717 = vpack.c.b16 %v2485, %v2481
    %v2718 = vpack.c.b16 %v2490, %v2486
    %v2719 = vpack.c.b16 %v2491, %v2487
    %v2720 = vpack.c.b16 %v2492, %v2488
    %v2721 = vpack.c.b16 %v2493, %v2489
    %v2722 = vpack.c.b16 %v2498, %v2494
    %v2723 = vpack.c.b16 %v2499, %v2495
    %v2724 = vpack.c.b16 %v2500, %v2496
    %v2725 = vpack.c.b16 %v2501, %v2497
    %v2726 = vpack.c.b16 %v2506, %v2502
    %v2727 = vpack.c.b16 %v2507, %v2503
    %v2728 = vpack.c.b16 %v2508, %v2504
    %v2729 = vpack.c.b16 %v2509, %v2505
    %v2730 = vpack.c.b16 %v2514, %v2510
    %v2731 = vpack.c.b16 %v2515, %v2511
    %v2732 = vpack.c.b16 %v2516, %v2512
    %v2733 = vpack.c.b16 %v2517, %v2513
    %v2734 = vpack.c.b16 %v2522, %v2518
    %v2735 = vpack.c.b16 %v2523, %v2519
    %v2736 = vpack.c.b16 %v2524, %v2520
    %v2737 = vpack.c.b16 %v2525, %v2521
    %v2738 = vpack.c.b16 %v2530, %v2526
    %v2739 = vpack.c.b16 %v2531, %v2527
    %v2740 = vpack.c.b16 %v2532, %v2528
    %v2741 = vpack.c.b16 %v2533, %v2529
    %v2742 = vpack.c.b16 %v2538, %v2534
    %v2743 = vpack.c.b16 %v2539, %v2535
    %v2744 = vpack.c.b16 %v2540, %v2536
    %v2745 = vpack.c.b16 %v2541, %v2537
    %v2746 = vpack.c.b16 %v2546, %v2542
    %v2747 = vpack.c.b16 %v2547, %v2543
    %v2748 = vpack.c.b16 %v2548, %v2544
    %v2749 = vpack.c.b16 %v2549, %v2545
    %v2750 = vpack.c.b16 %v2554, %v2550
    %v2751 = vpack.c.b16 %v2555, %v2551
    %v2752 = vpack.c.b16 %v2556, %v2552
    %v2753 = vpack.c.b16 %v2557, %v2553
    %v2754 = vpack.c.b16 %v2562, %v2558
    %v2755 = vpack.c.b16 %v2563, %v2559
    %v2756 = vpack.c.b16 %v2564, %v2560
    %v2757 = vpack.c.b16 %v2565, %v2561
    %v2758 = vpack.c.b16 %v2570, %v2566
    %v2759 = vpack.c.b16 %v2571, %v2567
    %v2760 = vpack.c.b16 %v2572, %v2568
    %v2761 = vpack.c.b16 %v2573, %v2569
    %v2762 = vpack.c.b16 %v2578, %v2574
    %v2763 = vpack.c.b16 %v2579, %v2575
    %v2764 = vpack.c.b16 %v2580, %v2576
    %v2765 = vpack.c.b16 %v2581, %v2577
    %v2766 = vpack.c.b16 %v2586, %v2582
    %v2767 = vpack.c.b16 %v2587, %v2583
    %v2768 = vpack.c.b16 %v2588, %v2584
    %v2769 = vpack.c.b16 %v2589, %v2585
    %v2770 = vpack.c.b16 %v2594, %v2590
    %v2771 = vpack.c.b16 %v2595, %v2591
    %v2772 = vpack.c.b16 %v2596, %v2592
    %v2773 = vpack.c.b16 %v2597, %v2593
    %v2774 = vpack.c.b16 %v2602, %v2598
    %v2775 = vpack.c.b16 %v2603, %v2599
    %v2776 = vpack.c.b16 %v2604, %v2600
    %v2777 = vpack.c.b16 %v2605, %v2601
    %v2778 = vpack.c.b16 %v2610, %v2606
    %v2779 = vpack.c.b16 %v2611, %v2607
    %v2780 = vpack.c.b16 %v2612, %v2608
    %v2781 = vpack.c.b16 %v2613, %v2609
    %v2782 = vpack.c.b16 %v2618, %v2614
    %v2783 = vpack.c.b16 %v2619, %v2615
    %v2784 = vpack.c.b16 %v2620, %v2616
    %v2785 = vpack.c.b16 %v2621, %v2617
    %v2786 = vpack.c.b16 %v2626, %v2622
    %v2787 = vpack.c.b16 %v2627, %v2623
    %v2788 = vpack.c.b16 %v2628, %v2624
    %v2789 = vpack.c.b16 %v2629, %v2625
    %v2790 = vpack.c.b16 %v2634, %v2630
    %v2791 = vpack.c.b16 %v2635, %v2631
    %v2792 = vpack.c.b16 %v2636, %v2632
    %v2793 = vpack.c.b16 %v2637, %v2633
    %v2794 = vpack.c.b16 %v2642, %v2638
    %v2795 = vpack.c.b16 %v2643, %v2639
    %v2796 = vpack.c.b16 %v2644, %v2640
    %v2797 = vpack.c.b16 %v2645, %v2641
    %v2798 = vpack.c.b16 %v2650, %v2646
    %v2799 = vpack.c.b16 %v2651, %v2647
    %v2800 = vpack.c.b16 %v2652, %v2648
    %v2801 = vpack.c.b16 %v2653, %v2649
    %v2802 = vpack.c.b16 %v2658, %v2654
    %v2803 = vpack.c.b16 %v2659, %v2655
    %v2804 = vpack.c.b16 %v2660, %v2656
    %v2805 = vpack.c.b16 %v2661, %v2657
    %v2806 = vpack.c.b16 %v2666, %v2662
    %v2807 = vpack.c.b16 %v2667, %v2663
    %v2808 = vpack.c.b16 %v2668, %v2664
    %v2809 = vpack.c.b16 %v2669, %v2665
    %v2810 = vpack.c.b16 %v2674, %v2670
    %v2811 = vpack.c.b16 %v2675, %v2671
    %v2812 = vpack.c.b16 %v2676, %v2672
    %v2813 = vpack.c.b16 %v2677, %v2673
    %v2814 = vpack.c.b16 %v2682, %v2678
    %v2815 = vpack.c.b16 %v2683, %v2679
    %v2816 = vpack.c.b16 %v2684, %v2680
    %v2817 = vpack.c.b16 %v2685, %v2681
    %v2818 = vpack.c.b16 %v2690, %v2686
    %v2819 = vpack.c.b16 %v2691, %v2687
    %v2820 = vpack.c.b16 %v2692, %v2688
    %v2821 = vpack.c.b16 %v2693, %v2689
    %2950 = vmatprep.subr.bf16.mxu0 %v2695
    %2951 = vmatpush1.bf16.msra.mxu0 %v2694
    %2952 = vmatprep.subr.bf16.mxu0 %v2699
    %2953 = vmatpush1.bf16.msra.mxu0 %v2698
    %2954 = vmatprep.subr.bf16.mxu0 %v2703
    %2955 = vmatpush1.bf16.msra.mxu0 %v2702
    %2956 = vmatprep.subr.bf16.mxu0 %v2707
    %2957 = vmatpush1.bf16.msra.mxu0 %v2706
    %2958 = vmatprep.subr.bf16.mxu0 %v2711
    %2959 = vmatpush1.bf16.msra.mxu0 %v2710
    %2960 = vmatprep.subr.bf16.mxu0 %v2715
    %2961 = vmatpush1.bf16.msra.mxu0 %v2714
    %2962 = vmatprep.subr.bf16.mxu0 %v2719
    %2963 = vmatpush1.bf16.msra.mxu0 %v2718
    %2964 = vmatprep.subr.bf16.mxu0 %v2723
    %2965 = vmatpush1.bf16.msra.mxu0 %v2722
    %2966 = vmatprep.subr.bf16.mxu0 %v2727
    %2967 = vmatpush1.bf16.msra.mxu0 %v2726
    %2968 = vmatprep.subr.bf16.mxu0 %v2731
    %2969 = vmatpush1.bf16.msra.mxu0 %v2730
    %2970 = vmatprep.subr.bf16.mxu0 %v2735
    %2971 = vmatpush1.bf16.msra.mxu0 %v2734
    %2972 = vmatprep.subr.bf16.mxu0 %v2739
    %2973 = vmatpush1.bf16.msra.mxu0 %v2738
    %2974 = vmatprep.subr.bf16.mxu0 %v2743
    %2975 = vmatpush1.bf16.msra.mxu0 %v2742
    %2976 = vmatprep.subr.bf16.mxu0 %v2747
    %2977 = vmatpush1.bf16.msra.mxu0 %v2746
    %2978 = vmatprep.subr.bf16.mxu0 %v2751
    %2979 = vmatpush1.bf16.msra.mxu0 %v2750
    %2980 = vmatprep.subr.bf16.mxu0 %v2755
    %2981 = vmatpush1.bf16.msra.mxu0 %v2754
    %2982 = vmatprep.mubr.bf16.mxu0 %v2157
    %2983 = vmatmul.mubr.bf16.gmra.mrb[0].mxu0 %v2156
    %v2984 = vpop.f32.mrb[0].mxu0
    %v2985 = vadd.f32 %v2293, %v2984
    %v2986 = vpop.f32.mrb[0].mxu0
    %v2987 = vadd.f32 %v2297, %v2986
    %v2988 = vpop.f32.mrb[0].mxu0
    %v2989 = vadd.f32 %v2293, %v2988
    %v2990 = vpop.f32.mrb[0].mxu0
    %v2991 = vadd.f32 %v2297, %v2990
    %2992 = vdwg.mxu0
    %2993 = vmatprep.subr.bf16.mxu0 %v2759
    %2994 = vmatpush1.bf16.msra.mxu0 %v2758
    %2995 = vmatprep.subr.bf16.mxu0 %v2763
    %2996 = vmatpush1.bf16.msra.mxu0 %v2762
    %2997 = vmatprep.subr.bf16.mxu0 %v2767
    %2998 = vmatpush1.bf16.msra.mxu0 %v2766
    %2999 = vmatprep.subr.bf16.mxu0 %v2771
    %3000 = vmatpush1.bf16.msra.mxu0 %v2770
    %3001 = vmatprep.subr.bf16.mxu0 %v2775
    %3002 = vmatpush1.bf16.msra.mxu0 %v2774
    %3003 = vmatprep.subr.bf16.mxu0 %v2779
    %3004 = vmatpush1.bf16.msra.mxu0 %v2778
    %3005 = vmatprep.subr.bf16.mxu0 %v2783
    %3006 = vmatpush1.bf16.msra.mxu0 %v2782
    %3007 = vmatprep.subr.bf16.mxu0 %v2787
    %3008 = vmatpush1.bf16.msra.mxu0 %v2786
    %3009 = vmatprep.subr.bf16.mxu0 %v2791
    %3010 = vmatpush1.bf16.msra.mxu0 %v2790
    %3011 = vmatprep.subr.bf16.mxu0 %v2795
    %3012 = vmatpush1.bf16.msra.mxu0 %v2794
    %3013 = vmatprep.subr.bf16.mxu0 %v2799
    %3014 = vmatpush1.bf16.msra.mxu0 %v2798
    %3015 = vmatprep.subr.bf16.mxu0 %v2803
    %3016 = vmatpush1.bf16.msra.mxu0 %v2802
    %3017 = vmatprep.subr.bf16.mxu0 %v2807
    %3018 = vmatpush1.bf16.msra.mxu0 %v2806
    %3019 = vmatprep.subr.bf16.mxu0 %v2811
    %3020 = vmatpush1.bf16.msra.mxu0 %v2810
    %3021 = vmatprep.subr.bf16.mxu0 %v2815
    %3022 = vmatpush1.bf16.msra.mxu0 %v2814
    %3023 = vmatprep.subr.bf16.mxu0 %v2819
    %3024 = vmatpush1.bf16.msra.mxu0 %v2818
    %3025 = vmatprep.mubr.bf16.mxu0 %v2159
    %3026 = vmatmul.mubr.bf16.gmra.mrb[0].mxu0 %v2158
    %v3027 = vpop.f32.mrb[0].mxu0
    %v3028 = vadd.f32 %v2985, %v3027
    %v3029 = vpop.f32.mrb[0].mxu0
    %v3030 = vadd.f32 %v2987, %v3029
    %v3031 = vpop.f32.mrb[0].mxu0
    %v3032 = vadd.f32 %v2989, %v3031
    %v3033 = vpop.f32.mrb[0].mxu0
    %v3034 = vadd.f32 %v2991, %v3033
    %3035 = vdwg.mxu0
    %3036 = vmatprep.subr.bf16.mxu0 %v2697
    %3037 = vmatpush1.bf16.msra.mxu0 %v2696
    %3038 = vmatprep.subr.bf16.mxu0 %v2701
    %3039 = vmatpush1.bf16.msra.mxu0 %v2700
    %3040 = vmatprep.subr.bf16.mxu0 %v2705
    %3041 = vmatpush1.bf16.msra.mxu0 %v2704
    %3042 = vmatprep.subr.bf16.mxu0 %v2709
    %3043 = vmatpush1.bf16.msra.mxu0 %v2708
    %3044 = vmatprep.subr.bf16.mxu0 %v2713
    %3045 = vmatpush1.bf16.msra.mxu0 %v2712
    %3046 = vmatprep.subr.bf16.mxu0 %v2717
    %3047 = vmatpush1.bf16.msra.mxu0 %v2716
    %3048 = vmatprep.subr.bf16.mxu0 %v2721
    %3049 = vmatpush1.bf16.msra.mxu0 %v2720
    %3050 = vmatprep.subr.bf16.mxu0 %v2725
    %3051 = vmatpush1.bf16.msra.mxu0 %v2724
    %3052 = vmatprep.subr.bf16.mxu0 %v2729
    %3053 = vmatpush1.bf16.msra.mxu0 %v2728
    %3054 = vmatprep.subr.bf16.mxu0 %v2733
    %3055 = vmatpush1.bf16.msra.mxu0 %v2732
    %3056 = vmatprep.subr.bf16.mxu0 %v2737
    %3057 = vmatpush1.bf16.msra.mxu0 %v2736
    %3058 = vmatprep.subr.bf16.mxu0 %v2741
    %3059 = vmatpush1.bf16.msra.mxu0 %v2740
    %3060 = vmatprep.subr.bf16.mxu0 %v2745
    %3061 = vmatpush1.bf16.msra.mxu0 %v2744
    %3062 = vmatprep.subr.bf16.mxu0 %v2749
    %3063 = vmatpush1.bf16.msra.mxu0 %v2748
    %3064 = vmatprep.subr.bf16.mxu0 %v2753
    %3065 = vmatpush1.bf16.msra.mxu0 %v2752
    %3066 = vmatprep.subr.bf16.mxu0 %v2757
    %3067 = vmatpush1.bf16.msra.mxu0 %v2756
    %3068 = vmatprep.mubr.bf16.mxu0 %v2157
    %3069 = vmatmul.mubr.bf16.gmra.mrb[0].mxu0 %v2156
    %v3070 = vpop.f32.mrb[0].mxu0
    %v3071 = vadd.f32 %v2301, %v3070
    %v3072 = vpop.f32.mrb[0].mxu0
    %v3073 = vadd.f32 %v2305, %v3072
    %v3074 = vpop.f32.mrb[0].mxu0
    %v3075 = vadd.f32 %v2301, %v3074
    %v3076 = vpop.f32.mrb[0].mxu0
    %v3077 = vadd.f32 %v2305, %v3076
    %3078 = vdwg.mxu0
    %3079 = vmatprep.subr.bf16.mxu0 %v2761
    %3080 = vmatpush1.bf16.msra.mxu0 %v2760
    %3081 = vmatprep.subr.bf16.mxu0 %v2765
    %3082 = vmatpush1.bf16.msra.mxu0 %v2764
    %3083 = vmatprep.subr.bf16.mxu0 %v2769
    %3084 = vmatpush1.bf16.msra.mxu0 %v2768
    %3085 = vmatprep.subr.bf16.mxu0 %v2773
    %3086 = vmatpush1.bf16.msra.mxu0 %v2772
    %3087 = vmatprep.subr.bf16.mxu0 %v2777
    %3088 = vmatpush1.bf16.msra.mxu0 %v2776
    %3089 = vmatprep.subr.bf16.mxu0 %v2781
    %3090 = vmatpush1.bf16.msra.mxu0 %v2780
    %3091 = vmatprep.subr.bf16.mxu0 %v2785
    %3092 = vmatpush1.bf16.msra.mxu0 %v2784
    %3093 = vmatprep.subr.bf16.mxu0 %v2789
    %3094 = vmatpush1.bf16.msra.mxu0 %v2788
    %3095 = vmatprep.subr.bf16.mxu0 %v2793
    %3096 = vmatpush1.bf16.msra.mxu0 %v2792
    %3097 = vmatprep.subr.bf16.mxu0 %v2797
    %3098 = vmatpush1.bf16.msra.mxu0 %v2796
    %3099 = vmatprep.subr.bf16.mxu0 %v2801
    %3100 = vmatpush1.bf16.msra.mxu0 %v2800
    %3101 = vmatprep.subr.bf16.mxu0 %v2805
    %3102 = vmatpush1.bf16.msra.mxu0 %v2804
    %3103 = vmatprep.subr.bf16.mxu0 %v2809
    %3104 = vmatpush1.bf16.msra.mxu0 %v2808
    %3105 = vmatprep.subr.bf16.mxu0 %v2813
    %3106 = vmatpush1.bf16.msra.mxu0 %v2812
    %3107 = vmatprep.subr.bf16.mxu0 %v2817
    %3108 = vmatpush1.bf16.msra.mxu0 %v2816
    %3109 = vmatprep.subr.bf16.mxu0 %v2821
    %3110 = vmatpush1.bf16.msra.mxu0 %v2820
    %3111 = vmatprep.mubr.bf16.mxu0 %v2159
    %3112 = vmatmul.mubr.bf16.gmra.mrb[0].mxu0 %v2158
    %v3113 = vpop.f32.mrb[0].mxu0
    %v3114 = vadd.f32 %v3071, %v3113
    %v3115 = vpop.f32.mrb[0].mxu0
    %v3116 = vadd.f32 %v3073, %v3115
    %v3117 = vpop.f32.mrb[0].mxu0
    %v3118 = vadd.f32 %v3075, %v3117
    %v3119 = vpop.f32.mrb[0].mxu0
    %v3120 = vadd.f32 %v3077, %v3119
    %3121 = vdwg.mxu0
    %v3122 = vmax.f32 %v3028, 0.0
    %v3123 = vmax.f32 %v3030, 0.0
    %v3124 = vmax.f32 %v3114, 0.0
    %v3125 = vmax.f32 %v3116, 0.0
    %v3126 = vmax.f32 %v3032, 0.0
    %v3127 = vmax.f32 %v3034, 0.0
    %v3128 = vmax.f32 %v3118, 0.0
    %v3129 = vmax.f32 %v3120, 0.0
    %v3130 = vpack.c.bf16 %v3126, %v3122
    %v3131 = vpack.c.bf16 %v3127, %v3123
    %v3132 = vpack.c.bf16 %v3128, %v3124
    %v3133 = vpack.c.bf16 %v3129, %v3125
    %v3134 = vld [vmem:[%s5] sm:$0xff]
    %v3135 = vld [vmem:[%s5 + $0x8] sm:$0xff]
    %v3136 = vld [vmem:[%s5 + $0x10] sm:$0xff]
    %v3137 = vld [vmem:[%s5 + $0x18] sm:$0xff]
    %v3138 = vld [vmem:[%s5 + $0x20] sm:$0xff]
    %v3139 = vld [vmem:[%s5 + $0x28] sm:$0xff]
    %v3140 = vld [vmem:[%s5 + $0x30] sm:$0xff]
    %v3141 = vld [vmem:[%s5 + $0x38] sm:$0xff]
    %v3142 = vld [vmem:[%s5 + $0x40] sm:$0xff]
    %v3143 = vld [vmem:[%s5 + $0x48] sm:$0xff]
    %v3144 = vld [vmem:[%s5 + $0x50] sm:$0xff]
    %v3145 = vld [vmem:[%s5 + $0x58] sm:$0xff]
    %v3146 = vld [vmem:[%s5 + $0x60] sm:$0xff]
    %v3147 = vld [vmem:[%s5 + $0x68] sm:$0xff]
    %v3148 = vld [vmem:[%s5 + $0x70] sm:$0xff]
    %v3149 = vld [vmem:[%s5 + $0x78] sm:$0xff]
    %v3150 = vld [vmem:[%s5 + $0x80] sm:$0xff]
    %v3151 = vld [vmem:[%s5 + $0x88] sm:$0xff]
    %v3152 = vld [vmem:[%s5 + $0x90] sm:$0xff]
    %v3153 = vld [vmem:[%s5 + $0x98] sm:$0xff]
    %v3154 = vld [vmem:[%s5 + $0xa0] sm:$0xff]
    %v3155 = vld [vmem:[%s5 + $0xa8] sm:$0xff]
    %v3156 = vld [vmem:[%s5 + $0xb0] sm:$0xff]
    %v3157 = vld [vmem:[%s5 + $0xb8] sm:$0xff]
    %v3158 = vld [vmem:[%s5 + $0xc0] sm:$0xff]
    %v3159 = vld [vmem:[%s5 + $0xc8] sm:$0xff]
    %v3160 = vld [vmem:[%s5 + $0xd0] sm:$0xff]
    %v3161 = vld [vmem:[%s5 + $0xd8] sm:$0xff]
    %v3162 = vld [vmem:[%s5 + $0xe0] sm:$0xff]
    %v3163 = vld [vmem:[%s5 + $0xe8] sm:$0xff]
    %v3164 = vld [vmem:[%s5 + $0xf0] sm:$0xff]
    %v3165 = vld [vmem:[%s5 + $0xf8] sm:$0xff]
    %v3166 = vld [vmem:[%s5 + $0x100] sm:$0xff]
    %v3167 = vld [vmem:[%s5 + $0x108] sm:$0xff]
    %v3168 = vld [vmem:[%s5 + $0x110] sm:$0xff]
    %v3169 = vld [vmem:[%s5 + $0x118] sm:$0xff]
    %v3170 = vld [vmem:[%s5 + $0x120] sm:$0xff]
    %v3171 = vld [vmem:[%s5 + $0x128] sm:$0xff]
    %v3172 = vld [vmem:[%s5 + $0x130] sm:$0xff]
    %v3173 = vld [vmem:[%s5 + $0x138] sm:$0xff]
    %v3174 = vld [vmem:[%s5 + $0x140] sm:$0xff]
    %v3175 = vld [vmem:[%s5 + $0x148] sm:$0xff]
    %v3176 = vld [vmem:[%s5 + $0x150] sm:$0xff]
    %v3177 = vld [vmem:[%s5 + $0x158] sm:$0xff]
    %v3178 = vld [vmem:[%s5 + $0x160] sm:$0xff]
    %v3179 = vld [vmem:[%s5 + $0x168] sm:$0xff]
    %v3180 = vld [vmem:[%s5 + $0x170] sm:$0xff]
    %v3181 = vld [vmem:[%s5 + $0x178] sm:$0xff]
    %v3182 = vld [vmem:[%s5 + $0x180] sm:$0xff]
    %v3183 = vld [vmem:[%s5 + $0x188] sm:$0xff]
    %v3184 = vld [vmem:[%s5 + $0x190] sm:$0xff]
    %v3185 = vld [vmem:[%s5 + $0x198] sm:$0xff]
    %v3186 = vld [vmem:[%s5 + $0x1a0] sm:$0xff]
    %v3187 = vld [vmem:[%s5 + $0x1a8] sm:$0xff]
    %v3188 = vld [vmem:[%s5 + $0x1b0] sm:$0xff]
    %v3189 = vld [vmem:[%s5 + $0x1b8] sm:$0xff]
    %v3190 = vld [vmem:[%s5 + $0x1c0] sm:$0xff]
    %v3191 = vld [vmem:[%s5 + $0x1c8] sm:$0xff]
    %v3192 = vld [vmem:[%s5 + $0x1d0] sm:$0xff]
    %v3193 = vld [vmem:[%s5 + $0x1d8] sm:$0xff]
    %v3194 = vld [vmem:[%s5 + $0x1e0] sm:$0xff]
    %v3195 = vld [vmem:[%s5 + $0x1e8] sm:$0xff]
    %v3196 = vld [vmem:[%s5 + $0x1f0] sm:$0xff]
    %v3197 = vld [vmem:[%s5 + $0x1f8] sm:$0xff]
    %v3198 = vld [vmem:[%s5 + $0x200] sm:$0xff]
    %v3199 = vld [vmem:[%s5 + $0x208] sm:$0xff]
    %v3200 = vld [vmem:[%s5 + $0x210] sm:$0xff]
    %v3201 = vld [vmem:[%s5 + $0x218] sm:$0xff]
    %v3202 = vld [vmem:[%s5 + $0x220] sm:$0xff]
    %v3203 = vld [vmem:[%s5 + $0x228] sm:$0xff]
    %v3204 = vld [vmem:[%s5 + $0x230] sm:$0xff]
    %v3205 = vld [vmem:[%s5 + $0x238] sm:$0xff]
    %v3206 = vld [vmem:[%s5 + $0x240] sm:$0xff]
    %v3207 = vld [vmem:[%s5 + $0x248] sm:$0xff]
    %v3208 = vld [vmem:[%s5 + $0x250] sm:$0xff]
    %v3209 = vld [vmem:[%s5 + $0x258] sm:$0xff]
    %v3210 = vld [vmem:[%s5 + $0x260] sm:$0xff]
    %v3211 = vld [vmem:[%s5 + $0x268] sm:$0xff]
    %v3212 = vld [vmem:[%s5 + $0x270] sm:$0xff]
    %v3213 = vld [vmem:[%s5 + $0x278] sm:$0xff]
    %v3214 = vld [vmem:[%s5 + $0x280] sm:$0xff]
    %v3215 = vld [vmem:[%s5 + $0x288] sm:$0xff]
    %v3216 = vld [vmem:[%s5 + $0x290] sm:$0xff]
    %v3217 = vld [vmem:[%s5 + $0x298] sm:$0xff]
    %v3218 = vld [vmem:[%s5 + $0x2a0] sm:$0xff]
    %v3219 = vld [vmem:[%s5 + $0x2a8] sm:$0xff]
    %v3220 = vld [vmem:[%s5 + $0x2b0] sm:$0xff]
    %v3221 = vld [vmem:[%s5 + $0x2b8] sm:$0xff]
    %v3222 = vld [vmem:[%s5 + $0x2c0] sm:$0xff]
    %v3223 = vld [vmem:[%s5 + $0x2c8] sm:$0xff]
    %v3224 = vld [vmem:[%s5 + $0x2d0] sm:$0xff]
    %v3225 = vld [vmem:[%s5 + $0x2d8] sm:$0xff]
    %v3226 = vld [vmem:[%s5 + $0x2e0] sm:$0xff]
    %v3227 = vld [vmem:[%s5 + $0x2e8] sm:$0xff]
    %v3228 = vld [vmem:[%s5 + $0x2f0] sm:$0xff]
    %v3229 = vld [vmem:[%s5 + $0x2f8] sm:$0xff]
    %v3230 = vld [vmem:[%s5 + $0x300] sm:$0xff]
    %v3231 = vld [vmem:[%s5 + $0x308] sm:$0xff]
    %v3232 = vld [vmem:[%s5 + $0x310] sm:$0xff]
    %v3233 = vld [vmem:[%s5 + $0x318] sm:$0xff]
    %v3234 = vld [vmem:[%s5 + $0x320] sm:$0xff]
    %v3235 = vld [vmem:[%s5 + $0x328] sm:$0xff]
    %v3236 = vld [vmem:[%s5 + $0x330] sm:$0xff]
    %v3237 = vld [vmem:[%s5 + $0x338] sm:$0xff]
    %v3238 = vld [vmem:[%s5 + $0x340] sm:$0xff]
    %v3239 = vld [vmem:[%s5 + $0x348] sm:$0xff]
    %v3240 = vld [vmem:[%s5 + $0x350] sm:$0xff]
    %v3241 = vld [vmem:[%s5 + $0x358] sm:$0xff]
    %v3242 = vld [vmem:[%s5 + $0x360] sm:$0xff]
    %v3243 = vld [vmem:[%s5 + $0x368] sm:$0xff]
    %v3244 = vld [vmem:[%s5 + $0x370] sm:$0xff]
    %v3245 = vld [vmem:[%s5 + $0x378] sm:$0xff]
    %v3246 = vld [vmem:[%s5 + $0x380] sm:$0xff]
    %v3247 = vld [vmem:[%s5 + $0x388] sm:$0xff]
    %v3248 = vld [vmem:[%s5 + $0x390] sm:$0xff]
    %v3249 = vld [vmem:[%s5 + $0x398] sm:$0xff]
    %v3250 = vld [vmem:[%s5 + $0x3a0] sm:$0xff]
    %v3251 = vld [vmem:[%s5 + $0x3a8] sm:$0xff]
    %v3252 = vld [vmem:[%s5 + $0x3b0] sm:$0xff]
    %v3253 = vld [vmem:[%s5 + $0x3b8] sm:$0xff]
    %v3254 = vld [vmem:[%s5 + $0x3c0] sm:$0xff]
    %v3255 = vld [vmem:[%s5 + $0x3c8] sm:$0xff]
    %v3256 = vld [vmem:[%s5 + $0x3d0] sm:$0xff]
    %v3257 = vld [vmem:[%s5 + $0x3d8] sm:$0xff]
    %v3258 = vld [vmem:[%s5 + $0x3e0] sm:$0xff]
    %v3259 = vld [vmem:[%s5 + $0x3e8] sm:$0xff]
    %v3260 = vld [vmem:[%s5 + $0x3f0] sm:$0xff]
    %v3261 = vld [vmem:[%s5 + $0x3f8] sm:$0xff]
    %v3262 = vld [vmem:[%s6] sm:$0xf]
    %v3264 = vlaneseq
    %v3265 = vshrl.u32 %v3264, 7
    %v3266 = vsub.s32 0, %v3265
    %v3267 = vrot.slane %v3262, %v3266
    %v3268 = vlaneseq
    %v3269 = vshrl.u32 %v3268, 7
    %v3270 = vsub.s32 1, %v3269
    %v3271 = vrot.slane %v3262, %v3270
    %v3272 = vlaneseq
    %v3273 = vshrl.u32 %v3272, 7
    %v3274 = vsub.s32 2, %v3273
    %v3275 = vrot.slane %v3262, %v3274
    %v3276 = vlaneseq
    %v3277 = vshrl.u32 %v3276, 7
    %v3278 = vsub.s32 3, %v3277
    %v3279 = vrot.slane %v3262, %v3278
    %v3412 = vunpack.c.l.b16 %v3134
    %v3413 = vunpack.c.h.b16 %v3134
    %v3414 = vunpack.c.l.b16 %v3135
    %v3415 = vunpack.c.h.b16 %v3135
    %v3416 = vunpack.c.l.b16 %v3136
    %v3417 = vunpack.c.h.b16 %v3136
    %v3418 = vunpack.c.l.b16 %v3137
    %v3419 = vunpack.c.h.b16 %v3137
    %v3420 = vunpack.c.l.b16 %v3138
    %v3421 = vunpack.c.h.b16 %v3138
    %v3422 = vunpack.c.l.b16 %v3139
    %v3423 = vunpack.c.h.b16 %v3139
    %v3424 = vunpack.c.l.b16 %v3140
    %v3425 = vunpack.c.h.b16 %v3140
    %v3426 = vunpack.c.l.b16 %v3141
    %v3427 = vunpack.c.h.b16 %v3141
    %v3428 = vunpack.c.l.b16 %v3142
    %v3429 = vunpack.c.h.b16 %v3142
    %v3430 = vunpack.c.l.b16 %v3143
    %v3431 = vunpack.c.h.b16 %v3143
    %v3432 = vunpack.c.l.b16 %v3144
    %v3433 = vunpack.c.h.b16 %v3144
    %v3434 = vunpack.c.l.b16 %v3145
    %v3435 = vunpack.c.h.b16 %v3145
    %v3436 = vunpack.c.l.b16 %v3146
    %v3437 = vunpack.c.h.b16 %v3146
    %v3438 = vunpack.c.l.b16 %v3147
    %v3439 = vunpack.c.h.b16 %v3147
    %v3440 = vunpack.c.l.b16 %v3148
    %v3441 = vunpack.c.h.b16 %v3148
    %v3442 = vunpack.c.l.b16 %v3149
    %v3443 = vunpack.c.h.b16 %v3149
    %v3444 = vunpack.c.l.b16 %v3150
    %v3445 = vunpack.c.h.b16 %v3150
    %v3446 = vunpack.c.l.b16 %v3151
    %v3447 = vunpack.c.h.b16 %v3151
    %v3448 = vunpack.c.l.b16 %v3152
    %v3449 = vunpack.c.h.b16 %v3152
    %v3450 = vunpack.c.l.b16 %v3153
    %v3451 = vunpack.c.h.b16 %v3153
    %v3452 = vunpack.c.l.b16 %v3154
    %v3453 = vunpack.c.h.b16 %v3154
    %v3454 = vunpack.c.l.b16 %v3155
    %v3455 = vunpack.c.h.b16 %v3155
    %v3456 = vunpack.c.l.b16 %v3156
    %v3457 = vunpack.c.h.b16 %v3156
    %v3458 = vunpack.c.l.b16 %v3157
    %v3459 = vunpack.c.h.b16 %v3157
    %v3460 = vunpack.c.l.b16 %v3158
    %v3461 = vunpack.c.h.b16 %v3158
    %v3462 = vunpack.c.l.b16 %v3159
    %v3463 = vunpack.c.h.b16 %v3159
    %v3464 = vunpack.c.l.b16 %v3160
    %v3465 = vunpack.c.h.b16 %v3160
    %v3466 = vunpack.c.l.b16 %v3161
    %v3467 = vunpack.c.h.b16 %v3161
    %v3468 = vunpack.c.l.b16 %v3162
    %v3469 = vunpack.c.h.b16 %v3162
    %v3470 = vunpack.c.l.b16 %v3163
    %v3471 = vunpack.c.h.b16 %v3163
    %v3472 = vunpack.c.l.b16 %v3164
    %v3473 = vunpack.c.h.b16 %v3164
    %v3474 = vunpack.c.l.b16 %v3165
    %v3475 = vunpack.c.h.b16 %v3165
    %v3476 = vunpack.c.l.b16 %v3166
    %v3477 = vunpack.c.h.b16 %v3166
    %v3478 = vunpack.c.l.b16 %v3167
    %v3479 = vunpack.c.h.b16 %v3167
    %v3480 = vunpack.c.l.b16 %v3168
    %v3481 = vunpack.c.h.b16 %v3168
    %v3482 = vunpack.c.l.b16 %v3169
    %v3483 = vunpack.c.h.b16 %v3169
    %v3484 = vunpack.c.l.b16 %v3170
    %v3485 = vunpack.c.h.b16 %v3170
    %v3486 = vunpack.c.l.b16 %v3171
    %v3487 = vunpack.c.h.b16 %v3171
    %v3488 = vunpack.c.l.b16 %v3172
    %v3489 = vunpack.c.h.b16 %v3172
    %v3490 = vunpack.c.l.b16 %v3173
    %v3491 = vunpack.c.h.b16 %v3173
    %v3492 = vunpack.c.l.b16 %v3174
    %v3493 = vunpack.c.h.b16 %v3174
    %v3494 = vunpack.c.l.b16 %v3175
    %v3495 = vunpack.c.h.b16 %v3175
    %v3496 = vunpack.c.l.b16 %v3176
    %v3497 = vunpack.c.h.b16 %v3176
    %v3498 = vunpack.c.l.b16 %v3177
    %v3499 = vunpack.c.h.b16 %v3177
    %v3500 = vunpack.c.l.b16 %v3178
    %v3501 = vunpack.c.h.b16 %v3178
    %v3502 = vunpack.c.l.b16 %v3179
    %v3503 = vunpack.c.h.b16 %v3179
    %v3504 = vunpack.c.l.b16 %v3180
    %v3505 = vunpack.c.h.b16 %v3180
    %v3506 = vunpack.c.l.b16 %v3181
    %v3507 = vunpack.c.h.b16 %v3181
    %v3508 = vunpack.c.l.b16 %v3182
    %v3509 = vunpack.c.h.b16 %v3182
    %v3510 = vunpack.c.l.b16 %v3183
    %v3511 = vunpack.c.h.b16 %v3183
    %v3512 = vunpack.c.l.b16 %v3184
    %v3513 = vunpack.c.h.b16 %v3184
    %v3514 = vunpack.c.l.b16 %v3185
    %v3515 = vunpack.c.h.b16 %v3185
    %v3516 = vunpack.c.l.b16 %v3186
    %v3517 = vunpack.c.h.b16 %v3186
    %v3518 = vunpack.c.l.b16 %v3187
    %v3519 = vunpack.c.h.b16 %v3187
    %v3520 = vunpack.c.l.b16 %v3188
    %v3521 = vunpack.c.h.b16 %v3188
    %v3522 = vunpack.c.l.b16 %v3189
    %v3523 = vunpack.c.h.b16 %v3189
    %v3524 = vunpack.c.l.b16 %v3190
    %v3525 = vunpack.c.h.b16 %v3190
    %v3526 = vunpack.c.l.b16 %v3191
    %v3527 = vunpack.c.h.b16 %v3191
    %v3528 = vunpack.c.l.b16 %v3192
    %v3529 = vunpack.c.h.b16 %v3192
    %v3530 = vunpack.c.l.b16 %v3193
    %v3531 = vunpack.c.h.b16 %v3193
    %v3532 = vunpack.c.l.b16 %v3194
    %v3533 = vunpack.c.h.b16 %v3194
    %v3534 = vunpack.c.l.b16 %v3195
    %v3535 = vunpack.c.h.b16 %v3195
    %v3536 = vunpack.c.l.b16 %v3196
    %v3537 = vunpack.c.h.b16 %v3196
    %v3538 = vunpack.c.l.b16 %v3197
    %v3539 = vunpack.c.h.b16 %v3197
    %v3540 = vunpack.c.l.b16 %v3198
    %v3541 = vunpack.c.h.b16 %v3198
    %v3542 = vunpack.c.l.b16 %v3199
    %v3543 = vunpack.c.h.b16 %v3199
    %v3544 = vunpack.c.l.b16 %v3200
    %v3545 = vunpack.c.h.b16 %v3200
    %v3546 = vunpack.c.l.b16 %v3201
    %v3547 = vunpack.c.h.b16 %v3201
    %v3548 = vunpack.c.l.b16 %v3202
    %v3549 = vunpack.c.h.b16 %v3202
    %v3550 = vunpack.c.l.b16 %v3203
    %v3551 = vunpack.c.h.b16 %v3203
    %v3552 = vunpack.c.l.b16 %v3204
    %v3553 = vunpack.c.h.b16 %v3204
    %v3554 = vunpack.c.l.b16 %v3205
    %v3555 = vunpack.c.h.b16 %v3205
    %v3556 = vunpack.c.l.b16 %v3206
    %v3557 = vunpack.c.h.b16 %v3206
    %v3558 = vunpack.c.l.b16 %v3207
    %v3559 = vunpack.c.h.b16 %v3207
    %v3560 = vunpack.c.l.b16 %v3208
    %v3561 = vunpack.c.h.b16 %v3208
    %v3562 = vunpack.c.l.b16 %v3209
    %v3563 = vunpack.c.h.b16 %v3209
    %v3564 = vunpack.c.l.b16 %v3210
    %v3565 = vunpack.c.h.b16 %v3210
    %v3566 = vunpack.c.l.b16 %v3211
    %v3567 = vunpack.c.h.b16 %v3211
    %v3568 = vunpack.c.l.b16 %v3212
    %v3569 = vunpack.c.h.b16 %v3212
    %v3570 = vunpack.c.l.b16 %v3213
    %v3571 = vunpack.c.h.b16 %v3213
    %v3572 = vunpack.c.l.b16 %v3214
    %v3573 = vunpack.c.h.b16 %v3214
    %v3574 = vunpack.c.l.b16 %v3215
    %v3575 = vunpack.c.h.b16 %v3215
    %v3576 = vunpack.c.l.b16 %v3216
    %v3577 = vunpack.c.h.b16 %v3216
    %v3578 = vunpack.c.l.b16 %v3217
    %v3579 = vunpack.c.h.b16 %v3217
    %v3580 = vunpack.c.l.b16 %v3218
    %v3581 = vunpack.c.h.b16 %v3218
    %v3582 = vunpack.c.l.b16 %v3219
    %v3583 = vunpack.c.h.b16 %v3219
    %v3584 = vunpack.c.l.b16 %v3220
    %v3585 = vunpack.c.h.b16 %v3220
    %v3586 = vunpack.c.l.b16 %v3221
    %v3587 = vunpack.c.h.b16 %v3221
    %v3588 = vunpack.c.l.b16 %v3222
    %v3589 = vunpack.c.h.b16 %v3222
    %v3590 = vunpack.c.l.b16 %v3223
    %v3591 = vunpack.c.h.b16 %v3223
    %v3592 = vunpack.c.l.b16 %v3224
    %v3593 = vunpack.c.h.b16 %v3224
    %v3594 = vunpack.c.l.b16 %v3225
    %v3595 = vunpack.c.h.b16 %v3225
    %v3596 = vunpack.c.l.b16 %v3226
    %v3597 = vunpack.c.h.b16 %v3226
    %v3598 = vunpack.c.l.b16 %v3227
    %v3599 = vunpack.c.h.b16 %v3227
    %v3600 = vunpack.c.l.b16 %v3228
    %v3601 = vunpack.c.h.b16 %v3228
    %v3602 = vunpack.c.l.b16 %v3229
    %v3603 = vunpack.c.h.b16 %v3229
    %v3604 = vunpack.c.l.b16 %v3230
    %v3605 = vunpack.c.h.b16 %v3230
    %v3606 = vunpack.c.l.b16 %v3231
    %v3607 = vunpack.c.h.b16 %v3231
    %v3608 = vunpack.c.l.b16 %v3232
    %v3609 = vunpack.c.h.b16 %v3232
    %v3610 = vunpack.c.l.b16 %v3233
    %v3611 = vunpack.c.h.b16 %v3233
    %v3612 = vunpack.c.l.b16 %v3234
    %v3613 = vunpack.c.h.b16 %v3234
    %v3614 = vunpack.c.l.b16 %v3235
    %v3615 = vunpack.c.h.b16 %v3235
    %v3616 = vunpack.c.l.b16 %v3236
    %v3617 = vunpack.c.h.b16 %v3236
    %v3618 = vunpack.c.l.b16 %v3237
    %v3619 = vunpack.c.h.b16 %v3237
    %v3620 = vunpack.c.l.b16 %v3238
    %v3621 = vunpack.c.h.b16 %v3238
    %v3622 = vunpack.c.l.b16 %v3239
    %v3623 = vunpack.c.h.b16 %v3239
    %v3624 = vunpack.c.l.b16 %v3240
    %v3625 = vunpack.c.h.b16 %v3240
    %v3626 = vunpack.c.l.b16 %v3241
    %v3627 = vunpack.c.h.b16 %v3241
    %v3628 = vunpack.c.l.b16 %v3242
    %v3629 = vunpack.c.h.b16 %v3242
    %v3630 = vunpack.c.l.b16 %v3243
    %v3631 = vunpack.c.h.b16 %v3243
    %v3632 = vunpack.c.l.b16 %v3244
    %v3633 = vunpack.c.h.b16 %v3244
    %v3634 = vunpack.c.l.b16 %v3245
    %v3635 = vunpack.c.h.b16 %v3245
    %v3636 = vunpack.c.l.b16 %v3246
    %v3637 = vunpack.c.h.b16 %v3246
    %v3638 = vunpack.c.l.b16 %v3247
    %v3639 = vunpack.c.h.b16 %v3247
    %v3640 = vunpack.c.l.b16 %v3248
    %v3641 = vunpack.c.h.b16 %v3248
    %v3642 = vunpack.c.l.b16 %v3249
    %v3643 = vunpack.c.h.b16 %v3249
    %v3644 = vunpack.c.l.b16 %v3250
    %v3645 = vunpack.c.h.b16 %v3250
    %v3646 = vunpack.c.l.b16 %v3251
    %v3647 = vunpack.c.h.b16 %v3251
    %v3648 = vunpack.c.l.b16 %v3252
    %v3649 = vunpack.c.h.b16 %v3252
    %v3650 = vunpack.c.l.b16 %v3253
    %v3651 = vunpack.c.h.b16 %v3253
    %v3652 = vunpack.c.l.b16 %v3254
    %v3653 = vunpack.c.h.b16 %v3254
    %v3654 = vunpack.c.l.b16 %v3255
    %v3655 = vunpack.c.h.b16 %v3255
    %v3656 = vunpack.c.l.b16 %v3256
    %v3657 = vunpack.c.h.b16 %v3256
    %v3658 = vunpack.c.l.b16 %v3257
    %v3659 = vunpack.c.h.b16 %v3257
    %v3660 = vunpack.c.l.b16 %v3258
    %v3661 = vunpack.c.h.b16 %v3258
    %v3662 = vunpack.c.l.b16 %v3259
    %v3663 = vunpack.c.h.b16 %v3259
    %v3664 = vunpack.c.l.b16 %v3260
    %v3665 = vunpack.c.h.b16 %v3260
    %v3666 = vunpack.c.l.b16 %v3261
    %v3667 = vunpack.c.h.b16 %v3261
    %v3668 = vpack.c.b16 %v3416, %v3412
    %v3669 = vpack.c.b16 %v3417, %v3413
    %v3670 = vpack.c.b16 %v3418, %v3414
    %v3671 = vpack.c.b16 %v3419, %v3415
    %v3672 = vpack.c.b16 %v3424, %v3420
    %v3673 = vpack.c.b16 %v3425, %v3421
    %v3674 = vpack.c.b16 %v3426, %v3422
    %v3675 = vpack.c.b16 %v3427, %v3423
    %v3676 = vpack.c.b16 %v3432, %v3428
    %v3677 = vpack.c.b16 %v3433, %v3429
    %v3678 = vpack.c.b16 %v3434, %v3430
    %v3679 = vpack.c.b16 %v3435, %v3431
    %v3680 = vpack.c.b16 %v3440, %v3436
    %v3681 = vpack.c.b16 %v3441, %v3437
    %v3682 = vpack.c.b16 %v3442, %v3438
    %v3683 = vpack.c.b16 %v3443, %v3439
    %v3684 = vpack.c.b16 %v3448, %v3444
    %v3685 = vpack.c.b16 %v3449, %v3445
    %v3686 = vpack.c.b16 %v3450, %v3446
    %v3687 = vpack.c.b16 %v3451, %v3447
    %v3688 = vpack.c.b16 %v3456, %v3452
    %v3689 = vpack.c.b16 %v3457, %v3453
    %v3690 = vpack.c.b16 %v3458, %v3454
    %v3691 = vpack.c.b16 %v3459, %v3455
    %v3692 = vpack.c.b16 %v3464, %v3460
    %v3693 = vpack.c.b16 %v3465, %v3461
    %v3694 = vpack.c.b16 %v3466, %v3462
    %v3695 = vpack.c.b16 %v3467, %v3463
    %v3696 = vpack.c.b16 %v3472, %v3468
    %v3697 = vpack.c.b16 %v3473, %v3469
    %v3698 = vpack.c.b16 %v3474, %v3470
    %v3699 = vpack.c.b16 %v3475, %v3471
    %v3700 = vpack.c.b16 %v3480, %v3476
    %v3701 = vpack.c.b16 %v3481, %v3477
    %v3702 = vpack.c.b16 %v3482, %v3478
    %v3703 = vpack.c.b16 %v3483, %v3479
    %v3704 = vpack.c.b16 %v3488, %v3484
    %v3705 = vpack.c.b16 %v3489, %v3485
    %v3706 = vpack.c.b16 %v3490, %v3486
    %v3707 = vpack.c.b16 %v3491, %v3487
    %v3708 = vpack.c.b16 %v3496, %v3492
    %v3709 = vpack.c.b16 %v3497, %v3493
    %v3710 = vpack.c.b16 %v3498, %v3494
    %v3711 = vpack.c.b16 %v3499, %v3495
    %v3712 = vpack.c.b16 %v3504, %v3500
    %v3713 = vpack.c.b16 %v3505, %v3501
    %v3714 = vpack.c.b16 %v3506, %v3502
    %v3715 = vpack.c.b16 %v3507, %v3503
    %v3716 = vpack.c.b16 %v3512, %v3508
    %v3717 = vpack.c.b16 %v3513, %v3509
    %v3718 = vpack.c.b16 %v3514, %v3510
    %v3719 = vpack.c.b16 %v3515, %v3511
    %v3720 = vpack.c.b16 %v3520, %v3516
    %v3721 = vpack.c.b16 %v3521, %v3517
    %v3722 = vpack.c.b16 %v3522, %v3518
    %v3723 = vpack.c.b16 %v3523, %v3519
    %v3724 = vpack.c.b16 %v3528, %v3524
    %v3725 = vpack.c.b16 %v3529, %v3525
    %v3726 = vpack.c.b16 %v3530, %v3526
    %v3727 = vpack.c.b16 %v3531, %v3527
    %v3728 = vpack.c.b16 %v3536, %v3532
    %v3729 = vpack.c.b16 %v3537, %v3533
    %v3730 = vpack.c.b16 %v3538, %v3534
    %v3731 = vpack.c.b16 %v3539, %v3535
    %v3732 = vpack.c.b16 %v3544, %v3540
    %v3733 = vpack.c.b16 %v3545, %v3541
    %v3734 = vpack.c.b16 %v3546, %v3542
    %v3735 = vpack.c.b16 %v3547, %v3543
    %v3736 = vpack.c.b16 %v3552, %v3548
    %v3737 = vpack.c.b16 %v3553, %v3549
    %v3738 = vpack.c.b16 %v3554, %v3550
    %v3739 = vpack.c.b16 %v3555, %v3551
    %v3740 = vpack.c.b16 %v3560, %v3556
    %v3741 = vpack.c.b16 %v3561, %v3557
    %v3742 = vpack.c.b16 %v3562, %v3558
    %v3743 = vpack.c.b16 %v3563, %v3559
    %v3744 = vpack.c.b16 %v3568, %v3564
    %v3745 = vpack.c.b16 %v3569, %v3565
    %v3746 = vpack.c.b16 %v3570, %v3566
    %v3747 = vpack.c.b16 %v3571, %v3567
    %v3748 = vpack.c.b16 %v3576, %v3572
    %v3749 = vpack.c.b16 %v3577, %v3573
    %v3750 = vpack.c.b16 %v3578, %v3574
    %v3751 = vpack.c.b16 %v3579, %v3575
    %v3752 = vpack.c.b16 %v3584, %v3580
    %v3753 = vpack.c.b16 %v3585, %v3581
    %v3754 = vpack.c.b16 %v3586, %v3582
    %v3755 = vpack.c.b16 %v3587, %v3583
    %v3756 = vpack.c.b16 %v3592, %v3588
    %v3757 = vpack.c.b16 %v3593, %v3589
    %v3758 = vpack.c.b16 %v3594, %v3590
    %v3759 = vpack.c.b16 %v3595, %v3591
    %v3760 = vpack.c.b16 %v3600, %v3596
    %v3761 = vpack.c.b16 %v3601, %v3597
    %v3762 = vpack.c.b16 %v3602, %v3598
    %v3763 = vpack.c.b16 %v3603, %v3599
    %v3764 = vpack.c.b16 %v3608, %v3604
    %v3765 = vpack.c.b16 %v3609, %v3605
    %v3766 = vpack.c.b16 %v3610, %v3606
    %v3767 = vpack.c.b16 %v3611, %v3607
    %v3768 = vpack.c.b16 %v3616, %v3612
    %v3769 = vpack.c.b16 %v3617, %v3613
    %v3770 = vpack.c.b16 %v3618, %v3614
    %v3771 = vpack.c.b16 %v3619, %v3615
    %v3772 = vpack.c.b16 %v3624, %v3620
    %v3773 = vpack.c.b16 %v3625, %v3621
    %v3774 = vpack.c.b16 %v3626, %v3622
    %v3775 = vpack.c.b16 %v3627, %v3623
    %v3776 = vpack.c.b16 %v3632, %v3628
    %v3777 = vpack.c.b16 %v3633, %v3629
    %v3778 = vpack.c.b16 %v3634, %v3630
    %v3779 = vpack.c.b16 %v3635, %v3631
    %v3780 = vpack.c.b16 %v3640, %v3636
    %v3781 = vpack.c.b16 %v3641, %v3637
    %v3782 = vpack.c.b16 %v3642, %v3638
    %v3783 = vpack.c.b16 %v3643, %v3639
    %v3784 = vpack.c.b16 %v3648, %v3644
    %v3785 = vpack.c.b16 %v3649, %v3645
    %v3786 = vpack.c.b16 %v3650, %v3646
    %v3787 = vpack.c.b16 %v3651, %v3647
    %v3788 = vpack.c.b16 %v3656, %v3652
    %v3789 = vpack.c.b16 %v3657, %v3653
    %v3790 = vpack.c.b16 %v3658, %v3654
    %v3791 = vpack.c.b16 %v3659, %v3655
    %v3792 = vpack.c.b16 %v3664, %v3660
    %v3793 = vpack.c.b16 %v3665, %v3661
    %v3794 = vpack.c.b16 %v3666, %v3662
    %v3795 = vpack.c.b16 %v3667, %v3663
    %3924 = vmatprep.subr.bf16.mxu0 %v3669
    %3925 = vmatpush1.bf16.msra.mxu0 %v3668
    %3926 = vmatprep.subr.bf16.mxu0 %v3673
    %3927 = vmatpush1.bf16.msra.mxu0 %v3672
    %3928 = vmatprep.subr.bf16.mxu0 %v3677
    %3929 = vmatpush1.bf16.msra.mxu0 %v3676
    %3930 = vmatprep.subr.bf16.mxu0 %v3681
    %3931 = vmatpush1.bf16.msra.mxu0 %v3680
    %3932 = vmatprep.subr.bf16.mxu0 %v3685
    %3933 = vmatpush1.bf16.msra.mxu0 %v3684
    %3934 = vmatprep.subr.bf16.mxu0 %v3689
    %3935 = vmatpush1.bf16.msra.mxu0 %v3688
    %3936 = vmatprep.subr.bf16.mxu0 %v3693
    %3937 = vmatpush1.bf16.msra.mxu0 %v3692
    %3938 = vmatprep.subr.bf16.mxu0 %v3697
    %3939 = vmatpush1.bf16.msra.mxu0 %v3696
    %3940 = vmatprep.subr.bf16.mxu0 %v3701
    %3941 = vmatpush1.bf16.msra.mxu0 %v3700
    %3942 = vmatprep.subr.bf16.mxu0 %v3705
    %3943 = vmatpush1.bf16.msra.mxu0 %v3704
    %3944 = vmatprep.subr.bf16.mxu0 %v3709
    %3945 = vmatpush1.bf16.msra.mxu0 %v3708
    %3946 = vmatprep.subr.bf16.mxu0 %v3713
    %3947 = vmatpush1.bf16.msra.mxu0 %v3712
    %3948 = vmatprep.subr.bf16.mxu0 %v3717
    %3949 = vmatpush1.bf16.msra.mxu0 %v3716
    %3950 = vmatprep.subr.bf16.mxu0 %v3721
    %3951 = vmatpush1.bf16.msra.mxu0 %v3720
    %3952 = vmatprep.subr.bf16.mxu0 %v3725
    %3953 = vmatpush1.bf16.msra.mxu0 %v3724
    %3954 = vmatprep.subr.bf16.mxu0 %v3729
    %3955 = vmatpush1.bf16.msra.mxu0 %v3728
    %3956 = vmatprep.mubr.bf16.mxu0 %v3131
    %3957 = vmatmul.mubr.bf16.gmra.mrb[0].mxu0 %v3130
    %v3958 = vpop.f32.mrb[0].mxu0
    %v3959 = vadd.f32 %v3267, %v3958
    %v3960 = vpop.f32.mrb[0].mxu0
    %v3961 = vadd.f32 %v3271, %v3960
    %v3962 = vpop.f32.mrb[0].mxu0
    %v3963 = vadd.f32 %v3267, %v3962
    %v3964 = vpop.f32.mrb[0].mxu0
    %v3965 = vadd.f32 %v3271, %v3964
    %3966 = vdwg.mxu0
    %3967 = vmatprep.subr.bf16.mxu0 %v3733
    %3968 = vmatpush1.bf16.msra.mxu0 %v3732
    %3969 = vmatprep.subr.bf16.mxu0 %v3737
    %3970 = vmatpush1.bf16.msra.mxu0 %v3736
    %3971 = vmatprep.subr.bf16.mxu0 %v3741
    %3972 = vmatpush1.bf16.msra.mxu0 %v3740
    %3973 = vmatprep.subr.bf16.mxu0 %v3745
    %3974 = vmatpush1.bf16.msra.mxu0 %v3744
    %3975 = vmatprep.subr.bf16.mxu0 %v3749
    %3976 = vmatpush1.bf16.msra.mxu0 %v3748
    %3977 = vmatprep.subr.bf16.mxu0 %v3753
    %3978 = vmatpush1.bf16.msra.mxu0 %v3752
    %3979 = vmatprep.subr.bf16.mxu0 %v3757
    %3980 = vmatpush1.bf16.msra.mxu0 %v3756
    %3981 = vmatprep.subr.bf16.mxu0 %v3761
    %3982 = vmatpush1.bf16.msra.mxu0 %v3760
    %3983 = vmatprep.subr.bf16.mxu0 %v3765
    %3984 = vmatpush1.bf16.msra.mxu0 %v3764
    %3985 = vmatprep.subr.bf16.mxu0 %v3769
    %3986 = vmatpush1.bf16.msra.mxu0 %v3768
    %3987 = vmatprep.subr.bf16.mxu0 %v3773
    %3988 = vmatpush1.bf16.msra.mxu0 %v3772
    %3989 = vmatprep.subr.bf16.mxu0 %v3777
    %3990 = vmatpush1.bf16.msra.mxu0 %v3776
    %3991 = vmatprep.subr.bf16.mxu0 %v3781
    %3992 = vmatpush1.bf16.msra.mxu0 %v3780
    %3993 = vmatprep.subr.bf16.mxu0 %v3785
    %3994 = vmatpush1.bf16.msra.mxu0 %v3784
    %3995 = vmatprep.subr.bf16.mxu0 %v3789
    %3996 = vmatpush1.bf16.msra.mxu0 %v3788
    %3997 = vmatprep.subr.bf16.mxu0 %v3793
    %3998 = vmatpush1.bf16.msra.mxu0 %v3792
    %3999 = vmatprep.mubr.bf16.mxu0 %v3133
    %4000 = vmatmul.mubr.bf16.gmra.mrb[0].mxu0 %v3132
    %v4001 = vpop.f32.mrb[0].mxu0
    %v4002 = vadd.f32 %v3959, %v4001
    %v4003 = vpop.f32.mrb[0].mxu0
    %v4004 = vadd.f32 %v3961, %v4003
    %v4005 = vpop.f32.mrb[0].mxu0
    %v4006 = vadd.f32 %v3963, %v4005
    %v4007 = vpop.f32.mrb[0].mxu0
    %v4008 = vadd.f32 %v3965, %v4007
    %4009 = vdwg.mxu0
    %4010 = vmatprep.subr.bf16.mxu0 %v3671
    %4011 = vmatpush1.bf16.msra.mxu0 %v3670
    %4012 = vmatprep.subr.bf16.mxu0 %v3675
    %4013 = vmatpush1.bf16.msra.mxu0 %v3674
    %4014 = vmatprep.subr.bf16.mxu0 %v3679
    %4015 = vmatpush1.bf16.msra.mxu0 %v3678
    %4016 = vmatprep.subr.bf16.mxu0 %v3683
    %4017 = vmatpush1.bf16.msra.mxu0 %v3682
    %4018 = vmatprep.subr.bf16.mxu0 %v3687
    %4019 = vmatpush1.bf16.msra.mxu0 %v3686
    %4020 = vmatprep.subr.bf16.mxu0 %v3691
    %4021 = vmatpush1.bf16.msra.mxu0 %v3690
    %4022 = vmatprep.subr.bf16.mxu0 %v3695
    %4023 = vmatpush1.bf16.msra.mxu0 %v3694
    %4024 = vmatprep.subr.bf16.mxu0 %v3699
    %4025 = vmatpush1.bf16.msra.mxu0 %v3698
    %4026 = vmatprep.subr.bf16.mxu0 %v3703
    %4027 = vmatpush1.bf16.msra.mxu0 %v3702
    %4028 = vmatprep.subr.bf16.mxu0 %v3707
    %4029 = vmatpush1.bf16.msra.mxu0 %v3706
    %4030 = vmatprep.subr.bf16.mxu0 %v3711
    %4031 = vmatpush1.bf16.msra.mxu0 %v3710
    %4032 = vmatprep.subr.bf16.mxu0 %v3715
    %4033 = vmatpush1.bf16.msra.mxu0 %v3714
    %4034 = vmatprep.subr.bf16.mxu0 %v3719
    %4035 = vmatpush1.bf16.msra.mxu0 %v3718
    %4036 = vmatprep.subr.bf16.mxu0 %v3723
    %4037 = vmatpush1.bf16.msra.mxu0 %v3722
    %4038 = vmatprep.subr.bf16.mxu0 %v3727
    %4039 = vmatpush1.bf16.msra.mxu0 %v3726
    %4040 = vmatprep.subr.bf16.mxu0 %v3731
    %4041 = vmatpush1.bf16.msra.mxu0 %v3730
    %4042 = vmatprep.mubr.bf16.mxu0 %v3131
    %4043 = vmatmul.mubr.bf16.gmra.mrb[0].mxu0 %v3130
    %v4044 = vpop.f32.mrb[0].mxu0
    %v4045 = vadd.f32 %v3275, %v4044
    %v4046 = vpop.f32.mrb[0].mxu0
    %v4047 = vadd.f32 %v3279, %v4046
    %v4048 = vpop.f32.mrb[0].mxu0
    %v4049 = vadd.f32 %v3275, %v4048
    %v4050 = vpop.f32.mrb[0].mxu0
    %v4051 = vadd.f32 %v3279, %v4050
    %4052 = vdwg.mxu0
    %4053 = vmatprep.subr.bf16.mxu0 %v3735
    %4054 = vmatpush1.bf16.msra.mxu0 %v3734
    %4055 = vmatprep.subr.bf16.mxu0 %v3739
    %4056 = vmatpush1.bf16.msra.mxu0 %v3738
    %4057 = vmatprep.subr.bf16.mxu0 %v3743
    %4058 = vmatpush1.bf16.msra.mxu0 %v3742
    %4059 = vmatprep.subr.bf16.mxu0 %v3747
    %4060 = vmatpush1.bf16.msra.mxu0 %v3746
    %4061 = vmatprep.subr.bf16.mxu0 %v3751
    %4062 = vmatpush1.bf16.msra.mxu0 %v3750
    %4063 = vmatprep.subr.bf16.mxu0 %v3755
    %4064 = vmatpush1.bf16.msra.mxu0 %v3754
    %4065 = vmatprep.subr.bf16.mxu0 %v3759
    %4066 = vmatpush1.bf16.msra.mxu0 %v3758
    %4067 = vmatprep.subr.bf16.mxu0 %v3763
    %4068 = vmatpush1.bf16.msra.mxu0 %v3762
    %4069 = vmatprep.subr.bf16.mxu0 %v3767
    %4070 = vmatpush1.bf16.msra.mxu0 %v3766
    %4071 = vmatprep.subr.bf16.mxu0 %v3771
    %4072 = vmatpush1.bf16.msra.mxu0 %v3770
    %4073 = vmatprep.subr.bf16.mxu0 %v3775
    %4074 = vmatpush1.bf16.msra.mxu0 %v3774
    %4075 = vmatprep.subr.bf16.mxu0 %v3779
    %4076 = vmatpush1.bf16.msra.mxu0 %v3778
    %4077 = vmatprep.subr.bf16.mxu0 %v3783
    %4078 = vmatpush1.bf16.msra.mxu0 %v3782
    %4079 = vmatprep.subr.bf16.mxu0 %v3787
    %4080 = vmatpush1.bf16.msra.mxu0 %v3786
    %4081 = vmatprep.subr.bf16.mxu0 %v3791
    %4082 = vmatpush1.bf16.msra.mxu0 %v3790
    %4083 = vmatprep.subr.bf16.mxu0 %v3795
    %4084 = vmatpush1.bf16.msra.mxu0 %v3794
    %4085 = vmatprep.mubr.bf16.mxu0 %v3133
    %4086 = vmatmul.mubr.bf16.gmra.mrb[0].mxu0 %v3132
    %v4087 = vpop.f32.mrb[0].mxu0
    %v4088 = vadd.f32 %v4045, %v4087
    %v4089 = vpop.f32.mrb[0].mxu0
    %v4090 = vadd.f32 %v4047, %v4089
    %v4091 = vpop.f32.mrb[0].mxu0
    %v4092 = vadd.f32 %v4049, %v4091
    %v4093 = vpop.f32.mrb[0].mxu0
    %v4094 = vadd.f32 %v4051, %v4093
    %4095 = vdwg.mxu0
    %v4096 = vmax.f32 %v4002, 0.0
    %v4097 = vmax.f32 %v4004, 0.0
    %v4098 = vmax.f32 %v4088, 0.0
    %v4099 = vmax.f32 %v4090, 0.0
    %v4100 = vmax.f32 %v4006, 0.0
    %v4101 = vmax.f32 %v4008, 0.0
    %v4102 = vmax.f32 %v4092, 0.0
    %v4103 = vmax.f32 %v4094, 0.0
    %v4104 = vpack.c.bf16 %v4100, %v4096
    %v4105 = vpack.c.bf16 %v4101, %v4097
    %v4106 = vpack.c.bf16 %v4102, %v4098
    %v4107 = vpack.c.bf16 %v4103, %v4099
    %v4108 = vld [vmem:[%s7] sm:$0xff]
    %v4109 = vld [vmem:[%s7 + $0x8] sm:$0xff]
    %v4110 = vld [vmem:[%s7 + $0x10] sm:$0xff]
    %v4111 = vld [vmem:[%s7 + $0x18] sm:$0xff]
    %v4112 = vld [vmem:[%s7 + $0x20] sm:$0xff]
    %v4113 = vld [vmem:[%s7 + $0x28] sm:$0xff]
    %v4114 = vld [vmem:[%s7 + $0x30] sm:$0xff]
    %v4115 = vld [vmem:[%s7 + $0x38] sm:$0xff]
    %v4116 = vld [vmem:[%s7 + $0x40] sm:$0xff]
    %v4117 = vld [vmem:[%s7 + $0x48] sm:$0xff]
    %v4118 = vld [vmem:[%s7 + $0x50] sm:$0xff]
    %v4119 = vld [vmem:[%s7 + $0x58] sm:$0xff]
    %v4120 = vld [vmem:[%s7 + $0x60] sm:$0xff]
    %v4121 = vld [vmem:[%s7 + $0x68] sm:$0xff]
    %v4122 = vld [vmem:[%s7 + $0x70] sm:$0xff]
    %v4123 = vld [vmem:[%s7 + $0x78] sm:$0xff]
    %v4124 = vld [vmem:[%s7 + $0x80] sm:$0xff]
    %v4125 = vld [vmem:[%s7 + $0x88] sm:$0xff]
    %v4126 = vld [vmem:[%s7 + $0x90] sm:$0xff]
    %v4127 = vld [vmem:[%s7 + $0x98] sm:$0xff]
    %v4128 = vld [vmem:[%s7 + $0xa0] sm:$0xff]
    %v4129 = vld [vmem:[%s7 + $0xa8] sm:$0xff]
    %v4130 = vld [vmem:[%s7 + $0xb0] sm:$0xff]
    %v4131 = vld [vmem:[%s7 + $0xb8] sm:$0xff]
    %v4132 = vld [vmem:[%s7 + $0xc0] sm:$0xff]
    %v4133 = vld [vmem:[%s7 + $0xc8] sm:$0xff]
    %v4134 = vld [vmem:[%s7 + $0xd0] sm:$0xff]
    %v4135 = vld [vmem:[%s7 + $0xd8] sm:$0xff]
    %v4136 = vld [vmem:[%s7 + $0xe0] sm:$0xff]
    %v4137 = vld [vmem:[%s7 + $0xe8] sm:$0xff]
    %v4138 = vld [vmem:[%s7 + $0xf0] sm:$0xff]
    %v4139 = vld [vmem:[%s7 + $0xf8] sm:$0xff]
    %v4140 = vld [vmem:[%s7 + $0x100] sm:$0xff]
    %v4141 = vld [vmem:[%s7 + $0x108] sm:$0xff]
    %v4142 = vld [vmem:[%s7 + $0x110] sm:$0xff]
    %v4143 = vld [vmem:[%s7 + $0x118] sm:$0xff]
    %v4144 = vld [vmem:[%s7 + $0x120] sm:$0xff]
    %v4145 = vld [vmem:[%s7 + $0x128] sm:$0xff]
    %v4146 = vld [vmem:[%s7 + $0x130] sm:$0xff]
    %v4147 = vld [vmem:[%s7 + $0x138] sm:$0xff]
    %v4148 = vld [vmem:[%s7 + $0x140] sm:$0xff]
    %v4149 = vld [vmem:[%s7 + $0x148] sm:$0xff]
    %v4150 = vld [vmem:[%s7 + $0x150] sm:$0xff]
    %v4151 = vld [vmem:[%s7 + $0x158] sm:$0xff]
    %v4152 = vld [vmem:[%s7 + $0x160] sm:$0xff]
    %v4153 = vld [vmem:[%s7 + $0x168] sm:$0xff]
    %v4154 = vld [vmem:[%s7 + $0x170] sm:$0xff]
    %v4155 = vld [vmem:[%s7 + $0x178] sm:$0xff]
    %v4156 = vld [vmem:[%s7 + $0x180] sm:$0xff]
    %v4157 = vld [vmem:[%s7 + $0x188] sm:$0xff]
    %v4158 = vld [vmem:[%s7 + $0x190] sm:$0xff]
    %v4159 = vld [vmem:[%s7 + $0x198] sm:$0xff]
    %v4160 = vld [vmem:[%s7 + $0x1a0] sm:$0xff]
    %v4161 = vld [vmem:[%s7 + $0x1a8] sm:$0xff]
    %v4162 = vld [vmem:[%s7 + $0x1b0] sm:$0xff]
    %v4163 = vld [vmem:[%s7 + $0x1b8] sm:$0xff]
    %v4164 = vld [vmem:[%s7 + $0x1c0] sm:$0xff]
    %v4165 = vld [vmem:[%s7 + $0x1c8] sm:$0xff]
    %v4166 = vld [vmem:[%s7 + $0x1d0] sm:$0xff]
    %v4167 = vld [vmem:[%s7 + $0x1d8] sm:$0xff]
    %v4168 = vld [vmem:[%s7 + $0x1e0] sm:$0xff]
    %v4169 = vld [vmem:[%s7 + $0x1e8] sm:$0xff]
    %v4170 = vld [vmem:[%s7 + $0x1f0] sm:$0xff]
    %v4171 = vld [vmem:[%s7 + $0x1f8] sm:$0xff]
    %v4172 = vld [vmem:[%s7 + $0x200] sm:$0xff]
    %v4173 = vld [vmem:[%s7 + $0x208] sm:$0xff]
    %v4174 = vld [vmem:[%s7 + $0x210] sm:$0xff]
    %v4175 = vld [vmem:[%s7 + $0x218] sm:$0xff]
    %v4176 = vld [vmem:[%s7 + $0x220] sm:$0xff]
    %v4177 = vld [vmem:[%s7 + $0x228] sm:$0xff]
    %v4178 = vld [vmem:[%s7 + $0x230] sm:$0xff]
    %v4179 = vld [vmem:[%s7 + $0x238] sm:$0xff]
    %v4180 = vld [vmem:[%s7 + $0x240] sm:$0xff]
    %v4181 = vld [vmem:[%s7 + $0x248] sm:$0xff]
    %v4182 = vld [vmem:[%s7 + $0x250] sm:$0xff]
    %v4183 = vld [vmem:[%s7 + $0x258] sm:$0xff]
    %v4184 = vld [vmem:[%s7 + $0x260] sm:$0xff]
    %v4185 = vld [vmem:[%s7 + $0x268] sm:$0xff]
    %v4186 = vld [vmem:[%s7 + $0x270] sm:$0xff]
    %v4187 = vld [vmem:[%s7 + $0x278] sm:$0xff]
    %v4188 = vld [vmem:[%s7 + $0x280] sm:$0xff]
    %v4189 = vld [vmem:[%s7 + $0x288] sm:$0xff]
    %v4190 = vld [vmem:[%s7 + $0x290] sm:$0xff]
    %v4191 = vld [vmem:[%s7 + $0x298] sm:$0xff]
    %v4192 = vld [vmem:[%s7 + $0x2a0] sm:$0xff]
    %v4193 = vld [vmem:[%s7 + $0x2a8] sm:$0xff]
    %v4194 = vld [vmem:[%s7 + $0x2b0] sm:$0xff]
    %v4195 = vld [vmem:[%s7 + $0x2b8] sm:$0xff]
    %v4196 = vld [vmem:[%s7 + $0x2c0] sm:$0xff]
    %v4197 = vld [vmem:[%s7 + $0x2c8] sm:$0xff]
    %v4198 = vld [vmem:[%s7 + $0x2d0] sm:$0xff]
    %v4199 = vld [vmem:[%s7 + $0x2d8] sm:$0xff]
    %v4200 = vld [vmem:[%s7 + $0x2e0] sm:$0xff]
    %v4201 = vld [vmem:[%s7 + $0x2e8] sm:$0xff]
    %v4202 = vld [vmem:[%s7 + $0x2f0] sm:$0xff]
    %v4203 = vld [vmem:[%s7 + $0x2f8] sm:$0xff]
    %v4204 = vld [vmem:[%s7 + $0x300] sm:$0xff]
    %v4205 = vld [vmem:[%s7 + $0x308] sm:$0xff]
    %v4206 = vld [vmem:[%s7 + $0x310] sm:$0xff]
    %v4207 = vld [vmem:[%s7 + $0x318] sm:$0xff]
    %v4208 = vld [vmem:[%s7 + $0x320] sm:$0xff]
    %v4209 = vld [vmem:[%s7 + $0x328] sm:$0xff]
    %v4210 = vld [vmem:[%s7 + $0x330] sm:$0xff]
    %v4211 = vld [vmem:[%s7 + $0x338] sm:$0xff]
    %v4212 = vld [vmem:[%s7 + $0x340] sm:$0xff]
    %v4213 = vld [vmem:[%s7 + $0x348] sm:$0xff]
    %v4214 = vld [vmem:[%s7 + $0x350] sm:$0xff]
    %v4215 = vld [vmem:[%s7 + $0x358] sm:$0xff]
    %v4216 = vld [vmem:[%s7 + $0x360] sm:$0xff]
    %v4217 = vld [vmem:[%s7 + $0x368] sm:$0xff]
    %v4218 = vld [vmem:[%s7 + $0x370] sm:$0xff]
    %v4219 = vld [vmem:[%s7 + $0x378] sm:$0xff]
    %v4220 = vld [vmem:[%s7 + $0x380] sm:$0xff]
    %v4221 = vld [vmem:[%s7 + $0x388] sm:$0xff]
    %v4222 = vld [vmem:[%s7 + $0x390] sm:$0xff]
    %v4223 = vld [vmem:[%s7 + $0x398] sm:$0xff]
    %v4224 = vld [vmem:[%s7 + $0x3a0] sm:$0xff]
    %v4225 = vld [vmem:[%s7 + $0x3a8] sm:$0xff]
    %v4226 = vld [vmem:[%s7 + $0x3b0] sm:$0xff]
    %v4227 = vld [vmem:[%s7 + $0x3b8] sm:$0xff]
    %v4228 = vld [vmem:[%s7 + $0x3c0] sm:$0xff]
    %v4229 = vld [vmem:[%s7 + $0x3c8] sm:$0xff]
    %v4230 = vld [vmem:[%s7 + $0x3d0] sm:$0xff]
    %v4231 = vld [vmem:[%s7 + $0x3d8] sm:$0xff]
    %v4232 = vld [vmem:[%s7 + $0x3e0] sm:$0xff]
    %v4233 = vld [vmem:[%s7 + $0x3e8] sm:$0xff]
    %v4234 = vld [vmem:[%s7 + $0x3f0] sm:$0xff]
    %v4235 = vld [vmem:[%s7 + $0x3f8] sm:$0xff]
    %v4236 = vld [vmem:[%s8] sm:$0xf]
    %v4238 = vlaneseq
    %v4239 = vshrl.u32 %v4238, 7
    %v4240 = vsub.s32 0, %v4239
    %v4241 = vrot.slane %v4236, %v4240
    %v4242 = vlaneseq
    %v4243 = vshrl.u32 %v4242, 7
    %v4244 = vsub.s32 1, %v4243
    %v4245 = vrot.slane %v4236, %v4244
    %v4246 = vlaneseq
    %v4247 = vshrl.u32 %v4246, 7
    %v4248 = vsub.s32 2, %v4247
    %v4249 = vrot.slane %v4236, %v4248
    %v4250 = vlaneseq
    %v4251 = vshrl.u32 %v4250, 7
    %v4252 = vsub.s32 3, %v4251
    %v4253 = vrot.slane %v4236, %v4252
    %v4386 = vunpack.c.l.b16 %v4108
    %v4387 = vunpack.c.h.b16 %v4108
    %v4388 = vunpack.c.l.b16 %v4109
    %v4389 = vunpack.c.h.b16 %v4109
    %v4390 = vunpack.c.l.b16 %v4110
    %v4391 = vunpack.c.h.b16 %v4110
    %v4392 = vunpack.c.l.b16 %v4111
    %v4393 = vunpack.c.h.b16 %v4111
    %v4394 = vunpack.c.l.b16 %v4112
    %v4395 = vunpack.c.h.b16 %v4112
    %v4396 = vunpack.c.l.b16 %v4113
    %v4397 = vunpack.c.h.b16 %v4113
    %v4398 = vunpack.c.l.b16 %v4114
    %v4399 = vunpack.c.h.b16 %v4114
    %v4400 = vunpack.c.l.b16 %v4115
    %v4401 = vunpack.c.h.b16 %v4115
    %v4402 = vunpack.c.l.b16 %v4116
    %v4403 = vunpack.c.h.b16 %v4116
    %v4404 = vunpack.c.l.b16 %v4117
    %v4405 = vunpack.c.h.b16 %v4117
    %v4406 = vunpack.c.l.b16 %v4118
    %v4407 = vunpack.c.h.b16 %v4118
    %v4408 = vunpack.c.l.b16 %v4119
    %v4409 = vunpack.c.h.b16 %v4119
    %v4410 = vunpack.c.l.b16 %v4120
    %v4411 = vunpack.c.h.b16 %v4120
    %v4412 = vunpack.c.l.b16 %v4121
    %v4413 = vunpack.c.h.b16 %v4121
    %v4414 = vunpack.c.l.b16 %v4122
    %v4415 = vunpack.c.h.b16 %v4122
    %v4416 = vunpack.c.l.b16 %v4123
    %v4417 = vunpack.c.h.b16 %v4123
    %v4418 = vunpack.c.l.b16 %v4124
    %v4419 = vunpack.c.h.b16 %v4124
    %v4420 = vunpack.c.l.b16 %v4125
    %v4421 = vunpack.c.h.b16 %v4125
    %v4422 = vunpack.c.l.b16 %v4126
    %v4423 = vunpack.c.h.b16 %v4126
    %v4424 = vunpack.c.l.b16 %v4127
    %v4425 = vunpack.c.h.b16 %v4127
    %v4426 = vunpack.c.l.b16 %v4128
    %v4427 = vunpack.c.h.b16 %v4128
    %v4428 = vunpack.c.l.b16 %v4129
    %v4429 = vunpack.c.h.b16 %v4129
    %v4430 = vunpack.c.l.b16 %v4130
    %v4431 = vunpack.c.h.b16 %v4130
    %v4432 = vunpack.c.l.b16 %v4131
    %v4433 = vunpack.c.h.b16 %v4131
    %v4434 = vunpack.c.l.b16 %v4132
    %v4435 = vunpack.c.h.b16 %v4132
    %v4436 = vunpack.c.l.b16 %v4133
    %v4437 = vunpack.c.h.b16 %v4133
    %v4438 = vunpack.c.l.b16 %v4134
    %v4439 = vunpack.c.h.b16 %v4134
    %v4440 = vunpack.c.l.b16 %v4135
    %v4441 = vunpack.c.h.b16 %v4135
    %v4442 = vunpack.c.l.b16 %v4136
    %v4443 = vunpack.c.h.b16 %v4136
    %v4444 = vunpack.c.l.b16 %v4137
    %v4445 = vunpack.c.h.b16 %v4137
    %v4446 = vunpack.c.l.b16 %v4138
    %v4447 = vunpack.c.h.b16 %v4138
    %v4448 = vunpack.c.l.b16 %v4139
    %v4449 = vunpack.c.h.b16 %v4139
    %v4450 = vunpack.c.l.b16 %v4140
    %v4451 = vunpack.c.h.b16 %v4140
    %v4452 = vunpack.c.l.b16 %v4141
    %v4453 = vunpack.c.h.b16 %v4141
    %v4454 = vunpack.c.l.b16 %v4142
    %v4455 = vunpack.c.h.b16 %v4142
    %v4456 = vunpack.c.l.b16 %v4143
    %v4457 = vunpack.c.h.b16 %v4143
    %v4458 = vunpack.c.l.b16 %v4144
    %v4459 = vunpack.c.h.b16 %v4144
    %v4460 = vunpack.c.l.b16 %v4145
    %v4461 = vunpack.c.h.b16 %v4145
    %v4462 = vunpack.c.l.b16 %v4146
    %v4463 = vunpack.c.h.b16 %v4146
    %v4464 = vunpack.c.l.b16 %v4147
    %v4465 = vunpack.c.h.b16 %v4147
    %v4466 = vunpack.c.l.b16 %v4148
    %v4467 = vunpack.c.h.b16 %v4148
    %v4468 = vunpack.c.l.b16 %v4149
    %v4469 = vunpack.c.h.b16 %v4149
    %v4470 = vunpack.c.l.b16 %v4150
    %v4471 = vunpack.c.h.b16 %v4150
    %v4472 = vunpack.c.l.b16 %v4151
    %v4473 = vunpack.c.h.b16 %v4151
    %v4474 = vunpack.c.l.b16 %v4152
    %v4475 = vunpack.c.h.b16 %v4152
    %v4476 = vunpack.c.l.b16 %v4153
    %v4477 = vunpack.c.h.b16 %v4153
    %v4478 = vunpack.c.l.b16 %v4154
    %v4479 = vunpack.c.h.b16 %v4154
    %v4480 = vunpack.c.l.b16 %v4155
    %v4481 = vunpack.c.h.b16 %v4155
    %v4482 = vunpack.c.l.b16 %v4156
    %v4483 = vunpack.c.h.b16 %v4156
    %v4484 = vunpack.c.l.b16 %v4157
    %v4485 = vunpack.c.h.b16 %v4157
    %v4486 = vunpack.c.l.b16 %v4158
    %v4487 = vunpack.c.h.b16 %v4158
    %v4488 = vunpack.c.l.b16 %v4159
    %v4489 = vunpack.c.h.b16 %v4159
    %v4490 = vunpack.c.l.b16 %v4160
    %v4491 = vunpack.c.h.b16 %v4160
    %v4492 = vunpack.c.l.b16 %v4161
    %v4493 = vunpack.c.h.b16 %v4161
    %v4494 = vunpack.c.l.b16 %v4162
    %v4495 = vunpack.c.h.b16 %v4162
    %v4496 = vunpack.c.l.b16 %v4163
    %v4497 = vunpack.c.h.b16 %v4163
    %v4498 = vunpack.c.l.b16 %v4164
    %v4499 = vunpack.c.h.b16 %v4164
    %v4500 = vunpack.c.l.b16 %v4165
    %v4501 = vunpack.c.h.b16 %v4165
    %v4502 = vunpack.c.l.b16 %v4166
    %v4503 = vunpack.c.h.b16 %v4166
    %v4504 = vunpack.c.l.b16 %v4167
    %v4505 = vunpack.c.h.b16 %v4167
    %v4506 = vunpack.c.l.b16 %v4168
    %v4507 = vunpack.c.h.b16 %v4168
    %v4508 = vunpack.c.l.b16 %v4169
    %v4509 = vunpack.c.h.b16 %v4169
    %v4510 = vunpack.c.l.b16 %v4170
    %v4511 = vunpack.c.h.b16 %v4170
    %v4512 = vunpack.c.l.b16 %v4171
    %v4513 = vunpack.c.h.b16 %v4171
    %v4514 = vunpack.c.l.b16 %v4172
    %v4515 = vunpack.c.h.b16 %v4172
    %v4516 = vunpack.c.l.b16 %v4173
    %v4517 = vunpack.c.h.b16 %v4173
    %v4518 = vunpack.c.l.b16 %v4174
    %v4519 = vunpack.c.h.b16 %v4174
    %v4520 = vunpack.c.l.b16 %v4175
    %v4521 = vunpack.c.h.b16 %v4175
    %v4522 = vunpack.c.l.b16 %v4176
    %v4523 = vunpack.c.h.b16 %v4176
    %v4524 = vunpack.c.l.b16 %v4177
    %v4525 = vunpack.c.h.b16 %v4177
    %v4526 = vunpack.c.l.b16 %v4178
    %v4527 = vunpack.c.h.b16 %v4178
    %v4528 = vunpack.c.l.b16 %v4179
    %v4529 = vunpack.c.h.b16 %v4179
    %v4530 = vunpack.c.l.b16 %v4180
    %v4531 = vunpack.c.h.b16 %v4180
    %v4532 = vunpack.c.l.b16 %v4181
    %v4533 = vunpack.c.h.b16 %v4181
    %v4534 = vunpack.c.l.b16 %v4182
    %v4535 = vunpack.c.h.b16 %v4182
    %v4536 = vunpack.c.l.b16 %v4183
    %v4537 = vunpack.c.h.b16 %v4183
    %v4538 = vunpack.c.l.b16 %v4184
    %v4539 = vunpack.c.h.b16 %v4184
    %v4540 = vunpack.c.l.b16 %v4185
    %v4541 = vunpack.c.h.b16 %v4185
    %v4542 = vunpack.c.l.b16 %v4186
    %v4543 = vunpack.c.h.b16 %v4186
    %v4544 = vunpack.c.l.b16 %v4187
    %v4545 = vunpack.c.h.b16 %v4187
    %v4546 = vunpack.c.l.b16 %v4188
    %v4547 = vunpack.c.h.b16 %v4188
    %v4548 = vunpack.c.l.b16 %v4189
    %v4549 = vunpack.c.h.b16 %v4189
    %v4550 = vunpack.c.l.b16 %v4190
    %v4551 = vunpack.c.h.b16 %v4190
    %v4552 = vunpack.c.l.b16 %v4191
    %v4553 = vunpack.c.h.b16 %v4191
    %v4554 = vunpack.c.l.b16 %v4192
    %v4555 = vunpack.c.h.b16 %v4192
    %v4556 = vunpack.c.l.b16 %v4193
    %v4557 = vunpack.c.h.b16 %v4193
    %v4558 = vunpack.c.l.b16 %v4194
    %v4559 = vunpack.c.h.b16 %v4194
    %v4560 = vunpack.c.l.b16 %v4195
    %v4561 = vunpack.c.h.b16 %v4195
    %v4562 = vunpack.c.l.b16 %v4196
    %v4563 = vunpack.c.h.b16 %v4196
    %v4564 = vunpack.c.l.b16 %v4197
    %v4565 = vunpack.c.h.b16 %v4197
    %v4566 = vunpack.c.l.b16 %v4198
    %v4567 = vunpack.c.h.b16 %v4198
    %v4568 = vunpack.c.l.b16 %v4199
    %v4569 = vunpack.c.h.b16 %v4199
    %v4570 = vunpack.c.l.b16 %v4200
    %v4571 = vunpack.c.h.b16 %v4200
    %v4572 = vunpack.c.l.b16 %v4201
    %v4573 = vunpack.c.h.b16 %v4201
    %v4574 = vunpack.c.l.b16 %v4202
    %v4575 = vunpack.c.h.b16 %v4202
    %v4576 = vunpack.c.l.b16 %v4203
    %v4577 = vunpack.c.h.b16 %v4203
    %v4578 = vunpack.c.l.b16 %v4204
    %v4579 = vunpack.c.h.b16 %v4204
    %v4580 = vunpack.c.l.b16 %v4205
    %v4581 = vunpack.c.h.b16 %v4205
    %v4582 = vunpack.c.l.b16 %v4206
    %v4583 = vunpack.c.h.b16 %v4206
    %v4584 = vunpack.c.l.b16 %v4207
    %v4585 = vunpack.c.h.b16 %v4207
    %v4586 = vunpack.c.l.b16 %v4208
    %v4587 = vunpack.c.h.b16 %v4208
    %v4588 = vunpack.c.l.b16 %v4209
    %v4589 = vunpack.c.h.b16 %v4209
    %v4590 = vunpack.c.l.b16 %v4210
    %v4591 = vunpack.c.h.b16 %v4210
    %v4592 = vunpack.c.l.b16 %v4211
    %v4593 = vunpack.c.h.b16 %v4211
    %v4594 = vunpack.c.l.b16 %v4212
    %v4595 = vunpack.c.h.b16 %v4212
    %v4596 = vunpack.c.l.b16 %v4213
    %v4597 = vunpack.c.h.b16 %v4213
    %v4598 = vunpack.c.l.b16 %v4214
    %v4599 = vunpack.c.h.b16 %v4214
    %v4600 = vunpack.c.l.b16 %v4215
    %v4601 = vunpack.c.h.b16 %v4215
    %v4602 = vunpack.c.l.b16 %v4216
    %v4603 = vunpack.c.h.b16 %v4216
    %v4604 = vunpack.c.l.b16 %v4217
    %v4605 = vunpack.c.h.b16 %v4217
    %v4606 = vunpack.c.l.b16 %v4218
    %v4607 = vunpack.c.h.b16 %v4218
    %v4608 = vunpack.c.l.b16 %v4219
    %v4609 = vunpack.c.h.b16 %v4219
    %v4610 = vunpack.c.l.b16 %v4220
    %v4611 = vunpack.c.h.b16 %v4220
    %v4612 = vunpack.c.l.b16 %v4221
    %v4613 = vunpack.c.h.b16 %v4221
    %v4614 = vunpack.c.l.b16 %v4222
    %v4615 = vunpack.c.h.b16 %v4222
    %v4616 = vunpack.c.l.b16 %v4223
    %v4617 = vunpack.c.h.b16 %v4223
    %v4618 = vunpack.c.l.b16 %v4224
    %v4619 = vunpack.c.h.b16 %v4224
    %v4620 = vunpack.c.l.b16 %v4225
    %v4621 = vunpack.c.h.b16 %v4225
    %v4622 = vunpack.c.l.b16 %v4226
    %v4623 = vunpack.c.h.b16 %v4226
    %v4624 = vunpack.c.l.b16 %v4227
    %v4625 = vunpack.c.h.b16 %v4227
    %v4626 = vunpack.c.l.b16 %v4228
    %v4627 = vunpack.c.h.b16 %v4228
    %v4628 = vunpack.c.l.b16 %v4229
    %v4629 = vunpack.c.h.b16 %v4229
    %v4630 = vunpack.c.l.b16 %v4230
    %v4631 = vunpack.c.h.b16 %v4230
    %v4632 = vunpack.c.l.b16 %v4231
    %v4633 = vunpack.c.h.b16 %v4231
    %v4634 = vunpack.c.l.b16 %v4232
    %v4635 = vunpack.c.h.b16 %v4232
    %v4636 = vunpack.c.l.b16 %v4233
    %v4637 = vunpack.c.h.b16 %v4233
    %v4638 = vunpack.c.l.b16 %v4234
    %v4639 = vunpack.c.h.b16 %v4234
    %v4640 = vunpack.c.l.b16 %v4235
    %v4641 = vunpack.c.h.b16 %v4235
    %v4642 = vpack.c.b16 %v4390, %v4386
    %v4643 = vpack.c.b16 %v4391, %v4387
    %v4644 = vpack.c.b16 %v4392, %v4388
    %v4645 = vpack.c.b16 %v4393, %v4389
    %v4646 = vpack.c.b16 %v4398, %v4394
    %v4647 = vpack.c.b16 %v4399, %v4395
    %v4648 = vpack.c.b16 %v4400, %v4396
    %v4649 = vpack.c.b16 %v4401, %v4397
    %v4650 = vpack.c.b16 %v4406, %v4402
    %v4651 = vpack.c.b16 %v4407, %v4403
    %v4652 = vpack.c.b16 %v4408, %v4404
    %v4653 = vpack.c.b16 %v4409, %v4405
    %v4654 = vpack.c.b16 %v4414, %v4410
    %v4655 = vpack.c.b16 %v4415, %v4411
    %v4656 = vpack.c.b16 %v4416, %v4412
    %v4657 = vpack.c.b16 %v4417, %v4413
    %v4658 = vpack.c.b16 %v4422, %v4418
    %v4659 = vpack.c.b16 %v4423, %v4419
    %v4660 = vpack.c.b16 %v4424, %v4420
    %v4661 = vpack.c.b16 %v4425, %v4421
    %v4662 = vpack.c.b16 %v4430, %v4426
    %v4663 = vpack.c.b16 %v4431, %v4427
    %v4664 = vpack.c.b16 %v4432, %v4428
    %v4665 = vpack.c.b16 %v4433, %v4429
    %v4666 = vpack.c.b16 %v4438, %v4434
    %v4667 = vpack.c.b16 %v4439, %v4435
    %v4668 = vpack.c.b16 %v4440, %v4436
    %v4669 = vpack.c.b16 %v4441, %v4437
    %v4670 = vpack.c.b16 %v4446, %v4442
    %v4671 = vpack.c.b16 %v4447, %v4443
    %v4672 = vpack.c.b16 %v4448, %v4444
    %v4673 = vpack.c.b16 %v4449, %v4445
    %v4674 = vpack.c.b16 %v4454, %v4450
    %v4675 = vpack.c.b16 %v4455, %v4451
    %v4676 = vpack.c.b16 %v4456, %v4452
    %v4677 = vpack.c.b16 %v4457, %v4453
    %v4678 = vpack.c.b16 %v4462, %v4458
    %v4679 = vpack.c.b16 %v4463, %v4459
    %v4680 = vpack.c.b16 %v4464, %v4460
    %v4681 = vpack.c.b16 %v4465, %v4461
    %v4682 = vpack.c.b16 %v4470, %v4466
    %v4683 = vpack.c.b16 %v4471, %v4467
    %v4684 = vpack.c.b16 %v4472, %v4468
    %v4685 = vpack.c.b16 %v4473, %v4469
    %v4686 = vpack.c.b16 %v4478, %v4474
    %v4687 = vpack.c.b16 %v4479, %v4475
    %v4688 = vpack.c.b16 %v4480, %v4476
    %v4689 = vpack.c.b16 %v4481, %v4477
    %v4690 = vpack.c.b16 %v4486, %v4482
    %v4691 = vpack.c.b16 %v4487, %v4483
    %v4692 = vpack.c.b16 %v4488, %v4484
    %v4693 = vpack.c.b16 %v4489, %v4485
    %v4694 = vpack.c.b16 %v4494, %v4490
    %v4695 = vpack.c.b16 %v4495, %v4491
    %v4696 = vpack.c.b16 %v4496, %v4492
    %v4697 = vpack.c.b16 %v4497, %v4493
    %v4698 = vpack.c.b16 %v4502, %v4498
    %v4699 = vpack.c.b16 %v4503, %v4499
    %v4700 = vpack.c.b16 %v4504, %v4500
    %v4701 = vpack.c.b16 %v4505, %v4501
    %v4702 = vpack.c.b16 %v4510, %v4506
    %v4703 = vpack.c.b16 %v4511, %v4507
    %v4704 = vpack.c.b16 %v4512, %v4508
    %v4705 = vpack.c.b16 %v4513, %v4509
    %v4706 = vpack.c.b16 %v4518, %v4514
    %v4707 = vpack.c.b16 %v4519, %v4515
    %v4708 = vpack.c.b16 %v4520, %v4516
    %v4709 = vpack.c.b16 %v4521, %v4517
    %v4710 = vpack.c.b16 %v4526, %v4522
    %v4711 = vpack.c.b16 %v4527, %v4523
    %v4712 = vpack.c.b16 %v4528, %v4524
    %v4713 = vpack.c.b16 %v4529, %v4525
    %v4714 = vpack.c.b16 %v4534, %v4530
    %v4715 = vpack.c.b16 %v4535, %v4531
    %v4716 = vpack.c.b16 %v4536, %v4532
    %v4717 = vpack.c.b16 %v4537, %v4533
    %v4718 = vpack.c.b16 %v4542, %v4538
    %v4719 = vpack.c.b16 %v4543, %v4539
    %v4720 = vpack.c.b16 %v4544, %v4540
    %v4721 = vpack.c.b16 %v4545, %v4541
    %v4722 = vpack.c.b16 %v4550, %v4546
    %v4723 = vpack.c.b16 %v4551, %v4547
    %v4724 = vpack.c.b16 %v4552, %v4548
    %v4725 = vpack.c.b16 %v4553, %v4549
    %v4726 = vpack.c.b16 %v4558, %v4554
    %v4727 = vpack.c.b16 %v4559, %v4555
    %v4728 = vpack.c.b16 %v4560, %v4556
    %v4729 = vpack.c.b16 %v4561, %v4557
    %v4730 = vpack.c.b16 %v4566, %v4562
    %v4731 = vpack.c.b16 %v4567, %v4563
    %v4732 = vpack.c.b16 %v4568, %v4564
    %v4733 = vpack.c.b16 %v4569, %v4565
    %v4734 = vpack.c.b16 %v4574, %v4570
    %v4735 = vpack.c.b16 %v4575, %v4571
    %v4736 = vpack.c.b16 %v4576, %v4572
    %v4737 = vpack.c.b16 %v4577, %v4573
    %v4738 = vpack.c.b16 %v4582, %v4578
    %v4739 = vpack.c.b16 %v4583, %v4579
    %v4740 = vpack.c.b16 %v4584, %v4580
    %v4741 = vpack.c.b16 %v4585, %v4581
    %v4742 = vpack.c.b16 %v4590, %v4586
    %v4743 = vpack.c.b16 %v4591, %v4587
    %v4744 = vpack.c.b16 %v4592, %v4588
    %v4745 = vpack.c.b16 %v4593, %v4589
    %v4746 = vpack.c.b16 %v4598, %v4594
    %v4747 = vpack.c.b16 %v4599, %v4595
    %v4748 = vpack.c.b16 %v4600, %v4596
    %v4749 = vpack.c.b16 %v4601, %v4597
    %v4750 = vpack.c.b16 %v4606, %v4602
    %v4751 = vpack.c.b16 %v4607, %v4603
    %v4752 = vpack.c.b16 %v4608, %v4604
    %v4753 = vpack.c.b16 %v4609, %v4605
    %v4754 = vpack.c.b16 %v4614, %v4610
    %v4755 = vpack.c.b16 %v4615, %v4611
    %v4756 = vpack.c.b16 %v4616, %v4612
    %v4757 = vpack.c.b16 %v4617, %v4613
    %v4758 = vpack.c.b16 %v4622, %v4618
    %v4759 = vpack.c.b16 %v4623, %v4619
    %v4760 = vpack.c.b16 %v4624, %v4620
    %v4761 = vpack.c.b16 %v4625, %v4621
    %v4762 = vpack.c.b16 %v4630, %v4626
    %v4763 = vpack.c.b16 %v4631, %v4627
    %v4764 = vpack.c.b16 %v4632, %v4628
    %v4765 = vpack.c.b16 %v4633, %v4629
    %v4766 = vpack.c.b16 %v4638, %v4634
    %v4767 = vpack.c.b16 %v4639, %v4635
    %v4768 = vpack.c.b16 %v4640, %v4636
    %v4769 = vpack.c.b16 %v4641, %v4637
    %4898 = vmatprep.subr.bf16.mxu0 %v4643
    %4899 = vmatpush1.bf16.msra.mxu0 %v4642
    %4900 = vmatprep.subr.bf16.mxu0 %v4647
    %4901 = vmatpush1.bf16.msra.mxu0 %v4646
    %4902 = vmatprep.subr.bf16.mxu0 %v4651
    %4903 = vmatpush1.bf16.msra.mxu0 %v4650
    %4904 = vmatprep.subr.bf16.mxu0 %v4655
    %4905 = vmatpush1.bf16.msra.mxu0 %v4654
    %4906 = vmatprep.subr.bf16.mxu0 %v4659
    %4907 = vmatpush1.bf16.msra.mxu0 %v4658
    %4908 = vmatprep.subr.bf16.mxu0 %v4663
    %4909 = vmatpush1.bf16.msra.mxu0 %v4662
    %4910 = vmatprep.subr.bf16.mxu0 %v4667
    %4911 = vmatpush1.bf16.msra.mxu0 %v4666
    %4912 = vmatprep.subr.bf16.mxu0 %v4671
    %4913 = vmatpush1.bf16.msra.mxu0 %v4670
    %4914 = vmatprep.subr.bf16.mxu0 %v4675
    %4915 = vmatpush1.bf16.msra.mxu0 %v4674
    %4916 = vmatprep.subr.bf16.mxu0 %v4679
    %4917 = vmatpush1.bf16.msra.mxu0 %v4678
    %4918 = vmatprep.subr.bf16.mxu0 %v4683
    %4919 = vmatpush1.bf16.msra.mxu0 %v4682
    %4920 = vmatprep.subr.bf16.mxu0 %v4687
    %4921 = vmatpush1.bf16.msra.mxu0 %v4686
    %4922 = vmatprep.subr.bf16.mxu0 %v4691
    %4923 = vmatpush1.bf16.msra.mxu0 %v4690
    %4924 = vmatprep.subr.bf16.mxu0 %v4695
    %4925 = vmatpush1.bf16.msra.mxu0 %v4694
    %4926 = vmatprep.subr.bf16.mxu0 %v4699
    %4927 = vmatpush1.bf16.msra.mxu0 %v4698
    %4928 = vmatprep.subr.bf16.mxu0 %v4703
    %4929 = vmatpush1.bf16.msra.mxu0 %v4702
    %4930 = vmatprep.mubr.bf16.mxu0 %v4105
    %4931 = vmatmul.mubr.bf16.gmra.mrb[0].mxu0 %v4104
    %v4932 = vpop.f32.mrb[0].mxu0
    %v4933 = vadd.f32 %v4241, %v4932
    %v4934 = vpop.f32.mrb[0].mxu0
    %v4935 = vadd.f32 %v4245, %v4934
    %v4936 = vpop.f32.mrb[0].mxu0
    %v4937 = vadd.f32 %v4241, %v4936
    %v4938 = vpop.f32.mrb[0].mxu0
    %v4939 = vadd.f32 %v4245, %v4938
    %4940 = vdwg.mxu0
    %4941 = vmatprep.subr.bf16.mxu0 %v4707
    %4942 = vmatpush1.bf16.msra.mxu0 %v4706
    %4943 = vmatprep.subr.bf16.mxu0 %v4711
    %4944 = vmatpush1.bf16.msra.mxu0 %v4710
    %4945 = vmatprep.subr.bf16.mxu0 %v4715
    %4946 = vmatpush1.bf16.msra.mxu0 %v4714
    %4947 = vmatprep.subr.bf16.mxu0 %v4719
    %4948 = vmatpush1.bf16.msra.mxu0 %v4718
    %4949 = vmatprep.subr.bf16.mxu0 %v4723
    %4950 = vmatpush1.bf16.msra.mxu0 %v4722
    %4951 = vmatprep.subr.bf16.mxu0 %v4727
    %4952 = vmatpush1.bf16.msra.mxu0 %v4726
    %4953 = vmatprep.subr.bf16.mxu0 %v4731
    %4954 = vmatpush1.bf16.msra.mxu0 %v4730
    %4955 = vmatprep.subr.bf16.mxu0 %v4735
    %4956 = vmatpush1.bf16.msra.mxu0 %v4734
    %4957 = vmatprep.subr.bf16.mxu0 %v4739
    %4958 = vmatpush1.bf16.msra.mxu0 %v4738
    %4959 = vmatprep.subr.bf16.mxu0 %v4743
    %4960 = vmatpush1.bf16.msra.mxu0 %v4742
    %4961 = vmatprep.subr.bf16.mxu0 %v4747
    %4962 = vmatpush1.bf16.msra.mxu0 %v4746
    %4963 = vmatprep.subr.bf16.mxu0 %v4751
    %4964 = vmatpush1.bf16.msra.mxu0 %v4750
    %4965 = vmatprep.subr.bf16.mxu0 %v4755
    %4966 = vmatpush1.bf16.msra.mxu0 %v4754
    %4967 = vmatprep.subr.bf16.mxu0 %v4759
    %4968 = vmatpush1.bf16.msra.mxu0 %v4758
    %4969 = vmatprep.subr.bf16.mxu0 %v4763
    %4970 = vmatpush1.bf16.msra.mxu0 %v4762
    %4971 = vmatprep.subr.bf16.mxu0 %v4767
    %4972 = vmatpush1.bf16.msra.mxu0 %v4766
    %4973 = vmatprep.mubr.bf16.mxu0 %v4107
    %4974 = vmatmul.mubr.bf16.gmra.mrb[0].mxu0 %v4106
    %v4975 = vpop.f32.mrb[0].mxu0
    %v4976 = vadd.f32 %v4933, %v4975
    %v4977 = vpop.f32.mrb[0].mxu0
    %v4978 = vadd.f32 %v4935, %v4977
    %v4979 = vpop.f32.mrb[0].mxu0
    %v4980 = vadd.f32 %v4937, %v4979
    %v4981 = vpop.f32.mrb[0].mxu0
    %v4982 = vadd.f32 %v4939, %v4981
    %4983 = vdwg.mxu0
    %4984 = vmatprep.subr.bf16.mxu0 %v4645
    %4985 = vmatpush1.bf16.msra.mxu0 %v4644
    %4986 = vmatprep.subr.bf16.mxu0 %v4649
    %4987 = vmatpush1.bf16.msra.mxu0 %v4648
    %4988 = vmatprep.subr.bf16.mxu0 %v4653
    %4989 = vmatpush1.bf16.msra.mxu0 %v4652
    %4990 = vmatprep.subr.bf16.mxu0 %v4657
    %4991 = vmatpush1.bf16.msra.mxu0 %v4656
    %4992 = vmatprep.subr.bf16.mxu0 %v4661
    %4993 = vmatpush1.bf16.msra.mxu0 %v4660
    %4994 = vmatprep.subr.bf16.mxu0 %v4665
    %4995 = vmatpush1.bf16.msra.mxu0 %v4664
    %4996 = vmatprep.subr.bf16.mxu0 %v4669
    %4997 = vmatpush1.bf16.msra.mxu0 %v4668
    %4998 = vmatprep.subr.bf16.mxu0 %v4673
    %4999 = vmatpush1.bf16.msra.mxu0 %v4672
    %5000 = vmatprep.subr.bf16.mxu0 %v4677
    %5001 = vmatpush1.bf16.msra.mxu0 %v4676
    %5002 = vmatprep.subr.bf16.mxu0 %v4681
    %5003 = vmatpush1.bf16.msra.mxu0 %v4680
    %5004 = vmatprep.subr.bf16.mxu0 %v4685
    %5005 = vmatpush1.bf16.msra.mxu0 %v4684
    %5006 = vmatprep.subr.bf16.mxu0 %v4689
    %5007 = vmatpush1.bf16.msra.mxu0 %v4688
    %5008 = vmatprep.subr.bf16.mxu0 %v4693
    %5009 = vmatpush1.bf16.msra.mxu0 %v4692
    %5010 = vmatprep.subr.bf16.mxu0 %v4697
    %5011 = vmatpush1.bf16.msra.mxu0 %v4696
    %5012 = vmatprep.subr.bf16.mxu0 %v4701
    %5013 = vmatpush1.bf16.msra.mxu0 %v4700
    %5014 = vmatprep.subr.bf16.mxu0 %v4705
    %5015 = vmatpush1.bf16.msra.mxu0 %v4704
    %5016 = vmatprep.mubr.bf16.mxu0 %v4105
    %5017 = vmatmul.mubr.bf16.gmra.mrb[0].mxu0 %v4104
    %v5018 = vpop.f32.mrb[0].mxu0
    %v5019 = vadd.f32 %v4249, %v5018
    %v5020 = vpop.f32.mrb[0].mxu0
    %v5021 = vadd.f32 %v4253, %v5020
    %v5022 = vpop.f32.mrb[0].mxu0
    %v5023 = vadd.f32 %v4249, %v5022
    %v5024 = vpop.f32.mrb[0].mxu0
    %v5025 = vadd.f32 %v4253, %v5024
    %5026 = vdwg.mxu0
    %5027 = vmatprep.subr.bf16.mxu0 %v4709
    %5028 = vmatpush1.bf16.msra.mxu0 %v4708
    %5029 = vmatprep.subr.bf16.mxu0 %v4713
    %5030 = vmatpush1.bf16.msra.mxu0 %v4712
    %5031 = vmatprep.subr.bf16.mxu0 %v4717
    %5032 = vmatpush1.bf16.msra.mxu0 %v4716
    %5033 = vmatprep.subr.bf16.mxu0 %v4721
    %5034 = vmatpush1.bf16.msra.mxu0 %v4720
    %5035 = vmatprep.subr.bf16.mxu0 %v4725
    %5036 = vmatpush1.bf16.msra.mxu0 %v4724
    %5037 = vmatprep.subr.bf16.mxu0 %v4729
    %5038 = vmatpush1.bf16.msra.mxu0 %v4728
    %5039 = vmatprep.subr.bf16.mxu0 %v4733
    %5040 = vmatpush1.bf16.msra.mxu0 %v4732
    %5041 = vmatprep.subr.bf16.mxu0 %v4737
    %5042 = vmatpush1.bf16.msra.mxu0 %v4736
    %5043 = vmatprep.subr.bf16.mxu0 %v4741
    %5044 = vmatpush1.bf16.msra.mxu0 %v4740
    %5045 = vmatprep.subr.bf16.mxu0 %v4745
    %5046 = vmatpush1.bf16.msra.mxu0 %v4744
    %5047 = vmatprep.subr.bf16.mxu0 %v4749
    %5048 = vmatpush1.bf16.msra.mxu0 %v4748
    %5049 = vmatprep.subr.bf16.mxu0 %v4753
    %5050 = vmatpush1.bf16.msra.mxu0 %v4752
    %5051 = vmatprep.subr.bf16.mxu0 %v4757
    %5052 = vmatpush1.bf16.msra.mxu0 %v4756
    %5053 = vmatprep.subr.bf16.mxu0 %v4761
    %5054 = vmatpush1.bf16.msra.mxu0 %v4760
    %5055 = vmatprep.subr.bf16.mxu0 %v4765
    %5056 = vmatpush1.bf16.msra.mxu0 %v4764
    %5057 = vmatprep.subr.bf16.mxu0 %v4769
    %5058 = vmatpush1.bf16.msra.mxu0 %v4768
    %5059 = vmatprep.mubr.bf16.mxu0 %v4107
    %5060 = vmatmul.mubr.bf16.gmra.mrb[0].mxu0 %v4106
    %v5061 = vpop.f32.mrb[0].mxu0
    %v5062 = vadd.f32 %v5019, %v5061
    %v5063 = vpop.f32.mrb[0].mxu0
    %v5064 = vadd.f32 %v5021, %v5063
    %v5065 = vpop.f32.mrb[0].mxu0
    %v5066 = vadd.f32 %v5023, %v5065
    %v5067 = vpop.f32.mrb[0].mxu0
    %v5068 = vadd.f32 %v5025, %v5067
    %5069 = vdwg.mxu0
    %v5070 = vmax.f32 %v4976, 0.0
    %v5071 = vmax.f32 %v4978, 0.0
    %v5072 = vmax.f32 %v5062, 0.0
    %v5073 = vmax.f32 %v5064, 0.0
    %v5074 = vmax.f32 %v4980, 0.0
    %v5075 = vmax.f32 %v4982, 0.0
    %v5076 = vmax.f32 %v5066, 0.0
    %v5077 = vmax.f32 %v5068, 0.0
    %v5078 = vpack.c.bf16 %v5074, %v5070
    %v5079 = vpack.c.bf16 %v5075, %v5071
    %v5080 = vpack.c.bf16 %v5076, %v5072
    %v5081 = vpack.c.bf16 %v5077, %v5073
    %v5082 = vld [vmem:[%s9] sm:$0xff]
    %v5083 = vld [vmem:[%s9 + $0x8] sm:$0xff]
    %v5084 = vld [vmem:[%s9 + $0x10] sm:$0xff]
    %v5085 = vld [vmem:[%s9 + $0x18] sm:$0xff]
    %v5086 = vld [vmem:[%s9 + $0x20] sm:$0xff]
    %v5087 = vld [vmem:[%s9 + $0x28] sm:$0xff]
    %v5088 = vld [vmem:[%s9 + $0x30] sm:$0xff]
    %v5089 = vld [vmem:[%s9 + $0x38] sm:$0xff]
    %v5090 = vld [vmem:[%s9 + $0x40] sm:$0xff]
    %v5091 = vld [vmem:[%s9 + $0x48] sm:$0xff]
    %v5092 = vld [vmem:[%s9 + $0x50] sm:$0xff]
    %v5093 = vld [vmem:[%s9 + $0x58] sm:$0xff]
    %v5094 = vld [vmem:[%s9 + $0x60] sm:$0xff]
    %v5095 = vld [vmem:[%s9 + $0x68] sm:$0xff]
    %v5096 = vld [vmem:[%s9 + $0x70] sm:$0xff]
    %v5097 = vld [vmem:[%s9 + $0x78] sm:$0xff]
    %v5098 = vld [vmem:[%s9 + $0x80] sm:$0xff]
    %v5099 = vld [vmem:[%s9 + $0x88] sm:$0xff]
    %v5100 = vld [vmem:[%s9 + $0x90] sm:$0xff]
    %v5101 = vld [vmem:[%s9 + $0x98] sm:$0xff]
    %v5102 = vld [vmem:[%s9 + $0xa0] sm:$0xff]
    %v5103 = vld [vmem:[%s9 + $0xa8] sm:$0xff]
    %v5104 = vld [vmem:[%s9 + $0xb0] sm:$0xff]
    %v5105 = vld [vmem:[%s9 + $0xb8] sm:$0xff]
    %v5106 = vld [vmem:[%s9 + $0xc0] sm:$0xff]
    %v5107 = vld [vmem:[%s9 + $0xc8] sm:$0xff]
    %v5108 = vld [vmem:[%s9 + $0xd0] sm:$0xff]
    %v5109 = vld [vmem:[%s9 + $0xd8] sm:$0xff]
    %v5110 = vld [vmem:[%s9 + $0xe0] sm:$0xff]
    %v5111 = vld [vmem:[%s9 + $0xe8] sm:$0xff]
    %v5112 = vld [vmem:[%s9 + $0xf0] sm:$0xff]
    %v5113 = vld [vmem:[%s9 + $0xf8] sm:$0xff]
    %v5114 = vld [vmem:[%s9 + $0x100] sm:$0xff]
    %v5115 = vld [vmem:[%s9 + $0x108] sm:$0xff]
    %v5116 = vld [vmem:[%s9 + $0x110] sm:$0xff]
    %v5117 = vld [vmem:[%s9 + $0x118] sm:$0xff]
    %v5118 = vld [vmem:[%s9 + $0x120] sm:$0xff]
    %v5119 = vld [vmem:[%s9 + $0x128] sm:$0xff]
    %v5120 = vld [vmem:[%s9 + $0x130] sm:$0xff]
    %v5121 = vld [vmem:[%s9 + $0x138] sm:$0xff]
    %v5122 = vld [vmem:[%s9 + $0x140] sm:$0xff]
    %v5123 = vld [vmem:[%s9 + $0x148] sm:$0xff]
    %v5124 = vld [vmem:[%s9 + $0x150] sm:$0xff]
    %v5125 = vld [vmem:[%s9 + $0x158] sm:$0xff]
    %v5126 = vld [vmem:[%s9 + $0x160] sm:$0xff]
    %v5127 = vld [vmem:[%s9 + $0x168] sm:$0xff]
    %v5128 = vld [vmem:[%s9 + $0x170] sm:$0xff]
    %v5129 = vld [vmem:[%s9 + $0x178] sm:$0xff]
    %v5130 = vld [vmem:[%s9 + $0x180] sm:$0xff]
    %v5131 = vld [vmem:[%s9 + $0x188] sm:$0xff]
    %v5132 = vld [vmem:[%s9 + $0x190] sm:$0xff]
    %v5133 = vld [vmem:[%s9 + $0x198] sm:$0xff]
    %v5134 = vld [vmem:[%s9 + $0x1a0] sm:$0xff]
    %v5135 = vld [vmem:[%s9 + $0x1a8] sm:$0xff]
    %v5136 = vld [vmem:[%s9 + $0x1b0] sm:$0xff]
    %v5137 = vld [vmem:[%s9 + $0x1b8] sm:$0xff]
    %v5138 = vld [vmem:[%s9 + $0x1c0] sm:$0xff]
    %v5139 = vld [vmem:[%s9 + $0x1c8] sm:$0xff]
    %v5140 = vld [vmem:[%s9 + $0x1d0] sm:$0xff]
    %v5141 = vld [vmem:[%s9 + $0x1d8] sm:$0xff]
    %v5142 = vld [vmem:[%s9 + $0x1e0] sm:$0xff]
    %v5143 = vld [vmem:[%s9 + $0x1e8] sm:$0xff]
    %v5144 = vld [vmem:[%s9 + $0x1f0] sm:$0xff]
    %v5145 = vld [vmem:[%s9 + $0x1f8] sm:$0xff]
    %v5146 = vld [vmem:[%s9 + $0x200] sm:$0xff]
    %v5147 = vld [vmem:[%s9 + $0x208] sm:$0xff]
    %v5148 = vld [vmem:[%s9 + $0x210] sm:$0xff]
    %v5149 = vld [vmem:[%s9 + $0x218] sm:$0xff]
    %v5150 = vld [vmem:[%s9 + $0x220] sm:$0xff]
    %v5151 = vld [vmem:[%s9 + $0x228] sm:$0xff]
    %v5152 = vld [vmem:[%s9 + $0x230] sm:$0xff]
    %v5153 = vld [vmem:[%s9 + $0x238] sm:$0xff]
    %v5154 = vld [vmem:[%s9 + $0x240] sm:$0xff]
    %v5155 = vld [vmem:[%s9 + $0x248] sm:$0xff]
    %v5156 = vld [vmem:[%s9 + $0x250] sm:$0xff]
    %v5157 = vld [vmem:[%s9 + $0x258] sm:$0xff]
    %v5158 = vld [vmem:[%s9 + $0x260] sm:$0xff]
    %v5159 = vld [vmem:[%s9 + $0x268] sm:$0xff]
    %v5160 = vld [vmem:[%s9 + $0x270] sm:$0xff]
    %v5161 = vld [vmem:[%s9 + $0x278] sm:$0xff]
    %v5162 = vld [vmem:[%s9 + $0x280] sm:$0xff]
    %v5163 = vld [vmem:[%s9 + $0x288] sm:$0xff]
    %v5164 = vld [vmem:[%s9 + $0x290] sm:$0xff]
    %v5165 = vld [vmem:[%s9 + $0x298] sm:$0xff]
    %v5166 = vld [vmem:[%s9 + $0x2a0] sm:$0xff]
    %v5167 = vld [vmem:[%s9 + $0x2a8] sm:$0xff]
    %v5168 = vld [vmem:[%s9 + $0x2b0] sm:$0xff]
    %v5169 = vld [vmem:[%s9 + $0x2b8] sm:$0xff]
    %v5170 = vld [vmem:[%s9 + $0x2c0] sm:$0xff]
    %v5171 = vld [vmem:[%s9 + $0x2c8] sm:$0xff]
    %v5172 = vld [vmem:[%s9 + $0x2d0] sm:$0xff]
    %v5173 = vld [vmem:[%s9 + $0x2d8] sm:$0xff]
    %v5174 = vld [vmem:[%s9 + $0x2e0] sm:$0xff]
    %v5175 = vld [vmem:[%s9 + $0x2e8] sm:$0xff]
    %v5176 = vld [vmem:[%s9 + $0x2f0] sm:$0xff]
    %v5177 = vld [vmem:[%s9 + $0x2f8] sm:$0xff]
    %v5178 = vld [vmem:[%s9 + $0x300] sm:$0xff]
    %v5179 = vld [vmem:[%s9 + $0x308] sm:$0xff]
    %v5180 = vld [vmem:[%s9 + $0x310] sm:$0xff]
    %v5181 = vld [vmem:[%s9 + $0x318] sm:$0xff]
    %v5182 = vld [vmem:[%s9 + $0x320] sm:$0xff]
    %v5183 = vld [vmem:[%s9 + $0x328] sm:$0xff]
    %v5184 = vld [vmem:[%s9 + $0x330] sm:$0xff]
    %v5185 = vld [vmem:[%s9 + $0x338] sm:$0xff]
    %v5186 = vld [vmem:[%s9 + $0x340] sm:$0xff]
    %v5187 = vld [vmem:[%s9 + $0x348] sm:$0xff]
    %v5188 = vld [vmem:[%s9 + $0x350] sm:$0xff]
    %v5189 = vld [vmem:[%s9 + $0x358] sm:$0xff]
    %v5190 = vld [vmem:[%s9 + $0x360] sm:$0xff]
    %v5191 = vld [vmem:[%s9 + $0x368] sm:$0xff]
    %v5192 = vld [vmem:[%s9 + $0x370] sm:$0xff]
    %v5193 = vld [vmem:[%s9 + $0x378] sm:$0xff]
    %v5194 = vld [vmem:[%s9 + $0x380] sm:$0xff]
    %v5195 = vld [vmem:[%s9 + $0x388] sm:$0xff]
    %v5196 = vld [vmem:[%s9 + $0x390] sm:$0xff]
    %v5197 = vld [vmem:[%s9 + $0x398] sm:$0xff]
    %v5198 = vld [vmem:[%s9 + $0x3a0] sm:$0xff]
    %v5199 = vld [vmem:[%s9 + $0x3a8] sm:$0xff]
    %v5200 = vld [vmem:[%s9 + $0x3b0] sm:$0xff]
    %v5201 = vld [vmem:[%s9 + $0x3b8] sm:$0xff]
    %v5202 = vld [vmem:[%s9 + $0x3c0] sm:$0xff]
    %v5203 = vld [vmem:[%s9 + $0x3c8] sm:$0xff]
    %v5204 = vld [vmem:[%s9 + $0x3d0] sm:$0xff]
    %v5205 = vld [vmem:[%s9 + $0x3d8] sm:$0xff]
    %v5206 = vld [vmem:[%s9 + $0x3e0] sm:$0xff]
    %v5207 = vld [vmem:[%s9 + $0x3e8] sm:$0xff]
    %v5208 = vld [vmem:[%s9 + $0x3f0] sm:$0xff]
    %v5209 = vld [vmem:[%s9 + $0x3f8] sm:$0xff]
    %v5210 = vld [vmem:[%s9 + $0x400] sm:$0xff]
    %v5211 = vld [vmem:[%s9 + $0x408] sm:$0xff]
    %v5212 = vld [vmem:[%s9 + $0x410] sm:$0xff]
    %v5213 = vld [vmem:[%s9 + $0x418] sm:$0xff]
    %v5214 = vld [vmem:[%s9 + $0x420] sm:$0xff]
    %v5215 = vld [vmem:[%s9 + $0x428] sm:$0xff]
    %v5216 = vld [vmem:[%s9 + $0x430] sm:$0xff]
    %v5217 = vld [vmem:[%s9 + $0x438] sm:$0xff]
    %v5218 = vld [vmem:[%s9 + $0x440] sm:$0xff]
    %v5219 = vld [vmem:[%s9 + $0x448] sm:$0xff]
    %v5220 = vld [vmem:[%s9 + $0x450] sm:$0xff]
    %v5221 = vld [vmem:[%s9 + $0x458] sm:$0xff]
    %v5222 = vld [vmem:[%s9 + $0x460] sm:$0xff]
    %v5223 = vld [vmem:[%s9 + $0x468] sm:$0xff]
    %v5224 = vld [vmem:[%s9 + $0x470] sm:$0xff]
    %v5225 = vld [vmem:[%s9 + $0x478] sm:$0xff]
    %v5226 = vld [vmem:[%s9 + $0x480] sm:$0xff]
    %v5227 = vld [vmem:[%s9 + $0x488] sm:$0xff]
    %v5228 = vld [vmem:[%s9 + $0x490] sm:$0xff]
    %v5229 = vld [vmem:[%s9 + $0x498] sm:$0xff]
    %v5230 = vld [vmem:[%s9 + $0x4a0] sm:$0xff]
    %v5231 = vld [vmem:[%s9 + $0x4a8] sm:$0xff]
    %v5232 = vld [vmem:[%s9 + $0x4b0] sm:$0xff]
    %v5233 = vld [vmem:[%s9 + $0x4b8] sm:$0xff]
    %v5234 = vld [vmem:[%s9 + $0x4c0] sm:$0xff]
    %v5235 = vld [vmem:[%s9 + $0x4c8] sm:$0xff]
    %v5236 = vld [vmem:[%s9 + $0x4d0] sm:$0xff]
    %v5237 = vld [vmem:[%s9 + $0x4d8] sm:$0xff]
    %v5238 = vld [vmem:[%s9 + $0x4e0] sm:$0xff]
    %v5239 = vld [vmem:[%s9 + $0x4e8] sm:$0xff]
    %v5240 = vld [vmem:[%s9 + $0x4f0] sm:$0xff]
    %v5241 = vld [vmem:[%s9 + $0x4f8] sm:$0xff]
    %v5242 = vld [vmem:[%s9 + $0x500] sm:$0xff]
    %v5243 = vld [vmem:[%s9 + $0x508] sm:$0xff]
    %v5244 = vld [vmem:[%s9 + $0x510] sm:$0xff]
    %v5245 = vld [vmem:[%s9 + $0x518] sm:$0xff]
    %v5246 = vld [vmem:[%s9 + $0x520] sm:$0xff]
    %v5247 = vld [vmem:[%s9 + $0x528] sm:$0xff]
    %v5248 = vld [vmem:[%s9 + $0x530] sm:$0xff]
    %v5249 = vld [vmem:[%s9 + $0x538] sm:$0xff]
    %v5250 = vld [vmem:[%s9 + $0x540] sm:$0xff]
    %v5251 = vld [vmem:[%s9 + $0x548] sm:$0xff]
    %v5252 = vld [vmem:[%s9 + $0x550] sm:$0xff]
    %v5253 = vld [vmem:[%s9 + $0x558] sm:$0xff]
    %v5254 = vld [vmem:[%s9 + $0x560] sm:$0xff]
    %v5255 = vld [vmem:[%s9 + $0x568] sm:$0xff]
    %v5256 = vld [vmem:[%s9 + $0x570] sm:$0xff]
    %v5257 = vld [vmem:[%s9 + $0x578] sm:$0xff]
    %v5258 = vld [vmem:[%s9 + $0x580] sm:$0xff]
    %v5259 = vld [vmem:[%s9 + $0x588] sm:$0xff]
    %v5260 = vld [vmem:[%s9 + $0x590] sm:$0xff]
    %v5261 = vld [vmem:[%s9 + $0x598] sm:$0xff]
    %v5262 = vld [vmem:[%s9 + $0x5a0] sm:$0xff]
    %v5263 = vld [vmem:[%s9 + $0x5a8] sm:$0xff]
    %v5264 = vld [vmem:[%s9 + $0x5b0] sm:$0xff]
    %v5265 = vld [vmem:[%s9 + $0x5b8] sm:$0xff]
    %v5266 = vld [vmem:[%s9 + $0x5c0] sm:$0xff]
    %v5267 = vld [vmem:[%s9 + $0x5c8] sm:$0xff]
    %v5268 = vld [vmem:[%s9 + $0x5d0] sm:$0xff]
    %v5269 = vld [vmem:[%s9 + $0x5d8] sm:$0xff]
    %v5270 = vld [vmem:[%s9 + $0x5e0] sm:$0xff]
    %v5271 = vld [vmem:[%s9 + $0x5e8] sm:$0xff]
    %v5272 = vld [vmem:[%s9 + $0x5f0] sm:$0xff]
    %v5273 = vld [vmem:[%s9 + $0x5f8] sm:$0xff]
    %v5274 = vld [vmem:[%s9 + $0x600] sm:$0xff]
    %v5275 = vld [vmem:[%s9 + $0x608] sm:$0xff]
    %v5276 = vld [vmem:[%s9 + $0x610] sm:$0xff]
    %v5277 = vld [vmem:[%s9 + $0x618] sm:$0xff]
    %v5278 = vld [vmem:[%s9 + $0x620] sm:$0xff]
    %v5279 = vld [vmem:[%s9 + $0x628] sm:$0xff]
    %v5280 = vld [vmem:[%s9 + $0x630] sm:$0xff]
    %v5281 = vld [vmem:[%s9 + $0x638] sm:$0xff]
    %v5282 = vld [vmem:[%s9 + $0x640] sm:$0xff]
    %v5283 = vld [vmem:[%s9 + $0x648] sm:$0xff]
    %v5284 = vld [vmem:[%s9 + $0x650] sm:$0xff]
    %v5285 = vld [vmem:[%s9 + $0x658] sm:$0xff]
    %v5286 = vld [vmem:[%s9 + $0x660] sm:$0xff]
    %v5287 = vld [vmem:[%s9 + $0x668] sm:$0xff]
    %v5288 = vld [vmem:[%s9 + $0x670] sm:$0xff]
    %v5289 = vld [vmem:[%s9 + $0x678] sm:$0xff]
    %v5290 = vld [vmem:[%s9 + $0x680] sm:$0xff]
    %v5291 = vld [vmem:[%s9 + $0x688] sm:$0xff]
    %v5292 = vld [vmem:[%s9 + $0x690] sm:$0xff]
    %v5293 = vld [vmem:[%s9 + $0x698] sm:$0xff]
    %v5294 = vld [vmem:[%s9 + $0x6a0] sm:$0xff]
    %v5295 = vld [vmem:[%s9 + $0x6a8] sm:$0xff]
    %v5296 = vld [vmem:[%s9 + $0x6b0] sm:$0xff]
    %v5297 = vld [vmem:[%s9 + $0x6b8] sm:$0xff]
    %v5298 = vld [vmem:[%s9 + $0x6c0] sm:$0xff]
    %v5299 = vld [vmem:[%s9 + $0x6c8] sm:$0xff]
    %v5300 = vld [vmem:[%s9 + $0x6d0] sm:$0xff]
    %v5301 = vld [vmem:[%s9 + $0x6d8] sm:$0xff]
    %v5302 = vld [vmem:[%s9 + $0x6e0] sm:$0xff]
    %v5303 = vld [vmem:[%s9 + $0x6e8] sm:$0xff]
    %v5304 = vld [vmem:[%s9 + $0x6f0] sm:$0xff]
    %v5305 = vld [vmem:[%s9 + $0x6f8] sm:$0xff]
    %v5306 = vld [vmem:[%s9 + $0x700] sm:$0xff]
    %v5307 = vld [vmem:[%s9 + $0x708] sm:$0xff]
    %v5308 = vld [vmem:[%s9 + $0x710] sm:$0xff]
    %v5309 = vld [vmem:[%s9 + $0x718] sm:$0xff]
    %v5310 = vld [vmem:[%s9 + $0x720] sm:$0xff]
    %v5311 = vld [vmem:[%s9 + $0x728] sm:$0xff]
    %v5312 = vld [vmem:[%s9 + $0x730] sm:$0xff]
    %v5313 = vld [vmem:[%s9 + $0x738] sm:$0xff]
    %v5314 = vld [vmem:[%s9 + $0x740] sm:$0xff]
    %v5315 = vld [vmem:[%s9 + $0x748] sm:$0xff]
    %v5316 = vld [vmem:[%s9 + $0x750] sm:$0xff]
    %v5317 = vld [vmem:[%s9 + $0x758] sm:$0xff]
    %v5318 = vld [vmem:[%s9 + $0x760] sm:$0xff]
    %v5319 = vld [vmem:[%s9 + $0x768] sm:$0xff]
    %v5320 = vld [vmem:[%s9 + $0x770] sm:$0xff]
    %v5321 = vld [vmem:[%s9 + $0x778] sm:$0xff]
    %v5322 = vld [vmem:[%s9 + $0x780] sm:$0xff]
    %v5323 = vld [vmem:[%s9 + $0x788] sm:$0xff]
    %v5324 = vld [vmem:[%s9 + $0x790] sm:$0xff]
    %v5325 = vld [vmem:[%s9 + $0x798] sm:$0xff]
    %v5326 = vld [vmem:[%s9 + $0x7a0] sm:$0xff]
    %v5327 = vld [vmem:[%s9 + $0x7a8] sm:$0xff]
    %v5328 = vld [vmem:[%s9 + $0x7b0] sm:$0xff]
    %v5329 = vld [vmem:[%s9 + $0x7b8] sm:$0xff]
    %v5330 = vld [vmem:[%s9 + $0x7c0] sm:$0xff]
    %v5331 = vld [vmem:[%s9 + $0x7c8] sm:$0xff]
    %v5332 = vld [vmem:[%s9 + $0x7d0] sm:$0xff]
    %v5333 = vld [vmem:[%s9 + $0x7d8] sm:$0xff]
    %v5334 = vld [vmem:[%s9 + $0x7e0] sm:$0xff]
    %v5335 = vld [vmem:[%s9 + $0x7e8] sm:$0xff]
    %v5336 = vld [vmem:[%s9 + $0x7f0] sm:$0xff]
    %v5337 = vld [vmem:[%s9 + $0x7f8] sm:$0xff]
    %v5338 = vld [vmem:[%s10] sm:$0xff]
    %v5340 = vlaneseq
    %v5341 = vshrl.u32 %v5340, 7
    %v5342 = vsub.s32 0, %v5341
    %v5343 = vrot.slane %v5338, %v5342
    %v5344 = vlaneseq
    %v5345 = vshrl.u32 %v5344, 7
    %v5346 = vsub.s32 1, %v5345
    %v5347 = vrot.slane %v5338, %v5346
    %v5348 = vlaneseq
    %v5349 = vshrl.u32 %v5348, 7
    %v5350 = vsub.s32 2, %v5349
    %v5351 = vrot.slane %v5338, %v5350
    %v5352 = vlaneseq
    %v5353 = vshrl.u32 %v5352, 7
    %v5354 = vsub.s32 3, %v5353
    %v5355 = vrot.slane %v5338, %v5354
    %v5356 = vlaneseq
    %v5357 = vshrl.u32 %v5356, 7
    %v5358 = vsub.s32 4, %v5357
    %v5359 = vrot.slane %v5338, %v5358
    %v5360 = vlaneseq
    %v5361 = vshrl.u32 %v5360, 7
    %v5362 = vsub.s32 5, %v5361
    %v5363 = vrot.slane %v5338, %v5362
    %v5364 = vlaneseq
    %v5365 = vshrl.u32 %v5364, 7
    %v5366 = vsub.s32 6, %v5365
    %v5367 = vrot.slane %v5338, %v5366
    %v5368 = vlaneseq
    %v5369 = vshrl.u32 %v5368, 7
    %v5370 = vsub.s32 7, %v5369
    %v5371 = vrot.slane %v5338, %v5370
    %v5636 = vunpack.c.l.b16 %v5082
    %v5637 = vunpack.c.h.b16 %v5082
    %v5638 = vunpack.c.l.b16 %v5083
    %v5639 = vunpack.c.h.b16 %v5083
    %v5640 = vunpack.c.l.b16 %v5084
    %v5641 = vunpack.c.h.b16 %v5084
    %v5642 = vunpack.c.l.b16 %v5085
    %v5643 = vunpack.c.h.b16 %v5085
    %v5644 = vunpack.c.l.b16 %v5086
    %v5645 = vunpack.c.h.b16 %v5086
    %v5646 = vunpack.c.l.b16 %v5087
    %v5647 = vunpack.c.h.b16 %v5087
    %v5648 = vunpack.c.l.b16 %v5088
    %v5649 = vunpack.c.h.b16 %v5088
    %v5650 = vunpack.c.l.b16 %v5089
    %v5651 = vunpack.c.h.b16 %v5089
    %v5652 = vunpack.c.l.b16 %v5090
    %v5653 = vunpack.c.h.b16 %v5090
    %v5654 = vunpack.c.l.b16 %v5091
    %v5655 = vunpack.c.h.b16 %v5091
    %v5656 = vunpack.c.l.b16 %v5092
    %v5657 = vunpack.c.h.b16 %v5092
    %v5658 = vunpack.c.l.b16 %v5093
    %v5659 = vunpack.c.h.b16 %v5093
    %v5660 = vunpack.c.l.b16 %v5094
    %v5661 = vunpack.c.h.b16 %v5094
    %v5662 = vunpack.c.l.b16 %v5095
    %v5663 = vunpack.c.h.b16 %v5095
    %v5664 = vunpack.c.l.b16 %v5096
    %v5665 = vunpack.c.h.b16 %v5096
    %v5666 = vunpack.c.l.b16 %v5097
    %v5667 = vunpack.c.h.b16 %v5097
    %v5668 = vunpack.c.l.b16 %v5098
    %v5669 = vunpack.c.h.b16 %v5098
    %v5670 = vunpack.c.l.b16 %v5099
    %v5671 = vunpack.c.h.b16 %v5099
    %v5672 = vunpack.c.l.b16 %v5100
    %v5673 = vunpack.c.h.b16 %v5100
    %v5674 = vunpack.c.l.b16 %v5101
    %v5675 = vunpack.c.h.b16 %v5101
    %v5676 = vunpack.c.l.b16 %v5102
    %v5677 = vunpack.c.h.b16 %v5102
    %v5678 = vunpack.c.l.b16 %v5103
    %v5679 = vunpack.c.h.b16 %v5103
    %v5680 = vunpack.c.l.b16 %v5104
    %v5681 = vunpack.c.h.b16 %v5104
    %v5682 = vunpack.c.l.b16 %v5105
    %v5683 = vunpack.c.h.b16 %v5105
    %v5684 = vunpack.c.l.b16 %v5106
    %v5685 = vunpack.c.h.b16 %v5106
    %v5686 = vunpack.c.l.b16 %v5107
    %v5687 = vunpack.c.h.b16 %v5107
    %v5688 = vunpack.c.l.b16 %v5108
    %v5689 = vunpack.c.h.b16 %v5108
    %v5690 = vunpack.c.l.b16 %v5109
    %v5691 = vunpack.c.h.b16 %v5109
    %v5692 = vunpack.c.l.b16 %v5110
    %v5693 = vunpack.c.h.b16 %v5110
    %v5694 = vunpack.c.l.b16 %v5111
    %v5695 = vunpack.c.h.b16 %v5111
    %v5696 = vunpack.c.l.b16 %v5112
    %v5697 = vunpack.c.h.b16 %v5112
    %v5698 = vunpack.c.l.b16 %v5113
    %v5699 = vunpack.c.h.b16 %v5113
    %v5700 = vunpack.c.l.b16 %v5114
    %v5701 = vunpack.c.h.b16 %v5114
    %v5702 = vunpack.c.l.b16 %v5115
    %v5703 = vunpack.c.h.b16 %v5115
    %v5704 = vunpack.c.l.b16 %v5116
    %v5705 = vunpack.c.h.b16 %v5116
    %v5706 = vunpack.c.l.b16 %v5117
    %v5707 = vunpack.c.h.b16 %v5117
    %v5708 = vunpack.c.l.b16 %v5118
    %v5709 = vunpack.c.h.b16 %v5118
    %v5710 = vunpack.c.l.b16 %v5119
    %v5711 = vunpack.c.h.b16 %v5119
    %v5712 = vunpack.c.l.b16 %v5120
    %v5713 = vunpack.c.h.b16 %v5120
    %v5714 = vunpack.c.l.b16 %v5121
    %v5715 = vunpack.c.h.b16 %v5121
    %v5716 = vunpack.c.l.b16 %v5122
    %v5717 = vunpack.c.h.b16 %v5122
    %v5718 = vunpack.c.l.b16 %v5123
    %v5719 = vunpack.c.h.b16 %v5123
    %v5720 = vunpack.c.l.b16 %v5124
    %v5721 = vunpack.c.h.b16 %v5124
    %v5722 = vunpack.c.l.b16 %v5125
    %v5723 = vunpack.c.h.b16 %v5125
    %v5724 = vunpack.c.l.b16 %v5126
    %v5725 = vunpack.c.h.b16 %v5126
    %v5726 = vunpack.c.l.b16 %v5127
    %v5727 = vunpack.c.h.b16 %v5127
    %v5728 = vunpack.c.l.b16 %v5128
    %v5729 = vunpack.c.h.b16 %v5128
    %v5730 = vunpack.c.l.b16 %v5129
    %v5731 = vunpack.c.h.b16 %v5129
    %v5732 = vunpack.c.l.b16 %v5130
    %v5733 = vunpack.c.h.b16 %v5130
    %v5734 = vunpack.c.l.b16 %v5131
    %v5735 = vunpack.c.h.b16 %v5131
    %v5736 = vunpack.c.l.b16 %v5132
    %v5737 = vunpack.c.h.b16 %v5132
    %v5738 = vunpack.c.l.b16 %v5133
    %v5739 = vunpack.c.h.b16 %v5133
    %v5740 = vunpack.c.l.b16 %v5134
    %v5741 = vunpack.c.h.b16 %v5134
    %v5742 = vunpack.c.l.b16 %v5135
    %v5743 = vunpack.c.h.b16 %v5135
    %v5744 = vunpack.c.l.b16 %v5136
    %v5745 = vunpack.c.h.b16 %v5136
    %v5746 = vunpack.c.l.b16 %v5137
    %v5747 = vunpack.c.h.b16 %v5137
    %v5748 = vunpack.c.l.b16 %v5138
    %v5749 = vunpack.c.h.b16 %v5138
    %v5750 = vunpack.c.l.b16 %v5139
    %v5751 = vunpack.c.h.b16 %v5139
    %v5752 = vunpack.c.l.b16 %v5140
    %v5753 = vunpack.c.h.b16 %v5140
    %v5754 = vunpack.c.l.b16 %v5141
    %v5755 = vunpack.c.h.b16 %v5141
    %v5756 = vunpack.c.l.b16 %v5142
    %v5757 = vunpack.c.h.b16 %v5142
    %v5758 = vunpack.c.l.b16 %v5143
    %v5759 = vunpack.c.h.b16 %v5143
    %v5760 = vunpack.c.l.b16 %v5144
    %v5761 = vunpack.c.h.b16 %v5144
    %v5762 = vunpack.c.l.b16 %v5145
    %v5763 = vunpack.c.h.b16 %v5145
    %v5764 = vunpack.c.l.b16 %v5146
    %v5765 = vunpack.c.h.b16 %v5146
    %v5766 = vunpack.c.l.b16 %v5147
    %v5767 = vunpack.c.h.b16 %v5147
    %v5768 = vunpack.c.l.b16 %v5148
    %v5769 = vunpack.c.h.b16 %v5148
    %v5770 = vunpack.c.l.b16 %v5149
    %v5771 = vunpack.c.h.b16 %v5149
    %v5772 = vunpack.c.l.b16 %v5150
    %v5773 = vunpack.c.h.b16 %v5150
    %v5774 = vunpack.c.l.b16 %v5151
    %v5775 = vunpack.c.h.b16 %v5151
    %v5776 = vunpack.c.l.b16 %v5152
    %v5777 = vunpack.c.h.b16 %v5152
    %v5778 = vunpack.c.l.b16 %v5153
    %v5779 = vunpack.c.h.b16 %v5153
    %v5780 = vunpack.c.l.b16 %v5154
    %v5781 = vunpack.c.h.b16 %v5154
    %v5782 = vunpack.c.l.b16 %v5155
    %v5783 = vunpack.c.h.b16 %v5155
    %v5784 = vunpack.c.l.b16 %v5156
    %v5785 = vunpack.c.h.b16 %v5156
    %v5786 = vunpack.c.l.b16 %v5157
    %v5787 = vunpack.c.h.b16 %v5157
    %v5788 = vunpack.c.l.b16 %v5158
    %v5789 = vunpack.c.h.b16 %v5158
    %v5790 = vunpack.c.l.b16 %v5159
    %v5791 = vunpack.c.h.b16 %v5159
    %v5792 = vunpack.c.l.b16 %v5160
    %v5793 = vunpack.c.h.b16 %v5160
    %v5794 = vunpack.c.l.b16 %v5161
    %v5795 = vunpack.c.h.b16 %v5161
    %v5796 = vunpack.c.l.b16 %v5162
    %v5797 = vunpack.c.h.b16 %v5162
    %v5798 = vunpack.c.l.b16 %v5163
    %v5799 = vunpack.c.h.b16 %v5163
    %v5800 = vunpack.c.l.b16 %v5164
    %v5801 = vunpack.c.h.b16 %v5164
    %v5802 = vunpack.c.l.b16 %v5165
    %v5803 = vunpack.c.h.b16 %v5165
    %v5804 = vunpack.c.l.b16 %v5166
    %v5805 = vunpack.c.h.b16 %v5166
    %v5806 = vunpack.c.l.b16 %v5167
    %v5807 = vunpack.c.h.b16 %v5167
    %v5808 = vunpack.c.l.b16 %v5168
    %v5809 = vunpack.c.h.b16 %v5168
    %v5810 = vunpack.c.l.b16 %v5169
    %v5811 = vunpack.c.h.b16 %v5169
    %v5812 = vunpack.c.l.b16 %v5170
    %v5813 = vunpack.c.h.b16 %v5170
    %v5814 = vunpack.c.l.b16 %v5171
    %v5815 = vunpack.c.h.b16 %v5171
    %v5816 = vunpack.c.l.b16 %v5172
    %v5817 = vunpack.c.h.b16 %v5172
    %v5818 = vunpack.c.l.b16 %v5173
    %v5819 = vunpack.c.h.b16 %v5173
    %v5820 = vunpack.c.l.b16 %v5174
    %v5821 = vunpack.c.h.b16 %v5174
    %v5822 = vunpack.c.l.b16 %v5175
    %v5823 = vunpack.c.h.b16 %v5175
    %v5824 = vunpack.c.l.b16 %v5176
    %v5825 = vunpack.c.h.b16 %v5176
    %v5826 = vunpack.c.l.b16 %v5177
    %v5827 = vunpack.c.h.b16 %v5177
    %v5828 = vunpack.c.l.b16 %v5178
    %v5829 = vunpack.c.h.b16 %v5178
    %v5830 = vunpack.c.l.b16 %v5179
    %v5831 = vunpack.c.h.b16 %v5179
    %v5832 = vunpack.c.l.b16 %v5180
    %v5833 = vunpack.c.h.b16 %v5180
    %v5834 = vunpack.c.l.b16 %v5181
    %v5835 = vunpack.c.h.b16 %v5181
    %v5836 = vunpack.c.l.b16 %v5182
    %v5837 = vunpack.c.h.b16 %v5182
    %v5838 = vunpack.c.l.b16 %v5183
    %v5839 = vunpack.c.h.b16 %v5183
    %v5840 = vunpack.c.l.b16 %v5184
    %v5841 = vunpack.c.h.b16 %v5184
    %v5842 = vunpack.c.l.b16 %v5185
    %v5843 = vunpack.c.h.b16 %v5185
    %v5844 = vunpack.c.l.b16 %v5186
    %v5845 = vunpack.c.h.b16 %v5186
    %v5846 = vunpack.c.l.b16 %v5187
    %v5847 = vunpack.c.h.b16 %v5187
    %v5848 = vunpack.c.l.b16 %v5188
    %v5849 = vunpack.c.h.b16 %v5188
    %v5850 = vunpack.c.l.b16 %v5189
    %v5851 = vunpack.c.h.b16 %v5189
    %v5852 = vunpack.c.l.b16 %v5190
    %v5853 = vunpack.c.h.b16 %v5190
    %v5854 = vunpack.c.l.b16 %v5191
    %v5855 = vunpack.c.h.b16 %v5191
    %v5856 = vunpack.c.l.b16 %v5192
    %v5857 = vunpack.c.h.b16 %v5192
    %v5858 = vunpack.c.l.b16 %v5193
    %v5859 = vunpack.c.h.b16 %v5193
    %v5860 = vunpack.c.l.b16 %v5194
    %v5861 = vunpack.c.h.b16 %v5194
    %v5862 = vunpack.c.l.b16 %v5195
    %v5863 = vunpack.c.h.b16 %v5195
    %v5864 = vunpack.c.l.b16 %v5196
    %v5865 = vunpack.c.h.b16 %v5196
    %v5866 = vunpack.c.l.b16 %v5197
    %v5867 = vunpack.c.h.b16 %v5197
    %v5868 = vunpack.c.l.b16 %v5198
    %v5869 = vunpack.c.h.b16 %v5198
    %v5870 = vunpack.c.l.b16 %v5199
    %v5871 = vunpack.c.h.b16 %v5199
    %v5872 = vunpack.c.l.b16 %v5200
    %v5873 = vunpack.c.h.b16 %v5200
    %v5874 = vunpack.c.l.b16 %v5201
    %v5875 = vunpack.c.h.b16 %v5201
    %v5876 = vunpack.c.l.b16 %v5202
    %v5877 = vunpack.c.h.b16 %v5202
    %v5878 = vunpack.c.l.b16 %v5203
    %v5879 = vunpack.c.h.b16 %v5203
    %v5880 = vunpack.c.l.b16 %v5204
    %v5881 = vunpack.c.h.b16 %v5204
    %v5882 = vunpack.c.l.b16 %v5205
    %v5883 = vunpack.c.h.b16 %v5205
    %v5884 = vunpack.c.l.b16 %v5206
    %v5885 = vunpack.c.h.b16 %v5206
    %v5886 = vunpack.c.l.b16 %v5207
    %v5887 = vunpack.c.h.b16 %v5207
    %v5888 = vunpack.c.l.b16 %v5208
    %v5889 = vunpack.c.h.b16 %v5208
    %v5890 = vunpack.c.l.b16 %v5209
    %v5891 = vunpack.c.h.b16 %v5209
    %v5892 = vunpack.c.l.b16 %v5210
    %v5893 = vunpack.c.h.b16 %v5210
    %v5894 = vunpack.c.l.b16 %v5211
    %v5895 = vunpack.c.h.b16 %v5211
    %v5896 = vunpack.c.l.b16 %v5212
    %v5897 = vunpack.c.h.b16 %v5212
    %v5898 = vunpack.c.l.b16 %v5213
    %v5899 = vunpack.c.h.b16 %v5213
    %v5900 = vunpack.c.l.b16 %v5214
    %v5901 = vunpack.c.h.b16 %v5214
    %v5902 = vunpack.c.l.b16 %v5215
    %v5903 = vunpack.c.h.b16 %v5215
    %v5904 = vunpack.c.l.b16 %v5216
    %v5905 = vunpack.c.h.b16 %v5216
    %v5906 = vunpack.c.l.b16 %v5217
    %v5907 = vunpack.c.h.b16 %v5217
    %v5908 = vunpack.c.l.b16 %v5218
    %v5909 = vunpack.c.h.b16 %v5218
    %v5910 = vunpack.c.l.b16 %v5219
    %v5911 = vunpack.c.h.b16 %v5219
    %v5912 = vunpack.c.l.b16 %v5220
    %v5913 = vunpack.c.h.b16 %v5220
    %v5914 = vunpack.c.l.b16 %v5221
    %v5915 = vunpack.c.h.b16 %v5221
    %v5916 = vunpack.c.l.b16 %v5222
    %v5917 = vunpack.c.h.b16 %v5222
    %v5918 = vunpack.c.l.b16 %v5223
    %v5919 = vunpack.c.h.b16 %v5223
    %v5920 = vunpack.c.l.b16 %v5224
    %v5921 = vunpack.c.h.b16 %v5224
    %v5922 = vunpack.c.l.b16 %v5225
    %v5923 = vunpack.c.h.b16 %v5225
    %v5924 = vunpack.c.l.b16 %v5226
    %v5925 = vunpack.c.h.b16 %v5226
    %v5926 = vunpack.c.l.b16 %v5227
    %v5927 = vunpack.c.h.b16 %v5227
    %v5928 = vunpack.c.l.b16 %v5228
    %v5929 = vunpack.c.h.b16 %v5228
    %v5930 = vunpack.c.l.b16 %v5229
    %v5931 = vunpack.c.h.b16 %v5229
    %v5932 = vunpack.c.l.b16 %v5230
    %v5933 = vunpack.c.h.b16 %v5230
    %v5934 = vunpack.c.l.b16 %v5231
    %v5935 = vunpack.c.h.b16 %v5231
    %v5936 = vunpack.c.l.b16 %v5232
    %v5937 = vunpack.c.h.b16 %v5232
    %v5938 = vunpack.c.l.b16 %v5233
    %v5939 = vunpack.c.h.b16 %v5233
    %v5940 = vunpack.c.l.b16 %v5234
    %v5941 = vunpack.c.h.b16 %v5234
    %v5942 = vunpack.c.l.b16 %v5235
    %v5943 = vunpack.c.h.b16 %v5235
    %v5944 = vunpack.c.l.b16 %v5236
    %v5945 = vunpack.c.h.b16 %v5236
    %v5946 = vunpack.c.l.b16 %v5237
    %v5947 = vunpack.c.h.b16 %v5237
    %v5948 = vunpack.c.l.b16 %v5238
    %v5949 = vunpack.c.h.b16 %v5238
    %v5950 = vunpack.c.l.b16 %v5239
    %v5951 = vunpack.c.h.b16 %v5239
    %v5952 = vunpack.c.l.b16 %v5240
    %v5953 = vunpack.c.h.b16 %v5240
    %v5954 = vunpack.c.l.b16 %v5241
    %v5955 = vunpack.c.h.b16 %v5241
    %v5956 = vunpack.c.l.b16 %v5242
    %v5957 = vunpack.c.h.b16 %v5242
    %v5958 = vunpack.c.l.b16 %v5243
    %v5959 = vunpack.c.h.b16 %v5243
    %v5960 = vunpack.c.l.b16 %v5244
    %v5961 = vunpack.c.h.b16 %v5244
    %v5962 = vunpack.c.l.b16 %v5245
    %v5963 = vunpack.c.h.b16 %v5245
    %v5964 = vunpack.c.l.b16 %v5246
    %v5965 = vunpack.c.h.b16 %v5246
    %v5966 = vunpack.c.l.b16 %v5247
    %v5967 = vunpack.c.h.b16 %v5247
    %v5968 = vunpack.c.l.b16 %v5248
    %v5969 = vunpack.c.h.b16 %v5248
    %v5970 = vunpack.c.l.b16 %v5249
    %v5971 = vunpack.c.h.b16 %v5249
    %v5972 = vunpack.c.l.b16 %v5250
    %v5973 = vunpack.c.h.b16 %v5250
    %v5974 = vunpack.c.l.b16 %v5251
    %v5975 = vunpack.c.h.b16 %v5251
    %v5976 = vunpack.c.l.b16 %v5252
    %v5977 = vunpack.c.h.b16 %v5252
    %v5978 = vunpack.c.l.b16 %v5253
    %v5979 = vunpack.c.h.b16 %v5253
    %v5980 = vunpack.c.l.b16 %v5254
    %v5981 = vunpack.c.h.b16 %v5254
    %v5982 = vunpack.c.l.b16 %v5255
    %v5983 = vunpack.c.h.b16 %v5255
    %v5984 = vunpack.c.l.b16 %v5256
    %v5985 = vunpack.c.h.b16 %v5256
    %v5986 = vunpack.c.l.b16 %v5257
    %v5987 = vunpack.c.h.b16 %v5257
    %v5988 = vunpack.c.l.b16 %v5258
    %v5989 = vunpack.c.h.b16 %v5258
    %v5990 = vunpack.c.l.b16 %v5259
    %v5991 = vunpack.c.h.b16 %v5259
    %v5992 = vunpack.c.l.b16 %v5260
    %v5993 = vunpack.c.h.b16 %v5260
    %v5994 = vunpack.c.l.b16 %v5261
    %v5995 = vunpack.c.h.b16 %v5261
    %v5996 = vunpack.c.l.b16 %v5262
    %v5997 = vunpack.c.h.b16 %v5262
    %v5998 = vunpack.c.l.b16 %v5263
    %v5999 = vunpack.c.h.b16 %v5263
    %v6000 = vunpack.c.l.b16 %v5264
    %v6001 = vunpack.c.h.b16 %v5264
    %v6002 = vunpack.c.l.b16 %v5265
    %v6003 = vunpack.c.h.b16 %v5265
    %v6004 = vunpack.c.l.b16 %v5266
    %v6005 = vunpack.c.h.b16 %v5266
    %v6006 = vunpack.c.l.b16 %v5267
    %v6007 = vunpack.c.h.b16 %v5267
    %v6008 = vunpack.c.l.b16 %v5268
    %v6009 = vunpack.c.h.b16 %v5268
    %v6010 = vunpack.c.l.b16 %v5269
    %v6011 = vunpack.c.h.b16 %v5269
    %v6012 = vunpack.c.l.b16 %v5270
    %v6013 = vunpack.c.h.b16 %v5270
    %v6014 = vunpack.c.l.b16 %v5271
    %v6015 = vunpack.c.h.b16 %v5271
    %v6016 = vunpack.c.l.b16 %v5272
    %v6017 = vunpack.c.h.b16 %v5272
    %v6018 = vunpack.c.l.b16 %v5273
    %v6019 = vunpack.c.h.b16 %v5273
    %v6020 = vunpack.c.l.b16 %v5274
    %v6021 = vunpack.c.h.b16 %v5274
    %v6022 = vunpack.c.l.b16 %v5275
    %v6023 = vunpack.c.h.b16 %v5275
    %v6024 = vunpack.c.l.b16 %v5276
    %v6025 = vunpack.c.h.b16 %v5276
    %v6026 = vunpack.c.l.b16 %v5277
    %v6027 = vunpack.c.h.b16 %v5277
    %v6028 = vunpack.c.l.b16 %v5278
    %v6029 = vunpack.c.h.b16 %v5278
    %v6030 = vunpack.c.l.b16 %v5279
    %v6031 = vunpack.c.h.b16 %v5279
    %v6032 = vunpack.c.l.b16 %v5280
    %v6033 = vunpack.c.h.b16 %v5280
    %v6034 = vunpack.c.l.b16 %v5281
    %v6035 = vunpack.c.h.b16 %v5281
    %v6036 = vunpack.c.l.b16 %v5282
    %v6037 = vunpack.c.h.b16 %v5282
    %v6038 = vunpack.c.l.b16 %v5283
    %v6039 = vunpack.c.h.b16 %v5283
    %v6040 = vunpack.c.l.b16 %v5284
    %v6041 = vunpack.c.h.b16 %v5284
    %v6042 = vunpack.c.l.b16 %v5285
    %v6043 = vunpack.c.h.b16 %v5285
    %v6044 = vunpack.c.l.b16 %v5286
    %v6045 = vunpack.c.h.b16 %v5286
    %v6046 = vunpack.c.l.b16 %v5287
    %v6047 = vunpack.c.h.b16 %v5287
    %v6048 = vunpack.c.l.b16 %v5288
    %v6049 = vunpack.c.h.b16 %v5288
    %v6050 = vunpack.c.l.b16 %v5289
    %v6051 = vunpack.c.h.b16 %v5289
    %v6052 = vunpack.c.l.b16 %v5290
    %v6053 = vunpack.c.h.b16 %v5290
    %v6054 = vunpack.c.l.b16 %v5291
    %v6055 = vunpack.c.h.b16 %v5291
    %v6056 = vunpack.c.l.b16 %v5292
    %v6057 = vunpack.c.h.b16 %v5292
    %v6058 = vunpack.c.l.b16 %v5293
    %v6059 = vunpack.c.h.b16 %v5293
    %v6060 = vunpack.c.l.b16 %v5294
    %v6061 = vunpack.c.h.b16 %v5294
    %v6062 = vunpack.c.l.b16 %v5295
    %v6063 = vunpack.c.h.b16 %v5295
    %v6064 = vunpack.c.l.b16 %v5296
    %v6065 = vunpack.c.h.b16 %v5296
    %v6066 = vunpack.c.l.b16 %v5297
    %v6067 = vunpack.c.h.b16 %v5297
    %v6068 = vunpack.c.l.b16 %v5298
    %v6069 = vunpack.c.h.b16 %v5298
    %v6070 = vunpack.c.l.b16 %v5299
    %v6071 = vunpack.c.h.b16 %v5299
    %v6072 = vunpack.c.l.b16 %v5300
    %v6073 = vunpack.c.h.b16 %v5300
    %v6074 = vunpack.c.l.b16 %v5301
    %v6075 = vunpack.c.h.b16 %v5301
    %v6076 = vunpack.c.l.b16 %v5302
    %v6077 = vunpack.c.h.b16 %v5302
    %v6078 = vunpack.c.l.b16 %v5303
    %v6079 = vunpack.c.h.b16 %v5303
    %v6080 = vunpack.c.l.b16 %v5304
    %v6081 = vunpack.c.h.b16 %v5304
    %v6082 = vunpack.c.l.b16 %v5305
    %v6083 = vunpack.c.h.b16 %v5305
    %v6084 = vunpack.c.l.b16 %v5306
    %v6085 = vunpack.c.h.b16 %v5306
    %v6086 = vunpack.c.l.b16 %v5307
    %v6087 = vunpack.c.h.b16 %v5307
    %v6088 = vunpack.c.l.b16 %v5308
    %v6089 = vunpack.c.h.b16 %v5308
    %v6090 = vunpack.c.l.b16 %v5309
    %v6091 = vunpack.c.h.b16 %v5309
    %v6092 = vunpack.c.l.b16 %v5310
    %v6093 = vunpack.c.h.b16 %v5310
    %v6094 = vunpack.c.l.b16 %v5311
    %v6095 = vunpack.c.h.b16 %v5311
    %v6096 = vunpack.c.l.b16 %v5312
    %v6097 = vunpack.c.h.b16 %v5312
    %v6098 = vunpack.c.l.b16 %v5313
    %v6099 = vunpack.c.h.b16 %v5313
    %v6100 = vunpack.c.l.b16 %v5314
    %v6101 = vunpack.c.h.b16 %v5314
    %v6102 = vunpack.c.l.b16 %v5315
    %v6103 = vunpack.c.h.b16 %v5315
    %v6104 = vunpack.c.l.b16 %v5316
    %v6105 = vunpack.c.h.b16 %v5316
    %v6106 = vunpack.c.l.b16 %v5317
    %v6107 = vunpack.c.h.b16 %v5317
    %v6108 = vunpack.c.l.b16 %v5318
    %v6109 = vunpack.c.h.b16 %v5318
    %v6110 = vunpack.c.l.b16 %v5319
    %v6111 = vunpack.c.h.b16 %v5319
    %v6112 = vunpack.c.l.b16 %v5320
    %v6113 = vunpack.c.h.b16 %v5320
    %v6114 = vunpack.c.l.b16 %v5321
    %v6115 = vunpack.c.h.b16 %v5321
    %v6116 = vunpack.c.l.b16 %v5322
    %v6117 = vunpack.c.h.b16 %v5322
    %v6118 = vunpack.c.l.b16 %v5323
    %v6119 = vunpack.c.h.b16 %v5323
    %v6120 = vunpack.c.l.b16 %v5324
    %v6121 = vunpack.c.h.b16 %v5324
    %v6122 = vunpack.c.l.b16 %v5325
    %v6123 = vunpack.c.h.b16 %v5325
    %v6124 = vunpack.c.l.b16 %v5326
    %v6125 = vunpack.c.h.b16 %v5326
    %v6126 = vunpack.c.l.b16 %v5327
    %v6127 = vunpack.c.h.b16 %v5327
    %v6128 = vunpack.c.l.b16 %v5328
    %v6129 = vunpack.c.h.b16 %v5328
    %v6130 = vunpack.c.l.b16 %v5329
    %v6131 = vunpack.c.h.b16 %v5329
    %v6132 = vunpack.c.l.b16 %v5330
    %v6133 = vunpack.c.h.b16 %v5330
    %v6134 = vunpack.c.l.b16 %v5331
    %v6135 = vunpack.c.h.b16 %v5331
    %v6136 = vunpack.c.l.b16 %v5332
    %v6137 = vunpack.c.h.b16 %v5332
    %v6138 = vunpack.c.l.b16 %v5333
    %v6139 = vunpack.c.h.b16 %v5333
    %v6140 = vunpack.c.l.b16 %v5334
    %v6141 = vunpack.c.h.b16 %v5334
    %v6142 = vunpack.c.l.b16 %v5335
    %v6143 = vunpack.c.h.b16 %v5335
    %v6144 = vunpack.c.l.b16 %v5336
    %v6145 = vunpack.c.h.b16 %v5336
    %v6146 = vunpack.c.l.b16 %v5337
    %v6147 = vunpack.c.h.b16 %v5337
    %v6148 = vpack.c.b16 %v5644, %v5636
    %v6149 = vpack.c.b16 %v5645, %v5637
    %v6150 = vpack.c.b16 %v5646, %v5638
    %v6151 = vpack.c.b16 %v5647, %v5639
    %v6152 = vpack.c.b16 %v5648, %v5640
    %v6153 = vpack.c.b16 %v5649, %v5641
    %v6154 = vpack.c.b16 %v5650, %v5642
    %v6155 = vpack.c.b16 %v5651, %v5643
    %v6156 = vpack.c.b16 %v5660, %v5652
    %v6157 = vpack.c.b16 %v5661, %v5653
    %v6158 = vpack.c.b16 %v5662, %v5654
    %v6159 = vpack.c.b16 %v5663, %v5655
    %v6160 = vpack.c.b16 %v5664, %v5656
    %v6161 = vpack.c.b16 %v5665, %v5657
    %v6162 = vpack.c.b16 %v5666, %v5658
    %v6163 = vpack.c.b16 %v5667, %v5659
    %v6164 = vpack.c.b16 %v5676, %v5668
    %v6165 = vpack.c.b16 %v5677, %v5669
    %v6166 = vpack.c.b16 %v5678, %v5670
    %v6167 = vpack.c.b16 %v5679, %v5671
    %v6168 = vpack.c.b16 %v5680, %v5672
    %v6169 = vpack.c.b16 %v5681, %v5673
    %v6170 = vpack.c.b16 %v5682, %v5674
    %v6171 = vpack.c.b16 %v5683, %v5675
    %v6172 = vpack.c.b16 %v5692, %v5684
    %v6173 = vpack.c.b16 %v5693, %v5685
    %v6174 = vpack.c.b16 %v5694, %v5686
    %v6175 = vpack.c.b16 %v5695, %v5687
    %v6176 = vpack.c.b16 %v5696, %v5688
    %v6177 = vpack.c.b16 %v5697, %v5689
    %v6178 = vpack.c.b16 %v5698, %v5690
    %v6179 = vpack.c.b16 %v5699, %v5691
    %v6180 = vpack.c.b16 %v5708, %v5700
    %v6181 = vpack.c.b16 %v5709, %v5701
    %v6182 = vpack.c.b16 %v5710, %v5702
    %v6183 = vpack.c.b16 %v5711, %v5703
    %v6184 = vpack.c.b16 %v5712, %v5704
    %v6185 = vpack.c.b16 %v5713, %v5705
    %v6186 = vpack.c.b16 %v5714, %v5706
    %v6187 = vpack.c.b16 %v5715, %v5707
    %v6188 = vpack.c.b16 %v5724, %v5716
    %v6189 = vpack.c.b16 %v5725, %v5717
    %v6190 = vpack.c.b16 %v5726, %v5718
    %v6191 = vpack.c.b16 %v5727, %v5719
    %v6192 = vpack.c.b16 %v5728, %v5720
    %v6193 = vpack.c.b16 %v5729, %v5721
    %v6194 = vpack.c.b16 %v5730, %v5722
    %v6195 = vpack.c.b16 %v5731, %v5723
    %v6196 = vpack.c.b16 %v5740, %v5732
    %v6197 = vpack.c.b16 %v5741, %v5733
    %v6198 = vpack.c.b16 %v5742, %v5734
    %v6199 = vpack.c.b16 %v5743, %v5735
    %v6200 = vpack.c.b16 %v5744, %v5736
    %v6201 = vpack.c.b16 %v5745, %v5737
    %v6202 = vpack.c.b16 %v5746, %v5738
    %v6203 = vpack.c.b16 %v5747, %v5739
    %v6204 = vpack.c.b16 %v5756, %v5748
    %v6205 = vpack.c.b16 %v5757, %v5749
    %v6206 = vpack.c.b16 %v5758, %v5750
    %v6207 = vpack.c.b16 %v5759, %v5751
    %v6208 = vpack.c.b16 %v5760, %v5752
    %v6209 = vpack.c.b16 %v5761, %v5753
    %v6210 = vpack.c.b16 %v5762, %v5754
    %v6211 = vpack.c.b16 %v5763, %v5755
    %v6212 = vpack.c.b16 %v5772, %v5764
    %v6213 = vpack.c.b16 %v5773, %v5765
    %v6214 = vpack.c.b16 %v5774, %v5766
    %v6215 = vpack.c.b16 %v5775, %v5767
    %v6216 = vpack.c.b16 %v5776, %v5768
    %v6217 = vpack.c.b16 %v5777, %v5769
    %v6218 = vpack.c.b16 %v5778, %v5770
    %v6219 = vpack.c.b16 %v5779, %v5771
    %v6220 = vpack.c.b16 %v5788, %v5780
    %v6221 = vpack.c.b16 %v5789, %v5781
    %v6222 = vpack.c.b16 %v5790, %v5782
    %v6223 = vpack.c.b16 %v5791, %v5783
    %v6224 = vpack.c.b16 %v5792, %v5784
    %v6225 = vpack.c.b16 %v5793, %v5785
    %v6226 = vpack.c.b16 %v5794, %v5786
    %v6227 = vpack.c.b16 %v5795, %v5787
    %v6228 = vpack.c.b16 %v5804, %v5796
    %v6229 = vpack.c.b16 %v5805, %v5797
    %v6230 = vpack.c.b16 %v5806, %v5798
    %v6231 = vpack.c.b16 %v5807, %v5799
    %v6232 = vpack.c.b16 %v5808, %v5800
    %v6233 = vpack.c.b16 %v5809, %v5801
    %v6234 = vpack.c.b16 %v5810, %v5802
    %v6235 = vpack.c.b16 %v5811, %v5803
    %v6236 = vpack.c.b16 %v5820, %v5812
    %v6237 = vpack.c.b16 %v5821, %v5813
    %v6238 = vpack.c.b16 %v5822, %v5814
    %v6239 = vpack.c.b16 %v5823, %v5815
    %v6240 = vpack.c.b16 %v5824, %v5816
    %v6241 = vpack.c.b16 %v5825, %v5817
    %v6242 = vpack.c.b16 %v5826, %v5818
    %v6243 = vpack.c.b16 %v5827, %v5819
    %v6244 = vpack.c.b16 %v5836, %v5828
    %v6245 = vpack.c.b16 %v5837, %v5829
    %v6246 = vpack.c.b16 %v5838, %v5830
    %v6247 = vpack.c.b16 %v5839, %v5831
    %v6248 = vpack.c.b16 %v5840, %v5832
    %v6249 = vpack.c.b16 %v5841, %v5833
    %v6250 = vpack.c.b16 %v5842, %v5834
    %v6251 = vpack.c.b16 %v5843, %v5835
    %v6252 = vpack.c.b16 %v5852, %v5844
    %v6253 = vpack.c.b16 %v5853, %v5845
    %v6254 = vpack.c.b16 %v5854, %v5846
    %v6255 = vpack.c.b16 %v5855, %v5847
    %v6256 = vpack.c.b16 %v5856, %v5848
    %v6257 = vpack.c.b16 %v5857, %v5849
    %v6258 = vpack.c.b16 %v5858, %v5850
    %v6259 = vpack.c.b16 %v5859, %v5851
    %v6260 = vpack.c.b16 %v5868, %v5860
    %v6261 = vpack.c.b16 %v5869, %v5861
    %v6262 = vpack.c.b16 %v5870, %v5862
    %v6263 = vpack.c.b16 %v5871, %v5863
    %v6264 = vpack.c.b16 %v5872, %v5864
    %v6265 = vpack.c.b16 %v5873, %v5865
    %v6266 = vpack.c.b16 %v5874, %v5866
    %v6267 = vpack.c.b16 %v5875, %v5867
    %v6268 = vpack.c.b16 %v5884, %v5876
    %v6269 = vpack.c.b16 %v5885, %v5877
    %v6270 = vpack.c.b16 %v5886, %v5878
    %v6271 = vpack.c.b16 %v5887, %v5879
    %v6272 = vpack.c.b16 %v5888, %v5880
    %v6273 = vpack.c.b16 %v5889, %v5881
    %v6274 = vpack.c.b16 %v5890, %v5882
    %v6275 = vpack.c.b16 %v5891, %v5883
    %v6276 = vpack.c.b16 %v5900, %v5892
    %v6277 = vpack.c.b16 %v5901, %v5893
    %v6278 = vpack.c.b16 %v5902, %v5894
    %v6279 = vpack.c.b16 %v5903, %v5895
    %v6280 = vpack.c.b16 %v5904, %v5896
    %v6281 = vpack.c.b16 %v5905, %v5897
    %v6282 = vpack.c.b16 %v5906, %v5898
    %v6283 = vpack.c.b16 %v5907, %v5899
    %v6284 = vpack.c.b16 %v5916, %v5908
    %v6285 = vpack.c.b16 %v5917, %v5909
    %v6286 = vpack.c.b16 %v5918, %v5910
    %v6287 = vpack.c.b16 %v5919, %v5911
    %v6288 = vpack.c.b16 %v5920, %v5912
    %v6289 = vpack.c.b16 %v5921, %v5913
    %v6290 = vpack.c.b16 %v5922, %v5914
    %v6291 = vpack.c.b16 %v5923, %v5915
    %v6292 = vpack.c.b16 %v5932, %v5924
    %v6293 = vpack.c.b16 %v5933, %v5925
    %v6294 = vpack.c.b16 %v5934, %v5926
    %v6295 = vpack.c.b16 %v5935, %v5927
    %v6296 = vpack.c.b16 %v5936, %v5928
    %v6297 = vpack.c.b16 %v5937, %v5929
    %v6298 = vpack.c.b16 %v5938, %v5930
    %v6299 = vpack.c.b16 %v5939, %v5931
    %v6300 = vpack.c.b16 %v5948, %v5940
    %v6301 = vpack.c.b16 %v5949, %v5941
    %v6302 = vpack.c.b16 %v5950, %v5942
    %v6303 = vpack.c.b16 %v5951, %v5943
    %v6304 = vpack.c.b16 %v5952, %v5944
    %v6305 = vpack.c.b16 %v5953, %v5945
    %v6306 = vpack.c.b16 %v5954, %v5946
    %v6307 = vpack.c.b16 %v5955, %v5947
    %v6308 = vpack.c.b16 %v5964, %v5956
    %v6309 = vpack.c.b16 %v5965, %v5957
    %v6310 = vpack.c.b16 %v5966, %v5958
    %v6311 = vpack.c.b16 %v5967, %v5959
    %v6312 = vpack.c.b16 %v5968, %v5960
    %v6313 = vpack.c.b16 %v5969, %v5961
    %v6314 = vpack.c.b16 %v5970, %v5962
    %v6315 = vpack.c.b16 %v5971, %v5963
    %v6316 = vpack.c.b16 %v5980, %v5972
    %v6317 = vpack.c.b16 %v5981, %v5973
    %v6318 = vpack.c.b16 %v5982, %v5974
    %v6319 = vpack.c.b16 %v5983, %v5975
    %v6320 = vpack.c.b16 %v5984, %v5976
    %v6321 = vpack.c.b16 %v5985, %v5977
    %v6322 = vpack.c.b16 %v5986, %v5978
    %v6323 = vpack.c.b16 %v5987, %v5979
    %v6324 = vpack.c.b16 %v5996, %v5988
    %v6325 = vpack.c.b16 %v5997, %v5989
    %v6326 = vpack.c.b16 %v5998, %v5990
    %v6327 = vpack.c.b16 %v5999, %v5991
    %v6328 = vpack.c.b16 %v6000, %v5992
    %v6329 = vpack.c.b16 %v6001, %v5993
    %v6330 = vpack.c.b16 %v6002, %v5994
    %v6331 = vpack.c.b16 %v6003, %v5995
    %v6332 = vpack.c.b16 %v6012, %v6004
    %v6333 = vpack.c.b16 %v6013, %v6005
    %v6334 = vpack.c.b16 %v6014, %v6006
    %v6335 = vpack.c.b16 %v6015, %v6007
    %v6336 = vpack.c.b16 %v6016, %v6008
    %v6337 = vpack.c.b16 %v6017, %v6009
    %v6338 = vpack.c.b16 %v6018, %v6010
    %v6339 = vpack.c.b16 %v6019, %v6011
    %v6340 = vpack.c.b16 %v6028, %v6020
    %v6341 = vpack.c.b16 %v6029, %v6021
    %v6342 = vpack.c.b16 %v6030, %v6022
    %v6343 = vpack.c.b16 %v6031, %v6023
    %v6344 = vpack.c.b16 %v6032, %v6024
    %v6345 = vpack.c.b16 %v6033, %v6025
    %v6346 = vpack.c.b16 %v6034, %v6026
    %v6347 = vpack.c.b16 %v6035, %v6027
    %v6348 = vpack.c.b16 %v6044, %v6036
    %v6349 = vpack.c.b16 %v6045, %v6037
    %v6350 = vpack.c.b16 %v6046, %v6038
    %v6351 = vpack.c.b16 %v6047, %v6039
    %v6352 = vpack.c.b16 %v6048, %v6040
    %v6353 = vpack.c.b16 %v6049, %v6041
    %v6354 = vpack.c.b16 %v6050, %v6042
    %v6355 = vpack.c.b16 %v6051, %v6043
    %v6356 = vpack.c.b16 %v6060, %v6052
    %v6357 = vpack.c.b16 %v6061, %v6053
    %v6358 = vpack.c.b16 %v6062, %v6054
    %v6359 = vpack.c.b16 %v6063, %v6055
    %v6360 = vpack.c.b16 %v6064, %v6056
    %v6361 = vpack.c.b16 %v6065, %v6057
    %v6362 = vpack.c.b16 %v6066, %v6058
    %v6363 = vpack.c.b16 %v6067, %v6059
    %v6364 = vpack.c.b16 %v6076, %v6068
    %v6365 = vpack.c.b16 %v6077, %v6069
    %v6366 = vpack.c.b16 %v6078, %v6070
    %v6367 = vpack.c.b16 %v6079, %v6071
    %v6368 = vpack.c.b16 %v6080, %v6072
    %v6369 = vpack.c.b16 %v6081, %v6073
    %v6370 = vpack.c.b16 %v6082, %v6074
    %v6371 = vpack.c.b16 %v6083, %v6075
    %v6372 = vpack.c.b16 %v6092, %v6084
    %v6373 = vpack.c.b16 %v6093, %v6085
    %v6374 = vpack.c.b16 %v6094, %v6086
    %v6375 = vpack.c.b16 %v6095, %v6087
    %v6376 = vpack.c.b16 %v6096, %v6088
    %v6377 = vpack.c.b16 %v6097, %v6089
    %v6378 = vpack.c.b16 %v6098, %v6090
    %v6379 = vpack.c.b16 %v6099, %v6091
    %v6380 = vpack.c.b16 %v6108, %v6100
    %v6381 = vpack.c.b16 %v6109, %v6101
    %v6382 = vpack.c.b16 %v6110, %v6102
    %v6383 = vpack.c.b16 %v6111, %v6103
    %v6384 = vpack.c.b16 %v6112, %v6104
    %v6385 = vpack.c.b16 %v6113, %v6105
    %v6386 = vpack.c.b16 %v6114, %v6106
    %v6387 = vpack.c.b16 %v6115, %v6107
    %v6388 = vpack.c.b16 %v6124, %v6116
    %v6389 = vpack.c.b16 %v6125, %v6117
    %v6390 = vpack.c.b16 %v6126, %v6118
    %v6391 = vpack.c.b16 %v6127, %v6119
    %v6392 = vpack.c.b16 %v6128, %v6120
    %v6393 = vpack.c.b16 %v6129, %v6121
    %v6394 = vpack.c.b16 %v6130, %v6122
    %v6395 = vpack.c.b16 %v6131, %v6123
    %v6396 = vpack.c.b16 %v6140, %v6132
    %v6397 = vpack.c.b16 %v6141, %v6133
    %v6398 = vpack.c.b16 %v6142, %v6134
    %v6399 = vpack.c.b16 %v6143, %v6135
    %v6400 = vpack.c.b16 %v6144, %v6136
    %v6401 = vpack.c.b16 %v6145, %v6137
    %v6402 = vpack.c.b16 %v6146, %v6138
    %v6403 = vpack.c.b16 %v6147, %v6139
    %6660 = vmatprep.subr.bf16.mxu0 %v6149
    %6661 = vmatpush1.bf16.msra.mxu0 %v6148
    %6662 = vmatprep.subr.bf16.mxu0 %v6157
    %6663 = vmatpush1.bf16.msra.mxu0 %v6156
    %6664 = vmatprep.subr.bf16.mxu0 %v6165
    %6665 = vmatpush1.bf16.msra.mxu0 %v6164
    %6666 = vmatprep.subr.bf16.mxu0 %v6173
    %6667 = vmatpush1.bf16.msra.mxu0 %v6172
    %6668 = vmatprep.subr.bf16.mxu0 %v6181
    %6669 = vmatpush1.bf16.msra.mxu0 %v6180
    %6670 = vmatprep.subr.bf16.mxu0 %v6189
    %6671 = vmatpush1.bf16.msra.mxu0 %v6188
    %6672 = vmatprep.subr.bf16.mxu0 %v6197
    %6673 = vmatpush1.bf16.msra.mxu0 %v6196
    %6674 = vmatprep.subr.bf16.mxu0 %v6205
    %6675 = vmatpush1.bf16.msra.mxu0 %v6204
    %6676 = vmatprep.subr.bf16.mxu0 %v6213
    %6677 = vmatpush1.bf16.msra.mxu0 %v6212
    %6678 = vmatprep.subr.bf16.mxu0 %v6221
    %6679 = vmatpush1.bf16.msra.mxu0 %v6220
    %6680 = vmatprep.subr.bf16.mxu0 %v6229
    %6681 = vmatpush1.bf16.msra.mxu0 %v6228
    %6682 = vmatprep.subr.bf16.mxu0 %v6237
    %6683 = vmatpush1.bf16.msra.mxu0 %v6236
    %6684 = vmatprep.subr.bf16.mxu0 %v6245
    %6685 = vmatpush1.bf16.msra.mxu0 %v6244
    %6686 = vmatprep.subr.bf16.mxu0 %v6253
    %6687 = vmatpush1.bf16.msra.mxu0 %v6252
    %6688 = vmatprep.subr.bf16.mxu0 %v6261
    %6689 = vmatpush1.bf16.msra.mxu0 %v6260
    %6690 = vmatprep.subr.bf16.mxu0 %v6269
    %6691 = vmatpush1.bf16.msra.mxu0 %v6268
    %6692 = vmatprep.mubr.bf16.mxu0 %v5079
    %6693 = vmatmul.mubr.bf16.gmra.mrb[0].mxu0 %v5078
    %v6694 = vpop.f32.mrb[0].mxu0
    %v6695 = vadd.f32 %v5343, %v6694
    %v6696 = vpop.f32.mrb[0].mxu0
    %v6697 = vadd.f32 %v5347, %v6696
    %v6698 = vpop.f32.mrb[0].mxu0
    %v6699 = vadd.f32 %v5343, %v6698
    %v6700 = vpop.f32.mrb[0].mxu0
    %v6701 = vadd.f32 %v5347, %v6700
    %6702 = vdwg.mxu0
    %6703 = vmatprep.subr.bf16.mxu0 %v6277
    %6704 = vmatpush1.bf16.msra.mxu0 %v6276
    %6705 = vmatprep.subr.bf16.mxu0 %v6285
    %6706 = vmatpush1.bf16.msra.mxu0 %v6284
    %6707 = vmatprep.subr.bf16.mxu0 %v6293
    %6708 = vmatpush1.bf16.msra.mxu0 %v6292
    %6709 = vmatprep.subr.bf16.mxu0 %v6301
    %6710 = vmatpush1.bf16.msra.mxu0 %v6300
    %6711 = vmatprep.subr.bf16.mxu0 %v6309
    %6712 = vmatpush1.bf16.msra.mxu0 %v6308
    %6713 = vmatprep.subr.bf16.mxu0 %v6317
    %6714 = vmatpush1.bf16.msra.mxu0 %v6316
    %6715 = vmatprep.subr.bf16.mxu0 %v6325
    %6716 = vmatpush1.bf16.msra.mxu0 %v6324
    %6717 = vmatprep.subr.bf16.mxu0 %v6333
    %6718 = vmatpush1.bf16.msra.mxu0 %v6332
    %6719 = vmatprep.subr.bf16.mxu0 %v6341
    %6720 = vmatpush1.bf16.msra.mxu0 %v6340
    %6721 = vmatprep.subr.bf16.mxu0 %v6349
    %6722 = vmatpush1.bf16.msra.mxu0 %v6348
    %6723 = vmatprep.subr.bf16.mxu0 %v6357
    %6724 = vmatpush1.bf16.msra.mxu0 %v6356
    %6725 = vmatprep.subr.bf16.mxu0 %v6365
    %6726 = vmatpush1.bf16.msra.mxu0 %v6364
    %6727 = vmatprep.subr.bf16.mxu0 %v6373
    %6728 = vmatpush1.bf16.msra.mxu0 %v6372
    %6729 = vmatprep.subr.bf16.mxu0 %v6381
    %6730 = vmatpush1.bf16.msra.mxu0 %v6380
    %6731 = vmatprep.subr.bf16.mxu0 %v6389
    %6732 = vmatpush1.bf16.msra.mxu0 %v6388
    %6733 = vmatprep.subr.bf16.mxu0 %v6397
    %6734 = vmatpush1.bf16.msra.mxu0 %v6396
    %6735 = vmatprep.mubr.bf16.mxu0 %v5081
    %6736 = vmatmul.mubr.bf16.gmra.mrb[0].mxu0 %v5080
    %v6737 = vpop.f32.mrb[0].mxu0
    %v6738 = vadd.f32 %v6695, %v6737
    %v6739 = vpop.f32.mrb[0].mxu0
    %v6740 = vadd.f32 %v6697, %v6739
    %v6741 = vpop.f32.mrb[0].mxu0
    %v6742 = vadd.f32 %v6699, %v6741
    %v6743 = vpop.f32.mrb[0].mxu0
    %v6744 = vadd.f32 %v6701, %v6743
    %6745 = vdwg.mxu0
    %6746 = vmatprep.subr.bf16.mxu0 %v6151
    %6747 = vmatpush1.bf16.msra.mxu0 %v6150
    %6748 = vmatprep.subr.bf16.mxu0 %v6159
    %6749 = vmatpush1.bf16.msra.mxu0 %v6158
    %6750 = vmatprep.subr.bf16.mxu0 %v6167
    %6751 = vmatpush1.bf16.msra.mxu0 %v6166
    %6752 = vmatprep.subr.bf16.mxu0 %v6175
    %6753 = vmatpush1.bf16.msra.mxu0 %v6174
    %6754 = vmatprep.subr.bf16.mxu0 %v6183
    %6755 = vmatpush1.bf16.msra.mxu0 %v6182
    %6756 = vmatprep.subr.bf16.mxu0 %v6191
    %6757 = vmatpush1.bf16.msra.mxu0 %v6190
    %6758 = vmatprep.subr.bf16.mxu0 %v6199
    %6759 = vmatpush1.bf16.msra.mxu0 %v6198
    %6760 = vmatprep.subr.bf16.mxu0 %v6207
    %6761 = vmatpush1.bf16.msra.mxu0 %v6206
    %6762 = vmatprep.subr.bf16.mxu0 %v6215
    %6763 = vmatpush1.bf16.msra.mxu0 %v6214
    %6764 = vmatprep.subr.bf16.mxu0 %v6223
    %6765 = vmatpush1.bf16.msra.mxu0 %v6222
    %6766 = vmatprep.subr.bf16.mxu0 %v6231
    %6767 = vmatpush1.bf16.msra.mxu0 %v6230
    %6768 = vmatprep.subr.bf16.mxu0 %v6239
    %6769 = vmatpush1.bf16.msra.mxu0 %v6238
    %6770 = vmatprep.subr.bf16.mxu0 %v6247
    %6771 = vmatpush1.bf16.msra.mxu0 %v6246
    %6772 = vmatprep.subr.bf16.mxu0 %v6255
    %6773 = vmatpush1.bf16.msra.mxu0 %v6254
    %6774 = vmatprep.subr.bf16.mxu0 %v6263
    %6775 = vmatpush1.bf16.msra.mxu0 %v6262
    %6776 = vmatprep.subr.bf16.mxu0 %v6271
    %6777 = vmatpush1.bf16.msra.mxu0 %v6270
    %6778 = vmatprep.mubr.bf16.mxu0 %v5079
    %6779 = vmatmul.mubr.bf16.gmra.mrb[0].mxu0 %v5078
    %v6780 = vpop.f32.mrb[0].mxu0
    %v6781 = vadd.f32 %v5351, %v6780
    %v6782 = vpop.f32.mrb[0].mxu0
    %v6783 = vadd.f32 %v5355, %v6782
    %v6784 = vpop.f32.mrb[0].mxu0
    %v6785 = vadd.f32 %v5351, %v6784
    %v6786 = vpop.f32.mrb[0].mxu0
    %v6787 = vadd.f32 %v5355, %v6786
    %6788 = vdwg.mxu0
    %6789 = vmatprep.subr.bf16.mxu0 %v6279
    %6790 = vmatpush1.bf16.msra.mxu0 %v6278
    %6791 = vmatprep.subr.bf16.mxu0 %v6287
    %6792 = vmatpush1.bf16.msra.mxu0 %v6286
    %6793 = vmatprep.subr.bf16.mxu0 %v6295
    %6794 = vmatpush1.bf16.msra.mxu0 %v6294
    %6795 = vmatprep.subr.bf16.mxu0 %v6303
    %6796 = vmatpush1.bf16.msra.mxu0 %v6302
    %6797 = vmatprep.subr.bf16.mxu0 %v6311
    %6798 = vmatpush1.bf16.msra.mxu0 %v6310
    %6799 = vmatprep.subr.bf16.mxu0 %v6319
    %6800 = vmatpush1.bf16.msra.mxu0 %v6318
    %6801 = vmatprep.subr.bf16.mxu0 %v6327
    %6802 = vmatpush1.bf16.msra.mxu0 %v6326
    %6803 = vmatprep.subr.bf16.mxu0 %v6335
    %6804 = vmatpush1.bf16.msra.mxu0 %v6334
    %6805 = vmatprep.subr.bf16.mxu0 %v6343
    %6806 = vmatpush1.bf16.msra.mxu0 %v6342
    %6807 = vmatprep.subr.bf16.mxu0 %v6351
    %6808 = vmatpush1.bf16.msra.mxu0 %v6350
    %6809 = vmatprep.subr.bf16.mxu0 %v6359
    %6810 = vmatpush1.bf16.msra.mxu0 %v6358
    %6811 = vmatprep.subr.bf16.mxu0 %v6367
    %6812 = vmatpush1.bf16.msra.mxu0 %v6366
    %6813 = vmatprep.subr.bf16.mxu0 %v6375
    %6814 = vmatpush1.bf16.msra.mxu0 %v6374
    %6815 = vmatprep.subr.bf16.mxu0 %v6383
    %6816 = vmatpush1.bf16.msra.mxu0 %v6382
    %6817 = vmatprep.subr.bf16.mxu0 %v6391
    %6818 = vmatpush1.bf16.msra.mxu0 %v6390
    %6819 = vmatprep.subr.bf16.mxu0 %v6399
    %6820 = vmatpush1.bf16.msra.mxu0 %v6398
    %6821 = vmatprep.mubr.bf16.mxu0 %v5081
    %6822 = vmatmul.mubr.bf16.gmra.mrb[0].mxu0 %v5080
    %v6823 = vpop.f32.mrb[0].mxu0
    %v6824 = vadd.f32 %v6781, %v6823
    %v6825 = vpop.f32.mrb[0].mxu0
    %v6826 = vadd.f32 %v6783, %v6825
    %v6827 = vpop.f32.mrb[0].mxu0
    %v6828 = vadd.f32 %v6785, %v6827
    %v6829 = vpop.f32.mrb[0].mxu0
    %v6830 = vadd.f32 %v6787, %v6829
    %6831 = vdwg.mxu0
    %6832 = vmatprep.subr.bf16.mxu0 %v6153
    %6833 = vmatpush1.bf16.msra.mxu0 %v6152
    %6834 = vmatprep.subr.bf16.mxu0 %v6161
    %6835 = vmatpush1.bf16.msra.mxu0 %v6160
    %6836 = vmatprep.subr.bf16.mxu0 %v6169
    %6837 = vmatpush1.bf16.msra.mxu0 %v6168
    %6838 = vmatprep.subr.bf16.mxu0 %v6177
    %6839 = vmatpush1.bf16.msra.mxu0 %v6176
    %6840 = vmatprep.subr.bf16.mxu0 %v6185
    %6841 = vmatpush1.bf16.msra.mxu0 %v6184
    %6842 = vmatprep.subr.bf16.mxu0 %v6193
    %6843 = vmatpush1.bf16.msra.mxu0 %v6192
    %6844 = vmatprep.subr.bf16.mxu0 %v6201
    %6845 = vmatpush1.bf16.msra.mxu0 %v6200
    %6846 = vmatprep.subr.bf16.mxu0 %v6209
    %6847 = vmatpush1.bf16.msra.mxu0 %v6208
    %6848 = vmatprep.subr.bf16.mxu0 %v6217
    %6849 = vmatpush1.bf16.msra.mxu0 %v6216
    %6850 = vmatprep.subr.bf16.mxu0 %v6225
    %6851 = vmatpush1.bf16.msra.mxu0 %v6224
    %6852 = vmatprep.subr.bf16.mxu0 %v6233
    %6853 = vmatpush1.bf16.msra.mxu0 %v6232
    %6854 = vmatprep.subr.bf16.mxu0 %v6241
    %6855 = vmatpush1.bf16.msra.mxu0 %v6240
    %6856 = vmatprep.subr.bf16.mxu0 %v6249
    %6857 = vmatpush1.bf16.msra.mxu0 %v6248
    %6858 = vmatprep.subr.bf16.mxu0 %v6257
    %6859 = vmatpush1.bf16.msra.mxu0 %v6256
    %6860 = vmatprep.subr.bf16.mxu0 %v6265
    %6861 = vmatpush1.bf16.msra.mxu0 %v6264
    %6862 = vmatprep.subr.bf16.mxu0 %v6273
    %6863 = vmatpush1.bf16.msra.mxu0 %v6272
    %6864 = vmatprep.mubr.bf16.mxu0 %v5079
    %6865 = vmatmul.mubr.bf16.gmra.mrb[0].mxu0 %v5078
    %v6866 = vpop.f32.mrb[0].mxu0
    %v6867 = vadd.f32 %v5359, %v6866
    %v6868 = vpop.f32.mrb[0].mxu0
    %v6869 = vadd.f32 %v5363, %v6868
    %v6870 = vpop.f32.mrb[0].mxu0
    %v6871 = vadd.f32 %v5359, %v6870
    %v6872 = vpop.f32.mrb[0].mxu0
    %v6873 = vadd.f32 %v5363, %v6872
    %6874 = vdwg.mxu0
    %6875 = vmatprep.subr.bf16.mxu0 %v6281
    %6876 = vmatpush1.bf16.msra.mxu0 %v6280
    %6877 = vmatprep.subr.bf16.mxu0 %v6289
    %6878 = vmatpush1.bf16.msra.mxu0 %v6288
    %6879 = vmatprep.subr.bf16.mxu0 %v6297
    %6880 = vmatpush1.bf16.msra.mxu0 %v6296
    %6881 = vmatprep.subr.bf16.mxu0 %v6305
    %6882 = vmatpush1.bf16.msra.mxu0 %v6304
    %6883 = vmatprep.subr.bf16.mxu0 %v6313
    %6884 = vmatpush1.bf16.msra.mxu0 %v6312
    %6885 = vmatprep.subr.bf16.mxu0 %v6321
    %6886 = vmatpush1.bf16.msra.mxu0 %v6320
    %6887 = vmatprep.subr.bf16.mxu0 %v6329
    %6888 = vmatpush1.bf16.msra.mxu0 %v6328
    %6889 = vmatprep.subr.bf16.mxu0 %v6337
    %6890 = vmatpush1.bf16.msra.mxu0 %v6336
    %6891 = vmatprep.subr.bf16.mxu0 %v6345
    %6892 = vmatpush1.bf16.msra.mxu0 %v6344
    %6893 = vmatprep.subr.bf16.mxu0 %v6353
    %6894 = vmatpush1.bf16.msra.mxu0 %v6352
    %6895 = vmatprep.subr.bf16.mxu0 %v6361
    %6896 = vmatpush1.bf16.msra.mxu0 %v6360
    %6897 = vmatprep.subr.bf16.mxu0 %v6369
    %6898 = vmatpush1.bf16.msra.mxu0 %v6368
    %6899 = vmatprep.subr.bf16.mxu0 %v6377
    %6900 = vmatpush1.bf16.msra.mxu0 %v6376
    %6901 = vmatprep.subr.bf16.mxu0 %v6385
    %6902 = vmatpush1.bf16.msra.mxu0 %v6384
    %6903 = vmatprep.subr.bf16.mxu0 %v6393
    %6904 = vmatpush1.bf16.msra.mxu0 %v6392
    %6905 = vmatprep.subr.bf16.mxu0 %v6401
    %6906 = vmatpush1.bf16.msra.mxu0 %v6400
    %6907 = vmatprep.mubr.bf16.mxu0 %v5081
    %6908 = vmatmul.mubr.bf16.gmra.mrb[0].mxu0 %v5080
    %v6909 = vpop.f32.mrb[0].mxu0
    %v6910 = vadd.f32 %v6867, %v6909
    %v6911 = vpop.f32.mrb[0].mxu0
    %v6912 = vadd.f32 %v6869, %v6911
    %v6913 = vpop.f32.mrb[0].mxu0
    %v6914 = vadd.f32 %v6871, %v6913
    %v6915 = vpop.f32.mrb[0].mxu0
    %v6916 = vadd.f32 %v6873, %v6915
    %6917 = vdwg.mxu0
    %6918 = vmatprep.subr.bf16.mxu0 %v6155
    %6919 = vmatpush1.bf16.msra.mxu0 %v6154
    %6920 = vmatprep.subr.bf16.mxu0 %v6163
    %6921 = vmatpush1.bf16.msra.mxu0 %v6162
    %6922 = vmatprep.subr.bf16.mxu0 %v6171
    %6923 = vmatpush1.bf16.msra.mxu0 %v6170
    %6924 = vmatprep.subr.bf16.mxu0 %v6179
    %6925 = vmatpush1.bf16.msra.mxu0 %v6178
    %6926 = vmatprep.subr.bf16.mxu0 %v6187
    %6927 = vmatpush1.bf16.msra.mxu0 %v6186
    %6928 = vmatprep.subr.bf16.mxu0 %v6195
    %6929 = vmatpush1.bf16.msra.mxu0 %v6194
    %6930 = vmatprep.subr.bf16.mxu0 %v6203
    %6931 = vmatpush1.bf16.msra.mxu0 %v6202
    %6932 = vmatprep.subr.bf16.mxu0 %v6211
    %6933 = vmatpush1.bf16.msra.mxu0 %v6210
    %6934 = vmatprep.subr.bf16.mxu0 %v6219
    %6935 = vmatpush1.bf16.msra.mxu0 %v6218
    %6936 = vmatprep.subr.bf16.mxu0 %v6227
    %6937 = vmatpush1.bf16.msra.mxu0 %v6226
    %6938 = vmatprep.subr.bf16.mxu0 %v6235
    %6939 = vmatpush1.bf16.msra.mxu0 %v6234
    %6940 = vmatprep.subr.bf16.mxu0 %v6243
    %6941 = vmatpush1.bf16.msra.mxu0 %v6242
    %6942 = vmatprep.subr.bf16.mxu0 %v6251
    %6943 = vmatpush1.bf16.msra.mxu0 %v6250
    %6944 = vmatprep.subr.bf16.mxu0 %v6259
    %6945 = vmatpush1.bf16.msra.mxu0 %v6258
    %6946 = vmatprep.subr.bf16.mxu0 %v6267
    %6947 = vmatpush1.bf16.msra.mxu0 %v6266
    %6948 = vmatprep.subr.bf16.mxu0 %v6275
    %6949 = vmatpush1.bf16.msra.mxu0 %v6274
    %6950 = vmatprep.mubr.bf16.mxu0 %v5079
    %6951 = vmatmul.mubr.bf16.gmra.mrb[0].mxu0 %v5078
    %v6952 = vpop.f32.mrb[0].mxu0
    %v6953 = vadd.f32 %v5367, %v6952
    %v6954 = vpop.f32.mrb[0].mxu0
    %v6955 = vadd.f32 %v5371, %v6954
    %v6956 = vpop.f32.mrb[0].mxu0
    %v6957 = vadd.f32 %v5367, %v6956
    %v6958 = vpop.f32.mrb[0].mxu0
    %v6959 = vadd.f32 %v5371, %v6958
    %6960 = vdwg.mxu0
    %6961 = vmatprep.subr.bf16.mxu0 %v6283
    %6962 = vmatpush1.bf16.msra.mxu0 %v6282
    %6963 = vmatprep.subr.bf16.mxu0 %v6291
    %6964 = vmatpush1.bf16.msra.mxu0 %v6290
    %6965 = vmatprep.subr.bf16.mxu0 %v6299
    %6966 = vmatpush1.bf16.msra.mxu0 %v6298
    %6967 = vmatprep.subr.bf16.mxu0 %v6307
    %6968 = vmatpush1.bf16.msra.mxu0 %v6306
    %6969 = vmatprep.subr.bf16.mxu0 %v6315
    %6970 = vmatpush1.bf16.msra.mxu0 %v6314
    %6971 = vmatprep.subr.bf16.mxu0 %v6323
    %6972 = vmatpush1.bf16.msra.mxu0 %v6322
    %6973 = vmatprep.subr.bf16.mxu0 %v6331
    %6974 = vmatpush1.bf16.msra.mxu0 %v6330
    %6975 = vmatprep.subr.bf16.mxu0 %v6339
    %6976 = vmatpush1.bf16.msra.mxu0 %v6338
    %6977 = vmatprep.subr.bf16.mxu0 %v6347
    %6978 = vmatpush1.bf16.msra.mxu0 %v6346
    %6979 = vmatprep.subr.bf16.mxu0 %v6355
    %6980 = vmatpush1.bf16.msra.mxu0 %v6354
    %6981 = vmatprep.subr.bf16.mxu0 %v6363
    %6982 = vmatpush1.bf16.msra.mxu0 %v6362
    %6983 = vmatprep.subr.bf16.mxu0 %v6371
    %6984 = vmatpush1.bf16.msra.mxu0 %v6370
    %6985 = vmatprep.subr.bf16.mxu0 %v6379
    %6986 = vmatpush1.bf16.msra.mxu0 %v6378
    %6987 = vmatprep.subr.bf16.mxu0 %v6387
    %6988 = vmatpush1.bf16.msra.mxu0 %v6386
    %6989 = vmatprep.subr.bf16.mxu0 %v6395
    %6990 = vmatpush1.bf16.msra.mxu0 %v6394
    %6991 = vmatprep.subr.bf16.mxu0 %v6403
    %6992 = vmatpush1.bf16.msra.mxu0 %v6402
    %6993 = vmatprep.mubr.bf16.mxu0 %v5081
    %6994 = vmatmul.mubr.bf16.gmra.mrb[0].mxu0 %v5080
    %v6995 = vpop.f32.mrb[0].mxu0
    %v6996 = vadd.f32 %v6953, %v6995
    %v6997 = vpop.f32.mrb[0].mxu0
    %v6998 = vadd.f32 %v6955, %v6997
    %v6999 = vpop.f32.mrb[0].mxu0
    %v7000 = vadd.f32 %v6957, %v6999
    %v7001 = vpop.f32.mrb[0].mxu0
    %v7002 = vadd.f32 %v6959, %v7001
    %7003 = vdwg.mxu0
    %v7004 = vmax.f32 %v6738, 0.0
    %v7005 = vmax.f32 %v6740, 0.0
    %v7006 = vmax.f32 %v6824, 0.0
    %v7007 = vmax.f32 %v6826, 0.0
    %v7008 = vmax.f32 %v6910, 0.0
    %v7009 = vmax.f32 %v6912, 0.0
    %v7010 = vmax.f32 %v6996, 0.0
    %v7011 = vmax.f32 %v6998, 0.0
    %v7012 = vmax.f32 %v6742, 0.0
    %v7013 = vmax.f32 %v6744, 0.0
    %v7014 = vmax.f32 %v6828, 0.0
    %v7015 = vmax.f32 %v6830, 0.0
    %v7016 = vmax.f32 %v6914, 0.0
    %v7017 = vmax.f32 %v6916, 0.0
    %v7018 = vmax.f32 %v7000, 0.0
    %v7019 = vmax.f32 %v7002, 0.0
    %v7020 = vpack.c.bf16 %v7012, %v7004
    %v7021 = vpack.c.bf16 %v7013, %v7005
    %v7022 = vpack.c.bf16 %v7014, %v7006
    %v7023 = vpack.c.bf16 %v7015, %v7007
    %v7024 = vpack.c.bf16 %v7016, %v7008
    %v7025 = vpack.c.bf16 %v7017, %v7009
    %v7026 = vpack.c.bf16 %v7018, %v7010
    %v7027 = vpack.c.bf16 %v7019, %v7011
    %v7028 = vld [vmem:[%s11] sm:$0xf]
    %v7029 = vld [vmem:[%s11 + $0x4] sm:$0xf]
    %v7030 = vld [vmem:[%s11 + $0x8] sm:$0xf]
    %v7031 = vld [vmem:[%s11 + $0xc] sm:$0xf]
    %v7032 = vld [vmem:[%s11 + $0x10] sm:$0xf]
    %v7033 = vld [vmem:[%s11 + $0x14] sm:$0xf]
    %v7034 = vld [vmem:[%s11 + $0x18] sm:$0xf]
    %v7035 = vld [vmem:[%s11 + $0x1c] sm:$0xf]
    %v7036 = vld [vmem:[%s11 + $0x20] sm:$0xf]
    %v7037 = vld [vmem:[%s11 + $0x24] sm:$0xf]
    %v7038 = vld [vmem:[%s11 + $0x28] sm:$0xf]
    %v7039 = vld [vmem:[%s11 + $0x2c] sm:$0xf]
    %v7040 = vld [vmem:[%s11 + $0x30] sm:$0xf]
    %v7041 = vld [vmem:[%s11 + $0x34] sm:$0xf]
    %v7042 = vld [vmem:[%s11 + $0x38] sm:$0xf]
    %v7043 = vld [vmem:[%s11 + $0x3c] sm:$0xf]
    %v7044 = vld [vmem:[%s11 + $0x40] sm:$0xf]
    %v7045 = vld [vmem:[%s11 + $0x44] sm:$0xf]
    %v7046 = vld [vmem:[%s11 + $0x48] sm:$0xf]
    %v7047 = vld [vmem:[%s11 + $0x4c] sm:$0xf]
    %v7048 = vld [vmem:[%s11 + $0x50] sm:$0xf]
    %v7049 = vld [vmem:[%s11 + $0x54] sm:$0xf]
    %v7050 = vld [vmem:[%s11 + $0x58] sm:$0xf]
    %v7051 = vld [vmem:[%s11 + $0x5c] sm:$0xf]
    %v7052 = vld [vmem:[%s11 + $0x60] sm:$0xf]
    %v7053 = vld [vmem:[%s11 + $0x64] sm:$0xf]
    %v7054 = vld [vmem:[%s11 + $0x68] sm:$0xf]
    %v7055 = vld [vmem:[%s11 + $0x6c] sm:$0xf]
    %v7056 = vld [vmem:[%s11 + $0x70] sm:$0xf]
    %v7057 = vld [vmem:[%s11 + $0x74] sm:$0xf]
    %v7058 = vld [vmem:[%s11 + $0x78] sm:$0xf]
    %v7059 = vld [vmem:[%s11 + $0x7c] sm:$0xf]
    %v7060 = vld [vmem:[%s11 + $0x80] sm:$0xf]
    %v7061 = vld [vmem:[%s11 + $0x84] sm:$0xf]
    %v7062 = vld [vmem:[%s11 + $0x88] sm:$0xf]
    %v7063 = vld [vmem:[%s11 + $0x8c] sm:$0xf]
    %v7064 = vld [vmem:[%s11 + $0x90] sm:$0xf]
    %v7065 = vld [vmem:[%s11 + $0x94] sm:$0xf]
    %v7066 = vld [vmem:[%s11 + $0x98] sm:$0xf]
    %v7067 = vld [vmem:[%s11 + $0x9c] sm:$0xf]
    %v7068 = vld [vmem:[%s11 + $0xa0] sm:$0xf]
    %v7069 = vld [vmem:[%s11 + $0xa4] sm:$0xf]
    %v7070 = vld [vmem:[%s11 + $0xa8] sm:$0xf]
    %v7071 = vld [vmem:[%s11 + $0xac] sm:$0xf]
    %v7072 = vld [vmem:[%s11 + $0xb0] sm:$0xf]
    %v7073 = vld [vmem:[%s11 + $0xb4] sm:$0xf]
    %v7074 = vld [vmem:[%s11 + $0xb8] sm:$0xf]
    %v7075 = vld [vmem:[%s11 + $0xbc] sm:$0xf]
    %v7076 = vld [vmem:[%s11 + $0xc0] sm:$0xf]
    %v7077 = vld [vmem:[%s11 + $0xc4] sm:$0xf]
    %v7078 = vld [vmem:[%s11 + $0xc8] sm:$0xf]
    %v7079 = vld [vmem:[%s11 + $0xcc] sm:$0xf]
    %v7080 = vld [vmem:[%s11 + $0xd0] sm:$0xf]
    %v7081 = vld [vmem:[%s11 + $0xd4] sm:$0xf]
    %v7082 = vld [vmem:[%s11 + $0xd8] sm:$0xf]
    %v7083 = vld [vmem:[%s11 + $0xdc] sm:$0xf]
    %v7084 = vld [vmem:[%s11 + $0xe0] sm:$0xf]
    %v7085 = vld [vmem:[%s11 + $0xe4] sm:$0xf]
    %v7086 = vld [vmem:[%s11 + $0xe8] sm:$0xf]
    %v7087 = vld [vmem:[%s11 + $0xec] sm:$0xf]
    %v7088 = vld [vmem:[%s11 + $0xf0] sm:$0xf]
    %v7089 = vld [vmem:[%s11 + $0xf4] sm:$0xf]
    %v7090 = vld [vmem:[%s11 + $0xf8] sm:$0xf]
    %v7091 = vld [vmem:[%s11 + $0xfc] sm:$0xf]
    %v7092 = vld [vmem:[%s11 + $0x100] sm:$0xf]
    %v7093 = vld [vmem:[%s11 + $0x104] sm:$0xf]
    %v7094 = vld [vmem:[%s11 + $0x108] sm:$0xf]
    %v7095 = vld [vmem:[%s11 + $0x10c] sm:$0xf]
    %v7096 = vld [vmem:[%s11 + $0x110] sm:$0xf]
    %v7097 = vld [vmem:[%s11 + $0x114] sm:$0xf]
    %v7098 = vld [vmem:[%s11 + $0x118] sm:$0xf]
    %v7099 = vld [vmem:[%s11 + $0x11c] sm:$0xf]
    %v7100 = vld [vmem:[%s11 + $0x120] sm:$0xf]
    %v7101 = vld [vmem:[%s11 + $0x124] sm:$0xf]
    %v7102 = vld [vmem:[%s11 + $0x128] sm:$0xf]
    %v7103 = vld [vmem:[%s11 + $0x12c] sm:$0xf]
    %v7104 = vld [vmem:[%s11 + $0x130] sm:$0xf]
    %v7105 = vld [vmem:[%s11 + $0x134] sm:$0xf]
    %v7106 = vld [vmem:[%s11 + $0x138] sm:$0xf]
    %v7107 = vld [vmem:[%s11 + $0x13c] sm:$0xf]
    %v7108 = vld [vmem:[%s11 + $0x140] sm:$0xf]
    %v7109 = vld [vmem:[%s11 + $0x144] sm:$0xf]
    %v7110 = vld [vmem:[%s11 + $0x148] sm:$0xf]
    %v7111 = vld [vmem:[%s11 + $0x14c] sm:$0xf]
    %v7112 = vld [vmem:[%s11 + $0x150] sm:$0xf]
    %v7113 = vld [vmem:[%s11 + $0x154] sm:$0xf]
    %v7114 = vld [vmem:[%s11 + $0x158] sm:$0xf]
    %v7115 = vld [vmem:[%s11 + $0x15c] sm:$0xf]
    %v7116 = vld [vmem:[%s11 + $0x160] sm:$0xf]
    %v7117 = vld [vmem:[%s11 + $0x164] sm:$0xf]
    %v7118 = vld [vmem:[%s11 + $0x168] sm:$0xf]
    %v7119 = vld [vmem:[%s11 + $0x16c] sm:$0xf]
    %v7120 = vld [vmem:[%s11 + $0x170] sm:$0xf]
    %v7121 = vld [vmem:[%s11 + $0x174] sm:$0xf]
    %v7122 = vld [vmem:[%s11 + $0x178] sm:$0xf]
    %v7123 = vld [vmem:[%s11 + $0x17c] sm:$0xf]
    %v7124 = vld [vmem:[%s11 + $0x180] sm:$0xf]
    %v7125 = vld [vmem:[%s11 + $0x184] sm:$0xf]
    %v7126 = vld [vmem:[%s11 + $0x188] sm:$0xf]
    %v7127 = vld [vmem:[%s11 + $0x18c] sm:$0xf]
    %v7128 = vld [vmem:[%s11 + $0x190] sm:$0xf]
    %v7129 = vld [vmem:[%s11 + $0x194] sm:$0xf]
    %v7130 = vld [vmem:[%s11 + $0x198] sm:$0xf]
    %v7131 = vld [vmem:[%s11 + $0x19c] sm:$0xf]
    %v7132 = vld [vmem:[%s11 + $0x1a0] sm:$0xf]
    %v7133 = vld [vmem:[%s11 + $0x1a4] sm:$0xf]
    %v7134 = vld [vmem:[%s11 + $0x1a8] sm:$0xf]
    %v7135 = vld [vmem:[%s11 + $0x1ac] sm:$0xf]
    %v7136 = vld [vmem:[%s11 + $0x1b0] sm:$0xf]
    %v7137 = vld [vmem:[%s11 + $0x1b4] sm:$0xf]
    %v7138 = vld [vmem:[%s11 + $0x1b8] sm:$0xf]
    %v7139 = vld [vmem:[%s11 + $0x1bc] sm:$0xf]
    %v7140 = vld [vmem:[%s11 + $0x1c0] sm:$0xf]
    %v7141 = vld [vmem:[%s11 + $0x1c4] sm:$0xf]
    %v7142 = vld [vmem:[%s11 + $0x1c8] sm:$0xf]
    %v7143 = vld [vmem:[%s11 + $0x1cc] sm:$0xf]
    %v7144 = vld [vmem:[%s11 + $0x1d0] sm:$0xf]
    %v7145 = vld [vmem:[%s11 + $0x1d4] sm:$0xf]
    %v7146 = vld [vmem:[%s11 + $0x1d8] sm:$0xf]
    %v7147 = vld [vmem:[%s11 + $0x1dc] sm:$0xf]
    %v7148 = vld [vmem:[%s11 + $0x1e0] sm:$0xf]
    %v7149 = vld [vmem:[%s11 + $0x1e4] sm:$0xf]
    %v7150 = vld [vmem:[%s11 + $0x1e8] sm:$0xf]
    %v7151 = vld [vmem:[%s11 + $0x1ec] sm:$0xf]
    %v7152 = vld [vmem:[%s11 + $0x1f0] sm:$0xf]
    %v7153 = vld [vmem:[%s11 + $0x1f4] sm:$0xf]
    %v7154 = vld [vmem:[%s11 + $0x1f8] sm:$0xf]
    %v7155 = vld [vmem:[%s11 + $0x1fc] sm:$0xf]
    %v7156 = vld [vmem:[%s12] sm:$0x1]
    %v7158 = vlaneseq
    %v7159 = vshrl.u32 %v7158, 7
    %v7160 = vsub.s32 0, %v7159
    %v7161 = vrot.slane %v7156, %v7160
    %v7291 = vunpack.c.l.b16 %v7028
    %v7292 = vunpack.c.l.b16 %v7029
    %v7293 = vunpack.c.l.b16 %v7030
    %v7294 = vunpack.c.l.b16 %v7031
    %v7295 = vunpack.c.l.b16 %v7032
    %v7296 = vunpack.c.l.b16 %v7033
    %v7297 = vunpack.c.l.b16 %v7034
    %v7298 = vunpack.c.l.b16 %v7035
    %v7299 = vunpack.c.l.b16 %v7036
    %v7300 = vunpack.c.l.b16 %v7037
    %v7301 = vunpack.c.l.b16 %v7038
    %v7302 = vunpack.c.l.b16 %v7039
    %v7303 = vunpack.c.l.b16 %v7040
    %v7304 = vunpack.c.l.b16 %v7041
    %v7305 = vunpack.c.l.b16 %v7042
    %v7306 = vunpack.c.l.b16 %v7043
    %v7307 = vunpack.c.l.b16 %v7044
    %v7308 = vunpack.c.l.b16 %v7045
    %v7309 = vunpack.c.l.b16 %v7046
    %v7310 = vunpack.c.l.b16 %v7047
    %v7311 = vunpack.c.l.b16 %v7048
    %v7312 = vunpack.c.l.b16 %v7049
    %v7313 = vunpack.c.l.b16 %v7050
    %v7314 = vunpack.c.l.b16 %v7051
    %v7315 = vunpack.c.l.b16 %v7052
    %v7316 = vunpack.c.l.b16 %v7053
    %v7317 = vunpack.c.l.b16 %v7054
    %v7318 = vunpack.c.l.b16 %v7055
    %v7319 = vunpack.c.l.b16 %v7056
    %v7320 = vunpack.c.l.b16 %v7057
    %v7321 = vunpack.c.l.b16 %v7058
    %v7322 = vunpack.c.l.b16 %v7059
    %v7323 = vunpack.c.l.b16 %v7060
    %v7324 = vunpack.c.l.b16 %v7061
    %v7325 = vunpack.c.l.b16 %v7062
    %v7326 = vunpack.c.l.b16 %v7063
    %v7327 = vunpack.c.l.b16 %v7064
    %v7328 = vunpack.c.l.b16 %v7065
    %v7329 = vunpack.c.l.b16 %v7066
    %v7330 = vunpack.c.l.b16 %v7067
    %v7331 = vunpack.c.l.b16 %v7068
    %v7332 = vunpack.c.l.b16 %v7069
    %v7333 = vunpack.c.l.b16 %v7070
    %v7334 = vunpack.c.l.b16 %v7071
    %v7335 = vunpack.c.l.b16 %v7072
    %v7336 = vunpack.c.l.b16 %v7073
    %v7337 = vunpack.c.l.b16 %v7074
    %v7338 = vunpack.c.l.b16 %v7075
    %v7339 = vunpack.c.l.b16 %v7076
    %v7340 = vunpack.c.l.b16 %v7077
    %v7341 = vunpack.c.l.b16 %v7078
    %v7342 = vunpack.c.l.b16 %v7079
    %v7343 = vunpack.c.l.b16 %v7080
    %v7344 = vunpack.c.l.b16 %v7081
    %v7345 = vunpack.c.l.b16 %v7082
    %v7346 = vunpack.c.l.b16 %v7083
    %v7347 = vunpack.c.l.b16 %v7084
    %v7348 = vunpack.c.l.b16 %v7085
    %v7349 = vunpack.c.l.b16 %v7086
    %v7350 = vunpack.c.l.b16 %v7087
    %v7351 = vunpack.c.l.b16 %v7088
    %v7352 = vunpack.c.l.b16 %v7089
    %v7353 = vunpack.c.l.b16 %v7090
    %v7354 = vunpack.c.l.b16 %v7091
    %v7355 = vunpack.c.l.b16 %v7092
    %v7356 = vunpack.c.l.b16 %v7093
    %v7357 = vunpack.c.l.b16 %v7094
    %v7358 = vunpack.c.l.b16 %v7095
    %v7359 = vunpack.c.l.b16 %v7096
    %v7360 = vunpack.c.l.b16 %v7097
    %v7361 = vunpack.c.l.b16 %v7098
    %v7362 = vunpack.c.l.b16 %v7099
    %v7363 = vunpack.c.l.b16 %v7100
    %v7364 = vunpack.c.l.b16 %v7101
    %v7365 = vunpack.c.l.b16 %v7102
    %v7366 = vunpack.c.l.b16 %v7103
    %v7367 = vunpack.c.l.b16 %v7104
    %v7368 = vunpack.c.l.b16 %v7105
    %v7369 = vunpack.c.l.b16 %v7106
    %v7370 = vunpack.c.l.b16 %v7107
    %v7371 = vunpack.c.l.b16 %v7108
    %v7372 = vunpack.c.l.b16 %v7109
    %v7373 = vunpack.c.l.b16 %v7110
    %v7374 = vunpack.c.l.b16 %v7111
    %v7375 = vunpack.c.l.b16 %v7112
    %v7376 = vunpack.c.l.b16 %v7113
    %v7377 = vunpack.c.l.b16 %v7114
    %v7378 = vunpack.c.l.b16 %v7115
    %v7379 = vunpack.c.l.b16 %v7116
    %v7380 = vunpack.c.l.b16 %v7117
    %v7381 = vunpack.c.l.b16 %v7118
    %v7382 = vunpack.c.l.b16 %v7119
    %v7383 = vunpack.c.l.b16 %v7120
    %v7384 = vunpack.c.l.b16 %v7121
    %v7385 = vunpack.c.l.b16 %v7122
    %v7386 = vunpack.c.l.b16 %v7123
    %v7387 = vunpack.c.l.b16 %v7124
    %v7388 = vunpack.c.l.b16 %v7125
    %v7389 = vunpack.c.l.b16 %v7126
    %v7390 = vunpack.c.l.b16 %v7127
    %v7391 = vunpack.c.l.b16 %v7128
    %v7392 = vunpack.c.l.b16 %v7129
    %v7393 = vunpack.c.l.b16 %v7130
    %v7394 = vunpack.c.l.b16 %v7131
    %v7395 = vunpack.c.l.b16 %v7132
    %v7396 = vunpack.c.l.b16 %v7133
    %v7397 = vunpack.c.l.b16 %v7134
    %v7398 = vunpack.c.l.b16 %v7135
    %v7399 = vunpack.c.l.b16 %v7136
    %v7400 = vunpack.c.l.b16 %v7137
    %v7401 = vunpack.c.l.b16 %v7138
    %v7402 = vunpack.c.l.b16 %v7139
    %v7403 = vunpack.c.l.b16 %v7140
    %v7404 = vunpack.c.l.b16 %v7141
    %v7405 = vunpack.c.l.b16 %v7142
    %v7406 = vunpack.c.l.b16 %v7143
    %v7407 = vunpack.c.l.b16 %v7144
    %v7408 = vunpack.c.l.b16 %v7145
    %v7409 = vunpack.c.l.b16 %v7146
    %v7410 = vunpack.c.l.b16 %v7147
    %v7411 = vunpack.c.l.b16 %v7148
    %v7412 = vunpack.c.l.b16 %v7149
    %v7413 = vunpack.c.l.b16 %v7150
    %v7414 = vunpack.c.l.b16 %v7151
    %v7415 = vunpack.c.l.b16 %v7152
    %v7416 = vunpack.c.l.b16 %v7153
    %v7417 = vunpack.c.l.b16 %v7154
    %v7418 = vunpack.c.l.b16 %v7155
    %v7419 = vpack.c.b16 %v7292, %v7291
    %v7420 = vpack.c.b16 %v7294, %v7293
    %v7421 = vpack.c.b16 %v7296, %v7295
    %v7422 = vpack.c.b16 %v7298, %v7297
    %v7423 = vpack.c.b16 %v7300, %v7299
    %v7424 = vpack.c.b16 %v7302, %v7301
    %v7425 = vpack.c.b16 %v7304, %v7303
    %v7426 = vpack.c.b16 %v7306, %v7305
    %v7427 = vpack.c.b16 %v7308, %v7307
    %v7428 = vpack.c.b16 %v7310, %v7309
    %v7429 = vpack.c.b16 %v7312, %v7311
    %v7430 = vpack.c.b16 %v7314, %v7313
    %v7431 = vpack.c.b16 %v7316, %v7315
    %v7432 = vpack.c.b16 %v7318, %v7317
    %v7433 = vpack.c.b16 %v7320, %v7319
    %v7434 = vpack.c.b16 %v7322, %v7321
    %v7435 = vpack.c.b16 %v7324, %v7323
    %v7436 = vpack.c.b16 %v7326, %v7325
    %v7437 = vpack.c.b16 %v7328, %v7327
    %v7438 = vpack.c.b16 %v7330, %v7329
    %v7439 = vpack.c.b16 %v7332, %v7331
    %v7440 = vpack.c.b16 %v7334, %v7333
    %v7441 = vpack.c.b16 %v7336, %v7335
    %v7442 = vpack.c.b16 %v7338, %v7337
    %v7443 = vpack.c.b16 %v7340, %v7339
    %v7444 = vpack.c.b16 %v7342, %v7341
    %v7445 = vpack.c.b16 %v7344, %v7343
    %v7446 = vpack.c.b16 %v7346, %v7345
    %v7447 = vpack.c.b16 %v7348, %v7347
    %v7448 = vpack.c.b16 %v7350, %v7349
    %v7449 = vpack.c.b16 %v7352, %v7351
    %v7450 = vpack.c.b16 %v7354, %v7353
    %v7451 = vpack.c.b16 %v7356, %v7355
    %v7452 = vpack.c.b16 %v7358, %v7357
    %v7453 = vpack.c.b16 %v7360, %v7359
    %v7454 = vpack.c.b16 %v7362, %v7361
    %v7455 = vpack.c.b16 %v7364, %v7363
    %v7456 = vpack.c.b16 %v7366, %v7365
    %v7457 = vpack.c.b16 %v7368, %v7367
    %v7458 = vpack.c.b16 %v7370, %v7369
    %v7459 = vpack.c.b16 %v7372, %v7371
    %v7460 = vpack.c.b16 %v7374, %v7373
    %v7461 = vpack.c.b16 %v7376, %v7375
    %v7462 = vpack.c.b16 %v7378, %v7377
    %v7463 = vpack.c.b16 %v7380, %v7379
    %v7464 = vpack.c.b16 %v7382, %v7381
    %v7465 = vpack.c.b16 %v7384, %v7383
    %v7466 = vpack.c.b16 %v7386, %v7385
    %v7467 = vpack.c.b16 %v7388, %v7387
    %v7468 = vpack.c.b16 %v7390, %v7389
    %v7469 = vpack.c.b16 %v7392, %v7391
    %v7470 = vpack.c.b16 %v7394, %v7393
    %v7471 = vpack.c.b16 %v7396, %v7395
    %v7472 = vpack.c.b16 %v7398, %v7397
    %v7473 = vpack.c.b16 %v7400, %v7399
    %v7474 = vpack.c.b16 %v7402, %v7401
    %v7475 = vpack.c.b16 %v7404, %v7403
    %v7476 = vpack.c.b16 %v7406, %v7405
    %v7477 = vpack.c.b16 %v7408, %v7407
    %v7478 = vpack.c.b16 %v7410, %v7409
    %v7479 = vpack.c.b16 %v7412, %v7411
    %v7480 = vpack.c.b16 %v7414, %v7413
    %v7481 = vpack.c.b16 %v7416, %v7415
    %v7482 = vpack.c.b16 %v7418, %v7417
    %7547 = vmatprep.subr.bf16.mxu0 0
    %7548 = vmatpush1.bf16.msra.mxu0 %v7419
    %7549 = vmatprep.subr.bf16.mxu0 0
    %7550 = vmatpush1.bf16.msra.mxu0 %v7420
    %7551 = vmatprep.subr.bf16.mxu0 0
    %7552 = vmatpush1.bf16.msra.mxu0 %v7421
    %7553 = vmatprep.subr.bf16.mxu0 0
    %7554 = vmatpush1.bf16.msra.mxu0 %v7422
    %7555 = vmatprep.subr.bf16.mxu0 0
    %7556 = vmatpush1.bf16.msra.mxu0 %v7423
    %7557 = vmatprep.subr.bf16.mxu0 0
    %7558 = vmatpush1.bf16.msra.mxu0 %v7424
    %7559 = vmatprep.subr.bf16.mxu0 0
    %7560 = vmatpush1.bf16.msra.mxu0 %v7425
    %7561 = vmatprep.subr.bf16.mxu0 0
    %7562 = vmatpush1.bf16.msra.mxu0 %v7426
    %7563 = vmatprep.subr.bf16.mxu0 0
    %7564 = vmatpush1.bf16.msra.mxu0 %v7427
    %7565 = vmatprep.subr.bf16.mxu0 0
    %7566 = vmatpush1.bf16.msra.mxu0 %v7428
    %7567 = vmatprep.subr.bf16.mxu0 0
    %7568 = vmatpush1.bf16.msra.mxu0 %v7429
    %7569 = vmatprep.subr.bf16.mxu0 0
    %7570 = vmatpush1.bf16.msra.mxu0 %v7430
    %7571 = vmatprep.subr.bf16.mxu0 0
    %7572 = vmatpush1.bf16.msra.mxu0 %v7431
    %7573 = vmatprep.subr.bf16.mxu0 0
    %7574 = vmatpush1.bf16.msra.mxu0 %v7432
    %7575 = vmatprep.subr.bf16.mxu0 0
    %7576 = vmatpush1.bf16.msra.mxu0 %v7433
    %7577 = vmatprep.subr.bf16.mxu0 0
    %7578 = vmatpush1.bf16.msra.mxu0 %v7434
    %7579 = vmatprep.mubr.bf16.mxu0 %v7021
    %7580 = vmatmul.mubr.bf16.gmra.mrb[0].mxu0 %v7020
    %v7581 = vpop.f32.mrb[0].mxu0
    %v7582 = vadd.f32 %v7161, %v7581
    %v7583 = vpop.f32.mrb[0].mxu0
    %v7584 = vpop.f32.mrb[0].mxu0
    %v7585 = vadd.f32 %v7161, %v7584
    %v7586 = vpop.f32.mrb[0].mxu0
    %7587 = vdwg.mxu0
    %7588 = vmatprep.subr.bf16.mxu0 0
    %7589 = vmatpush1.bf16.msra.mxu0 %v7435
    %7590 = vmatprep.subr.bf16.mxu0 0
    %7591 = vmatpush1.bf16.msra.mxu0 %v7436
    %7592 = vmatprep.subr.bf16.mxu0 0
    %7593 = vmatpush1.bf16.msra.mxu0 %v7437
    %7594 = vmatprep.subr.bf16.mxu0 0
    %7595 = vmatpush1.bf16.msra.mxu0 %v7438
    %7596 = vmatprep.subr.bf16.mxu0 0
    %7597 = vmatpush1.bf16.msra.mxu0 %v7439
    %7598 = vmatprep.subr.bf16.mxu0 0
    %7599 = vmatpush1.bf16.msra.mxu0 %v7440
    %7600 = vmatprep.subr.bf16.mxu0 0
    %7601 = vmatpush1.bf16.msra.mxu0 %v7441
    %7602 = vmatprep.subr.bf16.mxu0 0
    %7603 = vmatpush1.bf16.msra.mxu0 %v7442
    %7604 = vmatprep.subr.bf16.mxu0 0
    %7605 = vmatpush1.bf16.msra.mxu0 %v7443
    %7606 = vmatprep.subr.bf16.mxu0 0
    %7607 = vmatpush1.bf16.msra.mxu0 %v7444
    %7608 = vmatprep.subr.bf16.mxu0 0
    %7609 = vmatpush1.bf16.msra.mxu0 %v7445
    %7610 = vmatprep.subr.bf16.mxu0 0
    %7611 = vmatpush1.bf16.msra.mxu0 %v7446
    %7612 = vmatprep.subr.bf16.mxu0 0
    %7613 = vmatpush1.bf16.msra.mxu0 %v7447
    %7614 = vmatprep.subr.bf16.mxu0 0
    %7615 = vmatpush1.bf16.msra.mxu0 %v7448
    %7616 = vmatprep.subr.bf16.mxu0 0
    %7617 = vmatpush1.bf16.msra.mxu0 %v7449
    %7618 = vmatprep.subr.bf16.mxu0 0
    %7619 = vmatpush1.bf16.msra.mxu0 %v7450
    %7620 = vmatprep.mubr.bf16.mxu0 %v7023
    %7621 = vmatmul.mubr.bf16.gmra.mrb[0].mxu0 %v7022
    %v7622 = vpop.f32.mrb[0].mxu0
    %v7623 = vadd.f32 %v7582, %v7622
    %v7624 = vpop.f32.mrb[0].mxu0
    %v7625 = vpop.f32.mrb[0].mxu0
    %v7626 = vadd.f32 %v7585, %v7625
    %v7627 = vpop.f32.mrb[0].mxu0
    %7628 = vdwg.mxu0
    %7629 = vmatprep.subr.bf16.mxu0 0
    %7630 = vmatpush1.bf16.msra.mxu0 %v7451
    %7631 = vmatprep.subr.bf16.mxu0 0
    %7632 = vmatpush1.bf16.msra.mxu0 %v7452
    %7633 = vmatprep.subr.bf16.mxu0 0
    %7634 = vmatpush1.bf16.msra.mxu0 %v7453
    %7635 = vmatprep.subr.bf16.mxu0 0
    %7636 = vmatpush1.bf16.msra.mxu0 %v7454
    %7637 = vmatprep.subr.bf16.mxu0 0
    %7638 = vmatpush1.bf16.msra.mxu0 %v7455
    %7639 = vmatprep.subr.bf16.mxu0 0
    %7640 = vmatpush1.bf16.msra.mxu0 %v7456
    %7641 = vmatprep.subr.bf16.mxu0 0
    %7642 = vmatpush1.bf16.msra.mxu0 %v7457
    %7643 = vmatprep.subr.bf16.mxu0 0
    %7644 = vmatpush1.bf16.msra.mxu0 %v7458
    %7645 = vmatprep.subr.bf16.mxu0 0
    %7646 = vmatpush1.bf16.msra.mxu0 %v7459
    %7647 = vmatprep.subr.bf16.mxu0 0
    %7648 = vmatpush1.bf16.msra.mxu0 %v7460
    %7649 = vmatprep.subr.bf16.mxu0 0
    %7650 = vmatpush1.bf16.msra.mxu0 %v7461
    %7651 = vmatprep.subr.bf16.mxu0 0
    %7652 = vmatpush1.bf16.msra.mxu0 %v7462
    %7653 = vmatprep.subr.bf16.mxu0 0
    %7654 = vmatpush1.bf16.msra.mxu0 %v7463
    %7655 = vmatprep.subr.bf16.mxu0 0
    %7656 = vmatpush1.bf16.msra.mxu0 %v7464
    %7657 = vmatprep.subr.bf16.mxu0 0
    %7658 = vmatpush1.bf16.msra.mxu0 %v7465
    %7659 = vmatprep.subr.bf16.mxu0 0
    %7660 = vmatpush1.bf16.msra.mxu0 %v7466
    %7661 = vmatprep.mubr.bf16.mxu0 %v7025
    %7662 = vmatmul.mubr.bf16.gmra.mrb[0].mxu0 %v7024
    %v7663 = vpop.f32.mrb[0].mxu0
    %v7664 = vadd.f32 %v7623, %v7663
    %v7665 = vpop.f32.mrb[0].mxu0
    %v7666 = vpop.f32.mrb[0].mxu0
    %v7667 = vadd.f32 %v7626, %v7666
    %v7668 = vpop.f32.mrb[0].mxu0
    %7669 = vdwg.mxu0
    %7670 = vmatprep.subr.bf16.mxu0 0
    %7671 = vmatpush1.bf16.msra.mxu0 %v7467
    %7672 = vmatprep.subr.bf16.mxu0 0
    %7673 = vmatpush1.bf16.msra.mxu0 %v7468
    %7674 = vmatprep.subr.bf16.mxu0 0
    %7675 = vmatpush1.bf16.msra.mxu0 %v7469
    %7676 = vmatprep.subr.bf16.mxu0 0
    %7677 = vmatpush1.bf16.msra.mxu0 %v7470
    %7678 = vmatprep.subr.bf16.mxu0 0
    %7679 = vmatpush1.bf16.msra.mxu0 %v7471
    %7680 = vmatprep.subr.bf16.mxu0 0
    %7681 = vmatpush1.bf16.msra.mxu0 %v7472
    %7682 = vmatprep.subr.bf16.mxu0 0
    %7683 = vmatpush1.bf16.msra.mxu0 %v7473
    %7684 = vmatprep.subr.bf16.mxu0 0
    %7685 = vmatpush1.bf16.msra.mxu0 %v7474
    %7686 = vmatprep.subr.bf16.mxu0 0
    %7687 = vmatpush1.bf16.msra.mxu0 %v7475
    %7688 = vmatprep.subr.bf16.mxu0 0
    %7689 = vmatpush1.bf16.msra.mxu0 %v7476
    %7690 = vmatprep.subr.bf16.mxu0 0
    %7691 = vmatpush1.bf16.msra.mxu0 %v7477
    %7692 = vmatprep.subr.bf16.mxu0 0
    %7693 = vmatpush1.bf16.msra.mxu0 %v7478
    %7694 = vmatprep.subr.bf16.mxu0 0
    %7695 = vmatpush1.bf16.msra.mxu0 %v7479
    %7696 = vmatprep.subr.bf16.mxu0 0
    %7697 = vmatpush1.bf16.msra.mxu0 %v7480
    %7698 = vmatprep.subr.bf16.mxu0 0
    %7699 = vmatpush1.bf16.msra.mxu0 %v7481
    %7700 = vmatprep.subr.bf16.mxu0 0
    %7701 = vmatpush1.bf16.msra.mxu0 %v7482
    %7702 = vmatprep.mubr.bf16.mxu0 %v7027
    %7703 = vmatmul.mubr.bf16.gmra.mrb[0].mxu0 %v7026
    %v7704 = vpop.f32.mrb[0].mxu0
    %v7705 = vadd.f32 %v7664, %v7704
    %v7706 = vpop.f32.mrb[0].mxu0
    %v7707 = vpop.f32.mrb[0].mxu0
    %v7708 = vadd.f32 %v7667, %v7707
    %v7709 = vpop.f32.mrb[0].mxu0
    %7710 = vdwg.mxu0
    %7711 = vst [vmem:[#allocation2] sm:$0xff] %v7705
    %7712 = vst [vmem:[#allocation2 + $0x8] sm:$0xff] %v7708
    // Predicated region
    $region54: #{fully_connected_network.1} parent=1 // pred_check
      _
    $region55: #{fully_connected_network.1} parent=1 // pred_check_branch
      %7714 = sbr.rel (0) target = $region57
    $region56: #{fully_connected_network.1} parent=1 // pred_region
      %s7716 = ssub.s32 256, 32
      %7717 = vsyncadd [#allocation3], %s7716
      %s7718 = sshll.u32 [#allocation2], 4
      %s7719 = int_to_ptr.vmem [resolvable:$true] %s7718
      %7724 = dma.vmem_to_hbm [thread:$0]  %s7719, 32, %s13, [#allocation3], 32, 32, 2
    $region57: #{fully_connected_network.1} parent=1 // pred_fallthru
      _
    // Predicated region
    $region58: #{fully_connected_network.1} parent=1 // pred_check
      _
    $region59: #{fully_connected_network.1} parent=1 // pred_check_branch
      %7726 = sbr.rel (0) target = $region61
    $region60: #{fully_connected_network.1} parent=1 // pred_region
      %7727 = dma.done [#allocation3], 256
    $region61: #{fully_connected_network.1} parent=1 // pred_fallthru
      _
    %7728 = vsyncpa [#allocation3], 1

</llo_original>
